<compile_context>
chip_gen: v7x
topology: tpu7x:2x2x1
jax: 0.10.0
libtpu: 0.0.40
codegen_flags: <defaults>
</compile_context>

<pallas_src>
import functools

import jax
import jax.numpy as jnp
from jax.experimental import pallas as pl
from jax.experimental.pallas import tpu as pltpu


def _round_up(x, m):
    return (x + m - 1) // m * m


def _pick_row_tile(H, W, Cp, budget_bytes=8 * 1024 * 1024):
    """Largest divisor of H whose per-step working set fits a conservative
    VMEM budget (leaves headroom for v5e's 16 MiB scoped default and v7x's
    64 MiB physical VMEM, so no vmem_limit_bytes override is needed)."""
    best = 1
    for th in range(1, H + 1):
        if H % th:
            continue
        est = (2 * (th + 2) * W * Cp * 2      # double-buffered bf16 input (+halos)
               + 2 * th * W * Cp * 4          # double-buffered f32 output
               + (th + 2) * W * Cp * 2        # assembled bf16 scratch tile
               + 4 * th * W * Cp * 4)         # f32 accumulators / temporaries
        if est <= budget_bytes:
            best = th
    return best


def _basic_block_kernel(x_ref, top_ref, bot_ref, w3_ref, b_ref,
                        o_ref, xf_ref, *, TH, W, Cp):
    # x_ref   : (1, TH, W, Cp) bf16   rows [r*TH, r*TH+TH)
    # top_ref : (1, 1,  W, Cp) bf16   row r*TH-1 (clamped; zeroed when r == 0)
    # bot_ref : (1, 1,  W, Cp) bf16   row r*TH+TH (clamped; zeroed at last r)
    # w3_ref  : (9, Cp, Cp)    bf16   3x3 taps (1x1 folded into center),
    #                                 t = dy*3+dx, each (C_in, C_out)
    # b_ref   : (1, Cp)        f32    fused bias (b3 + b1)
    # o_ref   : (1, TH, W, Cp) f32
    # xf_ref  : ((TH+2)*W, Cp) bf16   scratch: vertically haloed tile, flattened
    r = pl.program_id(1)
    nr = pl.num_programs(1)
    M = TH * W
    f32 = jnp.float32

    # --- assemble the vertically haloed tile (zero halo at image edges) -----
    top = top_ref[...].reshape(W, Cp) * (r > 0).astype(x_ref.dtype)
    bot = bot_ref[...].reshape(W, Cp) * (r < nr - 1).astype(x_ref.dtype)
    xf_ref[pl.ds(0, W), :] = top
    xf_ref[pl.ds(W, M), :] = x_ref[...].reshape(M, Cp)
    xf_ref[pl.ds((TH + 1) * W, W), :] = bot

    # Three row-shifted views (dy = 0,1,2); static offsets dy*W are 8-aligned
    # whenever W % 8 == 0.  No materialized slice+reshape copies of the tile.
    views = tuple(xf_ref[pl.ds(dy * W, M), :] for dy in range(3))
    vc = views[1]                              # un-shifted pixels (shortcut)

    # Fused bias initializes the center-column accumulator.
    acc_c = jnp.broadcast_to(b_ref[...], (M, Cp)).astype(f32)
    acc_l = None                               # dx = 0 taps (shift +1 later)
    acc_r = None                               # dx = 2 taps (shift -1 later)
    for dy in range(3):
        v = views[dy]
        dl = jnp.dot(v, w3_ref[3 * dy + 0], preferred_element_type=f32)
        dc = jnp.dot(v, w3_ref[3 * dy + 1], preferred_element_type=f32)
        dr = jnp.dot(v, w3_ref[3 * dy + 2], preferred_element_type=f32)
        acc_l = dl if acc_l is None else acc_l + dl
        acc_c = acc_c + dc
        acc_r = dr if acc_r is None else acc_r + dr

    # dx = +-1 column shifts: rotate the f32 partial sums by one flattened row
    # (XLU, free slot) and zero positions that wrapped across an image row —
    # those correspond to the 'same' conv's zero padding.
    col = jax.lax.broadcasted_iota(jnp.int32, (TH, W, Cp), 1).reshape(M, Cp)
    left = jnp.where(col == 0, 0.0, pltpu.roll(acc_l, 1, axis=0))
    right = jnp.where(col == W - 1, 0.0, pltpu.roll(acc_r, M - 1, axis=0))

    y = jnp.maximum(acc_c + left + right, 0.0)          # ReLU
    out = vc.astype(f32) + y                            # shortcut: x + y
    o_ref[...] = out.reshape(1, TH, W, Cp).astype(o_ref.dtype)


def basic_block_pallas(x_nhwc, w3_oihw, b3, w1_oihw, b1, *, row_tile=None):
    """BasicBlock forward, NHWC (lane-dense) layout.

    x_nhwc : (N, H, W, C) float32.
    w3_oihw: (C, C, 3, 3) BN-fused 3x3 weight, b3: (C,) fused bias.
    w1_oihw: (C, C, 1, 1) BN-fused 1x1 weight, b1: (C,) fused bias.
    """
    N, H, W, C = x_nhwc.shape
    assert w3_oihw.shape == (C, C, 3, 3) and w1_oihw.shape == (C, C, 1, 1)
    Cp = _round_up(max(C, 128), 128)                       # lane-dense channels
    TH = row_tile if row_tile is not None else _pick_row_tile(H, W, Cp)
    assert H % TH == 0, (H, TH)
    R = H // TH

    # ---- parameter glue (one-time per model in practice) -------------------
    # RepVGG reparam: fold the 1x1 branch into the 3x3 center tap (exact in f32).
    w3_t = jnp.transpose(w3_oihw, (2, 3, 1, 0))            # (3,3,Cin,Cout)
    w1_io = jnp.transpose(w1_oihw[:, :, 0, 0], (1, 0))     # (Cin,Cout)
    w3_t = w3_t.at[1, 1].add(w1_io)
    w3_p = (jnp.zeros((3, 3, Cp, Cp), jnp.float32)
            .at[:, :, :C, :C].set(w3_t)
            .reshape(9, Cp, Cp).astype(jnp.bfloat16))
    bias = jnp.zeros((1, Cp), jnp.float32).at[0, :C].set(b3 + b1)

    # Activations: bf16 (MXU-native, halves DMA); padded channels are zero so
    # they contribute nothing and stay zero in the output.
    xp = x_nhwc.astype(jnp.bfloat16)
    if Cp != C:
        xp = jnp.pad(xp, ((0, 0), (0, 0), (0, 0), (0, Cp - C)))

    kernel = functools.partial(_basic_block_kernel, TH=TH, W=W, Cp=Cp)

    out = pl.pallas_call(
        kernel,
        out_shape=jax.ShapeDtypeStruct((N, H, W, Cp), x_nhwc.dtype),
        grid=(N, R),
        in_specs=[
            # row tile
            pl.BlockSpec((1, TH, W, Cp), lambda n, r: (n, r, 0, 0)),
            # 1-row halos above / below (clamped at edges, zero-masked in-kernel)
            pl.BlockSpec((1, 1, W, Cp),
                         lambda n, r: (n, jnp.maximum(r * TH - 1, 0), 0, 0)),
            pl.BlockSpec((1, 1, W, Cp),
                         lambda n, r: (n, jnp.minimum(r * TH + TH, H - 1), 0, 0)),
            # weights / bias stay resident across the whole grid
            pl.BlockSpec((9, Cp, Cp), lambda n, r: (0, 0, 0)),
            pl.BlockSpec((1, Cp), lambda n, r: (0, 0)),
        ],
        out_specs=pl.BlockSpec((1, TH, W, Cp), lambda n, r: (n, r, 0, 0)),
        scratch_shapes=[pltpu.VMEM(((TH + 2) * W, Cp), jnp.bfloat16)],
        compiler_params=pltpu.CompilerParams(
            dimension_semantics=("parallel", "parallel")),
    )(xp, xp, xp, w3_p, bias)

    return out[..., :C]


def fuse_conv_bn(w_oihw, gamma, beta, mean, var, eps=1e-5):
    """Fold eval-mode BatchNorm into conv weight (O,I,kh,kw) / bias."""
    scale = gamma / jnp.sqrt(var + eps)
    return w_oihw * scale[:, None, None, None], beta - mean * scale


def reference_forward(x_nchw, w3_f, b3, w1_f, b1):
    """Pure-JAX NCHW reference of BasicBlock.forward (act='relu', shortcut=True)."""
    hp = jax.lax.Precision.HIGHEST
    dn3 = jax.lax.conv_dimension_numbers(x_nchw.shape, w3_f.shape,
                                         ("NCHW", "OIHW", "NCHW"))
    y3 = jax.lax.conv_general_dilated(x_nchw, w3_f, (1, 1), ((1, 1), (1, 1)),
                                      dimension_numbers=dn3, precision=hp)
    y3 = y3 + b3[None, :, None, None]
    dn1 = jax.lax.conv_dimension_numbers(x_nchw.shape, w1_f.shape,
                                         ("NCHW", "OIHW", "NCHW"))
    y1 = jax.lax.conv_general_dilated(x_nchw, w1_f, (1, 1), ((0, 0), (0, 0)),
                                      dimension_numbers=dn1, precision=hp)
    y1 = y1 + b1[None, :, None, None]
    return x_nchw + jnp.maximum(y3 + y1, 0.0)


def reference_forward_deploy(x_nchw, w3_dep, b_dep):
    """Single-conv (deploy) reference, matching the kernel's fused-weight math."""
    hp = jax.lax.Precision.HIGHEST
    dn3 = jax.lax.conv_dimension_numbers(x_nchw.shape, w3_dep.shape,
                                         ("NCHW", "OIHW", "NCHW"))
    y = jax.lax.conv_general_dilated(x_nchw, w3_dep, (1, 1), ((1, 1), (1, 1)),
                                     dimension_numbers=dn3, precision=hp)
    y = y + b_dep[None, :, None, None]
    return x_nchw + jnp.maximum(y, 0.0)


if __name__ == "__main__":
    key = jax.random.PRNGKey(0)
    N, C, H, W = 2, 4, 16, 16          # ch_in == ch_out (asserted by BasicBlock)

    ks = jax.random.split(key, 10)
    x = jax.random.normal(ks[0], (N, C, H, W), dtype=jnp.float32)

    # RepVGGBlock parameters (deterministic, synthetic)
    w3 = 0.1 * jax.random.normal(ks[1], (C, C, 3, 3), dtype=jnp.float32)   # OIHW
    w1 = 0.1 * jax.random.normal(ks[2], (C, C, 1, 1), dtype=jnp.float32)   # OIHW
    g3 = 1.0 + 0.1 * jax.random.normal(ks[3], (C,), dtype=jnp.float32)
    b3_ = 0.1 * jax.random.normal(ks[4], (C,), dtype=jnp.float32)
    m3 = 0.1 * jax.random.normal(ks[5], (C,), dtype=jnp.float32)
    v3 = jnp.abs(jax.random.normal(ks[6], (C,), dtype=jnp.float32)) + 0.5
    g1 = 1.0 + 0.1 * jax.random.normal(ks[7], (C,), dtype=jnp.float32)
    b1_ = 0.1 * jax.random.normal(ks[8], (C,), dtype=jnp.float32)
    m1 = 0.05 * jax.random.normal(ks[9], (C,), dtype=jnp.float32)
    v1 = jnp.ones((C,), dtype=jnp.float32)

    # Fold BN (eval mode) into conv weights / biases.
    w3_f, b3_fused = fuse_conv_bn(w3, g3, b3_, m3, v3)
    w1_f, b1_fused = fuse_conv_bn(w1, g1, b1_, m1, v1)

    # Kernel path is NHWC-native; the transposes below exist only to interface
    # with the NCHW PyTorch-style reference (an NHWC model skips them entirely).
    x_nhwc = jnp.transpose(x, (0, 2, 3, 1))

    # Deploy-fused (1x1 folded into 3x3 center) weight for the quantized
    # reference, matching the kernel's math with bf16 inputs/weights.
    w3_dep = w3_f.at[:, :, 1, 1].add(w1_f[:, :, 0, 0])
    b_dep = b3_fused + b1_fused
    q = lambda a: a.astype(jnp.bfloat16).astype(jnp.float32)
    ref_q = reference_forward_deploy(q(x), q(w3_dep), b_dep)
    ref_f32 = reference_forward(x, w3_f, b3_fused, w1_f, b1_fused)

    # 1) default row-tile (whole image per step at this toy size)
    out1 = jax.block_until_ready(
        basic_block_pallas(x_nhwc, w3_f, b3_fused, w1_f, b1_fused))
    out1_nchw = jnp.transpose(out1, (0, 3, 1, 2))
    assert out1_nchw.shape == (N, C, H, W)
    assert jnp.allclose(out1_nchw, ref_q, atol=2e-3, rtol=2e-3), \
        float(jnp.max(jnp.abs(out1_nchw - ref_q)))

    # 2) force multiple row tiles to exercise the halo / tiling path (grid=(N,4))
    out2 = jax.block_until_ready(
        basic_block_pallas(x_nhwc, w3_f, b3_fused, w1_f, b1_fused, row_tile=4))
    out2_nchw = jnp.transpose(out2, (0, 3, 1, 2))
    assert jnp.allclose(out2_nchw, ref_q, atol=2e-3, rtol=2e-3), \
        float(jnp.max(jnp.abs(out2_nchw - ref_q)))

    # Sanity vs. the exact f32 two-branch reference (bf16 MXU inputs =>
    # looser tolerance).
    assert jnp.allclose(out1_nchw, ref_f32, atol=1e-1, rtol=1e-1), \
        float(jnp.max(jnp.abs(out1_nchw - ref_f32)))

    print("KERNEL_OK")
</pallas_src>

<mosaic_0001>
module attributes {stable_mosaic.version = 11 : i64} {
  func.func @_basic_block_kernel(%arg0: i32, %arg1: i32, %arg2: memref<1x16x16x128xbf16, #tpu.memory_space<vmem>>, %arg3: memref<1x1x16x128xbf16, #tpu.memory_space<vmem>>, %arg4: memref<1x1x16x128xbf16, #tpu.memory_space<vmem>>, %arg5: memref<9x128x128xbf16, #tpu.memory_space<vmem>>, %arg6: memref<1x128xf32, #tpu.memory_space<vmem>>, %arg7: memref<1x16x16x128xf32, #tpu.memory_space<vmem>>, %arg8: memref<288x128xbf16, #tpu.memory_space<vmem>>) attributes {dimension_semantics = [#tpu.dimension_semantics<parallel>, #tpu.dimension_semantics<parallel>], iteration_bounds = array<i64: 2, 1>, scalar_prefetch = 0 : i64, scratch_operands = 1 : i64, tpu.core_type = #tpu.core_type<tc>, window_params = [{transform_indices = @transform_0, window_bounds = array<i64: 1, 16, 16, 128>}, {transform_indices = @transform_1, window_bounds = array<i64: 1, 1, 16, 128>}, {transform_indices = @transform_2, window_bounds = array<i64: 1, 1, 16, 128>}, {pipeline_mode = #tpu.pipeline_mode<synchronous>, transform_indices = @transform_3, window_bounds = array<i64: 9, 128, 128>}, {pipeline_mode = #tpu.pipeline_mode<synchronous>, transform_indices = @transform_4, window_bounds = array<i64: 1, 128>}, {transform_indices = @transform_5, window_bounds = array<i64: 1, 16, 16, 128>}]} {
    %c0 = arith.constant 0 : index
    %c0_0 = arith.constant 0 : index
    %c0_1 = arith.constant 0 : index
    %c0_2 = arith.constant 0 : index
    %0 = vector.load %arg3[%c0, %c0_0, %c0_1, %c0_2] : memref<1x1x16x128xbf16, #tpu.memory_space<vmem>>, vector<1x1x16x128xbf16>
    %1 = vector.shape_cast %0 : vector<1x1x16x128xbf16> to vector<16x128xbf16>
    %c0_i32 = arith.constant 0 : i32
    %2 = arith.cmpi sgt, %arg1, %c0_i32 : i32
    %3 = arith.extui %2 : i1 to i32
    %4 = arith.sitofp %3 : i32 to f32
    %5 = arith.truncf %4 : f32 to bf16
    %6 = vector.broadcast %5 : bf16 to vector<16x128xbf16>
    %7 = arith.mulf %1, %6 : vector<16x128xbf16>
    %c0_3 = arith.constant 0 : index
    %c0_4 = arith.constant 0 : index
    %c0_5 = arith.constant 0 : index
    %c0_6 = arith.constant 0 : index
    %8 = vector.load %arg4[%c0_3, %c0_4, %c0_5, %c0_6] : memref<1x1x16x128xbf16, #tpu.memory_space<vmem>>, vector<1x1x16x128xbf16>
    %9 = vector.shape_cast %8 : vector<1x1x16x128xbf16> to vector<16x128xbf16>
    %c0_i32_7 = arith.constant 0 : i32
    %10 = arith.cmpi slt, %arg1, %c0_i32_7 : i32
    %11 = arith.extui %10 : i1 to i32
    %12 = arith.sitofp %11 : i32 to f32
    %13 = arith.truncf %12 : f32 to bf16
    %14 = vector.broadcast %13 : bf16 to vector<16x128xbf16>
    %15 = arith.mulf %9, %14 : vector<16x128xbf16>
    %c0_8 = arith.constant 0 : index
    %c0_9 = arith.constant 0 : index
    %16 = vector.load %arg8[%c0_8, %c0_9] : memref<288x128xbf16, #tpu.memory_space<vmem>>, vector<16x128xbf16>
    tpu.vector_store %arg8[%c0_8, %c0_9], %7 {strides = array<i32>} : memref<288x128xbf16, #tpu.memory_space<vmem>>, vector<16x128xbf16>,
    %c0_10 = arith.constant 0 : index
    %c0_11 = arith.constant 0 : index
    %c0_12 = arith.constant 0 : index
    %c0_13 = arith.constant 0 : index
    %17 = vector.load %arg2[%c0_10, %c0_11, %c0_12, %c0_13] : memref<1x16x16x128xbf16, #tpu.memory_space<vmem>>, vector<1x16x16x128xbf16>
    %18 = vector.shape_cast %17 : vector<1x16x16x128xbf16> to vector<256x128xbf16>
    %c16 = arith.constant 16 : index
    %c0_14 = arith.constant 0 : index
    %19 = vector.load %arg8[%c16, %c0_14] : memref<288x128xbf16, #tpu.memory_space<vmem>>, vector<256x128xbf16>
    tpu.vector_store %arg8[%c16, %c0_14], %18 {strides = array<i32>} : memref<288x128xbf16, #tpu.memory_space<vmem>>, vector<256x128xbf16>,
    %c272 = arith.constant 272 : index
    %c0_15 = arith.constant 0 : index
    %20 = vector.load %arg8[%c272, %c0_15] : memref<288x128xbf16, #tpu.memory_space<vmem>>, vector<16x128xbf16>
    tpu.vector_store %arg8[%c272, %c0_15], %15 {strides = array<i32>} : memref<288x128xbf16, #tpu.memory_space<vmem>>, vector<16x128xbf16>,
    %c0_16 = arith.constant 0 : index
    %c0_17 = arith.constant 0 : index
    %21 = vector.load %arg8[%c0_16, %c0_17] : memref<288x128xbf16, #tpu.memory_space<vmem>>, vector<256x128xbf16>
    %c16_18 = arith.constant 16 : index
    %c0_19 = arith.constant 0 : index
    %22 = vector.load %arg8[%c16_18, %c0_19] : memref<288x128xbf16, #tpu.memory_space<vmem>>, vector<256x128xbf16>
    %c32 = arith.constant 32 : index
    %c0_20 = arith.constant 0 : index
    %23 = vector.load %arg8[%c32, %c0_20] : memref<288x128xbf16, #tpu.memory_space<vmem>>, vector<256x128xbf16>
    %c0_21 = arith.constant 0 : index
    %c0_22 = arith.constant 0 : index
    %24 = vector.load %arg6[%c0_21, %c0_22] : memref<1x128xf32, #tpu.memory_space<vmem>>, vector<1x128xf32>
    %25 = vector.shape_cast %24 : vector<1x128xf32> to vector<1x128xf32>
    %26 = vector.broadcast %25 : vector<1x128xf32> to vector<256x128xf32>
    %c0_23 = arith.constant 0 : index
    %c0_24 = arith.constant 0 : index
    %c0_25 = arith.constant 0 : index
    %27 = vector.load %arg5[%c0_23, %c0_24, %c0_25] : memref<9x128x128xbf16, #tpu.memory_space<vmem>>, vector<1x128x128xbf16>
    %28 = vector.shape_cast %27 : vector<1x128x128xbf16> to vector<128x128xbf16>
    %cst = arith.constant dense<0.000000e+00> : vector<256x128xf32>
    %29 = tpu.matmul %21, %28, %cst {dimension_numbers = #tpu.dot_dimension_numbers<[1], [0], [0], [1], [0, 0, 1, 1], [], []>} : vector<256x128xbf16>, vector<128x128xbf16>, vector<256x128xf32> -> vector<256x128xf32>
    %c1 = arith.constant 1 : index
    %c0_26 = arith.constant 0 : index
    %c0_27 = arith.constant 0 : index
    %30 = vector.load %arg5[%c1, %c0_26, %c0_27] : memref<9x128x128xbf16, #tpu.memory_space<vmem>>, vector<1x128x128xbf16>
    %31 = vector.shape_cast %30 : vector<1x128x128xbf16> to vector<128x128xbf16>
    %cst_28 = arith.constant dense<0.000000e+00> : vector<256x128xf32>
    %32 = tpu.matmul %21, %31, %cst_28 {dimension_numbers = #tpu.dot_dimension_numbers<[1], [0], [0], [1], [0, 0, 1, 1], [], []>} : vector<256x128xbf16>, vector<128x128xbf16>, vector<256x128xf32> -> vector<256x128xf32>
    %c2 = arith.constant 2 : index
    %c0_29 = arith.constant 0 : index
    %c0_30 = arith.constant 0 : index
    %33 = vector.load %arg5[%c2, %c0_29, %c0_30] : memref<9x128x128xbf16, #tpu.memory_space<vmem>>, vector<1x128x128xbf16>
    %34 = vector.shape_cast %33 : vector<1x128x128xbf16> to vector<128x128xbf16>
    %cst_31 = arith.constant dense<0.000000e+00> : vector<256x128xf32>
    %35 = tpu.matmul %21, %34, %cst_31 {dimension_numbers = #tpu.dot_dimension_numbers<[1], [0], [0], [1], [0, 0, 1, 1], [], []>} : vector<256x128xbf16>, vector<128x128xbf16>, vector<256x128xf32> -> vector<256x128xf32>
    %36 = arith.addf %26, %32 : vector<256x128xf32>
    %c3 = arith.constant 3 : index
    %c0_32 = arith.constant 0 : index
    %c0_33 = arith.constant 0 : index
    %37 = vector.load %arg5[%c3, %c0_32, %c0_33] : memref<9x128x128xbf16, #tpu.memory_space<vmem>>, vector<1x128x128xbf16>
    %38 = vector.shape_cast %37 : vector<1x128x128xbf16> to vector<128x128xbf16>
    %cst_34 = arith.constant dense<0.000000e+00> : vector<256x128xf32>
    %39 = tpu.matmul %22, %38, %cst_34 {dimension_numbers = #tpu.dot_dimension_numbers<[1], [0], [0], [1], [0, 0, 1, 1], [], []>} : vector<256x128xbf16>, vector<128x128xbf16>, vector<256x128xf32> -> vector<256x128xf32>
    %c4 = arith.constant 4 : index
    %c0_35 = arith.constant 0 : index
    %c0_36 = arith.constant 0 : index
    %40 = vector.load %arg5[%c4, %c0_35, %c0_36] : memref<9x128x128xbf16, #tpu.memory_space<vmem>>, vector<1x128x128xbf16>
    %41 = vector.shape_cast %40 : vector<1x128x128xbf16> to vector<128x128xbf16>
    %cst_37 = arith.constant dense<0.000000e+00> : vector<256x128xf32>
    %42 = tpu.matmul %22, %41, %cst_37 {dimension_numbers = #tpu.dot_dimension_numbers<[1], [0], [0], [1], [0, 0, 1, 1], [], []>} : vector<256x128xbf16>, vector<128x128xbf16>, vector<256x128xf32> -> vector<256x128xf32>
    %c5 = arith.constant 5 : index
    %c0_38 = arith.constant 0 : index
    %c0_39 = arith.constant 0 : index
    %43 = vector.load %arg5[%c5, %c0_38, %c0_39] : memref<9x128x128xbf16, #tpu.memory_space<vmem>>, vector<1x128x128xbf16>
    %44 = vector.shape_cast %43 : vector<1x128x128xbf16> to vector<128x128xbf16>
    %cst_40 = arith.constant dense<0.000000e+00> : vector<256x128xf32>
    %45 = tpu.matmul %22, %44, %cst_40 {dimension_numbers = #tpu.dot_dimension_numbers<[1], [0], [0], [1], [0, 0, 1, 1], [], []>} : vector<256x128xbf16>, vector<128x128xbf16>, vector<256x128xf32> -> vector<256x128xf32>
    %46 = arith.addf %29, %39 : vector<256x128xf32>
    %47 = arith.addf %36, %42 : vector<256x128xf32>
    %48 = arith.addf %35, %45 : vector<256x128xf32>
    %c6 = arith.constant 6 : index
    %c0_41 = arith.constant 0 : index
    %c0_42 = arith.constant 0 : index
    %49 = vector.load %arg5[%c6, %c0_41, %c0_42] : memref<9x128x128xbf16, #tpu.memory_space<vmem>>, vector<1x128x128xbf16>
    %50 = vector.shape_cast %49 : vector<1x128x128xbf16> to vector<128x128xbf16>
    %cst_43 = arith.constant dense<0.000000e+00> : vector<256x128xf32>
    %51 = tpu.matmul %23, %50, %cst_43 {dimension_numbers = #tpu.dot_dimension_numbers<[1], [0], [0], [1], [0, 0, 1, 1], [], []>} : vector<256x128xbf16>, vector<128x128xbf16>, vector<256x128xf32> -> vector<256x128xf32>
    %c7 = arith.constant 7 : index
    %c0_44 = arith.constant 0 : index
    %c0_45 = arith.constant 0 : index
    %52 = vector.load %arg5[%c7, %c0_44, %c0_45] : memref<9x128x128xbf16, #tpu.memory_space<vmem>>, vector<1x128x128xbf16>
    %53 = vector.shape_cast %52 : vector<1x128x128xbf16> to vector<128x128xbf16>
    %cst_46 = arith.constant dense<0.000000e+00> : vector<256x128xf32>
    %54 = tpu.matmul %23, %53, %cst_46 {dimension_numbers = #tpu.dot_dimension_numbers<[1], [0], [0], [1], [0, 0, 1, 1], [], []>} : vector<256x128xbf16>, vector<128x128xbf16>, vector<256x128xf32> -> vector<256x128xf32>
    %c8 = arith.constant 8 : index
    %c0_47 = arith.constant 0 : index
    %c0_48 = arith.constant 0 : index
    %55 = vector.load %arg5[%c8, %c0_47, %c0_48] : memref<9x128x128xbf16, #tpu.memory_space<vmem>>, vector<1x128x128xbf16>
    %56 = vector.shape_cast %55 : vector<1x128x128xbf16> to vector<128x128xbf16>
    %cst_49 = arith.constant dense<0.000000e+00> : vector<256x128xf32>
    %57 = tpu.matmul %23, %56, %cst_49 {dimension_numbers = #tpu.dot_dimension_numbers<[1], [0], [0], [1], [0, 0, 1, 1], [], []>} : vector<256x128xbf16>, vector<128x128xbf16>, vector<256x128xf32> -> vector<256x128xf32>
    %58 = arith.addf %46, %51 : vector<256x128xf32>
    %59 = arith.addf %47, %54 : vector<256x128xf32>
    %60 = arith.addf %48, %57 : vector<256x128xf32>
    %61 = tpu.iota {dimensions = array<i32: 1>} : vector<16x16x128xi32>
    %62 = vector.shape_cast %61 : vector<16x16x128xi32> to vector<256x128xi32>
    %c0_i32_50 = arith.constant 0 : i32
    %63 = vector.broadcast %c0_i32_50 : i32 to vector<256x128xi32>
    %64 = arith.cmpi eq, %62, %63 : vector<256x128xi32>
    %c1_i32 = arith.constant 1 : i32
    %65 = tpu.dynamic_rotate %58 by %c1_i32 dim 0 : vector<256x128xf32>, i32 -> vector<256x128xf32>
    %cst_51 = arith.constant 0.000000e+00 : f32
    %66 = vector.broadcast %cst_51 : f32 to vector<256x128xf32>
    %67 = arith.select %64, %66, %65 : vector<256x128xi1>, vector<256x128xf32>
    %c15_i32 = arith.constant 15 : i32
    %68 = vector.broadcast %c15_i32 : i32 to vector<256x128xi32>
    %69 = arith.cmpi eq, %62, %68 : vector<256x128xi32>
    %c255_i32 = arith.constant 255 : i32
    %70 = tpu.dynamic_rotate %60 by %c255_i32 dim 0 : vector<256x128xf32>, i32 -> vector<256x128xf32>
    %cst_52 = arith.constant 0.000000e+00 : f32
    %71 = vector.broadcast %cst_52 : f32 to vector<256x128xf32>
    %72 = arith.select %69, %71, %70 : vector<256x128xi1>, vector<256x128xf32>
    %73 = arith.addf %59, %67 : vector<256x128xf32>
    %74 = arith.addf %73, %72 : vector<256x128xf32>
    %cst_53 = arith.constant 0.000000e+00 : f32
    %75 = vector.broadcast %cst_53 : f32 to vector<256x128xf32>
    %76 = arith.maximumf %74, %75 : vector<256x128xf32>
    %77 = arith.extf %22 : vector<256x128xbf16> to vector<256x128xf32>
    %78 = arith.addf %77, %76 : vector<256x128xf32>
    %79 = vector.shape_cast %78 : vector<256x128xf32> to vector<1x16x16x128xf32>
    %c0_54 = arith.constant 0 : index
    %c0_55 = arith.constant 0 : index
    %c0_56 = arith.constant 0 : index
    %c0_57 = arith.constant 0 : index
    %80 = vector.load %arg7[%c0_54, %c0_55, %c0_56, %c0_57] : memref<1x16x16x128xf32, #tpu.memory_space<vmem>>, vector<1x16x16x128xf32>
    tpu.vector_store %arg7[%c0_54, %c0_55, %c0_56, %c0_57], %79 {strides = array<i32>} : memref<1x16x16x128xf32, #tpu.memory_space<vmem>>, vector<1x16x16x128xf32>,
    return
  }
  func.func @transform_0(%arg0: i32, %arg1: i32) -> (i32, i32, i32, i32) {
    %c0_i32 = arith.constant 0 : i32
    %c0_i32_0 = arith.constant 0 : i32
    %c0_i32_1 = arith.constant 0 : i32
    return %arg0, %arg1, %c0_i32, %c0_i32_0 : i32, i32, i32, i32
  }
  func.func @transform_1(%arg0: i32, %arg1: i32) -> (i32, i32, i32, i32) {
    %c16_i32 = arith.constant 16 : i32
    %0 = arith.muli %arg1, %c16_i32 : i32
    %c1_i32 = arith.constant 1 : i32
    %1 = arith.subi %0, %c1_i32 : i32
    %c0_i32 = arith.constant 0 : i32
    %2 = arith.maxsi %1, %c0_i32 : i32
    %c0_i32_0 = arith.constant 0 : i32
    %c0_i32_1 = arith.constant 0 : i32
    %c0_i32_2 = arith.constant 0 : i32
    return %arg0, %2, %c0_i32_0, %c0_i32_1 : i32, i32, i32, i32
  }
  func.func @transform_2(%arg0: i32, %arg1: i32) -> (i32, i32, i32, i32) {
    %c16_i32 = arith.constant 16 : i32
    %0 = arith.muli %arg1, %c16_i32 : i32
    %c16_i32_0 = arith.constant 16 : i32
    %1 = arith.addi %0, %c16_i32_0 : i32
    %c15_i32 = arith.constant 15 : i32
    %2 = arith.minsi %1, %c15_i32 : i32
    %c0_i32 = arith.constant 0 : i32
    %c0_i32_1 = arith.constant 0 : i32
    %c0_i32_2 = arith.constant 0 : i32
    return %arg0, %2, %c0_i32, %c0_i32_1 : i32, i32, i32, i32
  }
  func.func @transform_3(%arg0: i32, %arg1: i32) -> (i32, i32, i32) {
    %c0_i32 = arith.constant 0 : i32
    %c0_i32_0 = arith.constant 0 : i32
    %c0_i32_1 = arith.constant 0 : i32
    %c0_i32_2 = arith.constant 0 : i32
    return %c0_i32, %c0_i32_0, %c0_i32_1 : i32, i32, i32
  }
  func.func @transform_4(%arg0: i32, %arg1: i32) -> (i32, i32) {
    %c0_i32 = arith.constant 0 : i32
    %c0_i32_0 = arith.constant 0 : i32
    %c0_i32_1 = arith.constant 0 : i32
    return %c0_i32, %c0_i32_0 : i32, i32
  }
  func.func @transform_5(%arg0: i32, %arg1: i32) -> (i32, i32, i32, i32) {
    %c0_i32 = arith.constant 0 : i32
    %c0_i32_0 = arith.constant 0 : i32
    %c0_i32_1 = arith.constant 0 : i32
    return %arg0, %arg1, %c0_i32, %c0_i32_0 : i32, i32, i32, i32
  }
}

</mosaic_0001>

<llo_original>
// kernel: tpu_custom_call.1
$region0: #{tpu_custom_call.1}
  #allocation0 [shape = 'u32[]', space=smem, size = 0x4, offset = 0x4, fixed_abs, tag = 'smem constant byte address 0x4 - core index']
  #allocation1 [shape = 'u32[144,128]{1,0:T(1,128)}', space=vmem, size = 0x12000, scoped, tag = 'internal scratch']
  #allocation2 [shape = 'bf16[288,128]{1,0:T(16,128)(2,1)}', space=vmem, size = 0x12000, scoped, tag = 'scratch operand']
  %s0 = inlined_call_operand.hbm [shape: bf16[2,16,16,128], index: 0, kind: input, shape index: {}]
  %s1 = inlined_call_operand.hbm [shape: bf16[2,16,16,128], index: 1, kind: input, shape index: {}]
  %s2 = inlined_call_operand.hbm [shape: bf16[2,16,16,128], index: 2, kind: input, shape index: {}]
  %s3 = inlined_call_operand.hbm [shape: bf16[9,128,128], index: 3, kind: input, shape index: {}]
  %s4 = inlined_call_operand.vmem [shape: f32[1,128], index: 4, kind: input, shape index: {}]
  %s5 = inlined_call_operand.hbm [shape: f32[2,16,16,128], index: 5, kind: output, shape index: {}]
  %s6 = sld [smem:[#allocation0]]
  $region69: #{tpu_custom_call.1} parent=0
    _
  %s8 = ssub.s32 1, %s6
  %s9 = scalar_select 0, %s8, %s6
  $region1: #{tpu_custom_call.1} parent=0
    #allocation3 [shape = 'u8[131072]{0}', space=vmem, size = 0x20000, scoped, tag = 'input window, operand 0']
    #allocation4 [shape = 's32[2]{0}', space=sflag, size = 0x8, scoped, tag = 'scoped memory for tpu_custom_call.1']
    #allocation5 [shape = 's32[2]{0}', space=sflag, size = 0x8, scoped, tag = 'scoped memory for tpu_custom_call.1']
    #allocation6 [shape = 'u8[8192]{0}', space=vmem, size = 0x2000, scoped, tag = 'input window, operand 1']
    #allocation7 [shape = 's32[2]{0}', space=sflag, size = 0x8, scoped, tag = 'scoped memory for tpu_custom_call.1']
    #allocation8 [shape = 'u8[8192]{0}', space=vmem, size = 0x2000, scoped, tag = 'input window, operand 2']
    #allocation9 [shape = 'u8[294912]{0}', space=vmem, size = 0x48000, scoped, tag = 'input window, operand 3, single buffered']
    #allocation10 [shape = 's32[1]{0}', space=sflag, size = 0x4, scoped, tag = 'scoped memory for tpu_custom_call.1']
    #allocation11 [shape = 'u8[262144]{0}', space=vmem, size = 0x40000, scoped, tag = 'output window, operand 0']
    %10 = vsyncpa [#allocation4], 0
    %s11 = scalar_lea.sflag [#allocation4], 1
    %12 = vsyncpa %s11, 0
    %13 = vsyncpa [#allocation7], 0
    %s14 = scalar_lea.sflag [#allocation7], 1
    %15 = vsyncpa %s14, 0
    %16 = vsyncpa [#allocation10], 0
    %17 = vsyncpa [#allocation5], 0
    %s18 = scalar_lea.sflag [#allocation5], 1
    %19 = vsyncpa %s18, 0
    loop: start=0, step=1, limit=4
    $region2: #{tpu_custom_call.1} parent=1 // loop_pre_header
      _
    $region3: #{tpu_custom_call.1} parent=1 // loop_header
      %s21 = sphi 0, %s25
      %p22 = scmp.ge.s32.totalorder %s21, 4
      %s28 = sphi 0, %s40
      %s29 = sphi 0, %s36
      %s30 = sphi 0, %s28
      %s31 = sphi 0, %s29
      %s32 = sphi 0, %s30
      %s33 = sphi 0, %s31
      %s45 = sphi 0, %s47
      %s48 = sphi 0, %s45
      %s49 = sphi 0, %s48
      %s65 = sphi 0, %s49
      %s81 = sphi 0, %s83
      %s84 = sphi 0, %s81
      %s85 = sphi 0, %s84
      %s101 = sphi 0, %s85
      %s117 = sphi 0, %s119
      %s120 = sphi 0, %s117
      %s121 = sphi 0, %s120
      %s137 = sphi 0, %s121
      %s141 = sphi 0, %s141
      %s143 = sphi 0, %s141
      %s144 = sphi 0, %s143
      %s158 = sphi 0, %s144
      %s162 = sphi 0, %s162
      %s164 = sphi 0, %s162
      %s165 = sphi 0, %s164
      %s179 = sphi 0, %s165
      %s187 = sphi 0, %s189
      %s190 = sphi 0, %s187
      %s191 = sphi 0, %s190
      %s207 = sphi 0, %s191
    $region4: #{tpu_custom_call.1} parent=1 // loop_header_branch
      %24 = sbr.rel (%p22) target = $region8
    $region5: #{tpu_custom_call.1} parent=1 // loop_body
      %s26 = ssub.s32 %s21, 1
      %s27 = ssub.s32 %s21, 2
      %s34 = sadd.s32 1, %s29
      %p35 = scmp.ge.s32.totalorder %s34, 1
      %s36 = scalar_select %p35, 0, %s34
      %s37 = sadd.s32 1, %s28
      %s38 = scalar_select %p35, %s37, %s28
      %p39 = scmp.ge.s32.totalorder %s38, 2
      %s40 = scalar_select %p39, 0, %s38
      %s41 = ssub.s32 %s28, %s40
      %s42 = ssub.s32 %s29, %s36
      %s43 = sor.u32 %s41, %s42
      %p44 = scmp.eq.s32.totalorder %s43, 0
      %s46 = sadd.s32 %s45, 1
      %s47 = scalar_select %p44, %s45, %s46
      %p50 = pneg %p44
      %p51 = scmp.eq.s32.totalorder %s21, 1
      %p52 = por %p50, %p51
      %p53 = scmp.ne.s32.totalorder %s45, %s48
      %p54 = scmp.eq.s32.totalorder %s21, 0
      %p55 = por %p53, %p54
      %p56 = scmp.ne.s32.totalorder %s45, %s48
      %p57 = scmp.eq.s32.totalorder %s26, 1
      %p58 = por %p56, %p57
      %p59 = scmp.ne.s32.totalorder %s48, %s49
      %p60 = scmp.eq.s32.totalorder %s26, 0
      %p61 = por %p59, %p60
      %p62 = scmp.ne.s32.totalorder %s48, %s49
      %p63 = scmp.eq.s32.totalorder %s27, 1
      %p64 = por %p62, %p63
      %p66 = scmp.ne.s32.totalorder %s49, %s65
      %p67 = scmp.eq.s32.totalorder %s27, 0
      %p68 = por %p66, %p67
      %s69 = smul.u32 %s29, 16
      %s70 = ssub.s32 %s69, 1
      %p71 = scmp.gt.s32.totalorder %s70, 0
      %s72 = scalar_select %p71, %s70, 0
      %s73 = smul.u32 %s36, 16
      %s74 = ssub.s32 %s73, 1
      %p75 = scmp.gt.s32.totalorder %s74, 0
      %s76 = scalar_select %p75, %s74, 0
      %s77 = ssub.s32 %s28, %s40
      %s78 = ssub.s32 %s72, %s76
      %s79 = sor.u32 %s77, %s78
      %p80 = scmp.eq.s32.totalorder %s79, 0
      %s82 = sadd.s32 %s81, 1
      %s83 = scalar_select %p80, %s81, %s82
      %p86 = pneg %p80
      %p87 = scmp.eq.s32.totalorder %s21, 1
      %p88 = por %p86, %p87
      %p89 = scmp.ne.s32.totalorder %s81, %s84
      %p90 = scmp.eq.s32.totalorder %s21, 0
      %p91 = por %p89, %p90
      %p92 = scmp.ne.s32.totalorder %s81, %s84
      %p93 = scmp.eq.s32.totalorder %s26, 1
      %p94 = por %p92, %p93
      %p95 = scmp.ne.s32.totalorder %s84, %s85
      %p96 = scmp.eq.s32.totalorder %s26, 0
      %p97 = por %p95, %p96
      %p98 = scmp.ne.s32.totalorder %s84, %s85
      %p99 = scmp.eq.s32.totalorder %s27, 1
      %p100 = por %p98, %p99
      %p102 = scmp.ne.s32.totalorder %s85, %s101
      %p103 = scmp.eq.s32.totalorder %s27, 0
      %p104 = por %p102, %p103
      %s105 = smul.u32 %s29, 16
      %s106 = sadd.s32 %s105, 16
      %p107 = scmp.lt.s32.totalorder %s106, 15
      %s108 = scalar_select %p107, %s106, 15
      %s109 = smul.u32 %s36, 16
      %s110 = sadd.s32 %s109, 16
      %p111 = scmp.lt.s32.totalorder %s110, 15
      %s112 = scalar_select %p111, %s110, 15
      %s113 = ssub.s32 %s28, %s40
      %s114 = ssub.s32 %s108, %s112
      %s115 = sor.u32 %s113, %s114
      %p116 = scmp.eq.s32.totalorder %s115, 0
      %s118 = sadd.s32 %s117, 1
      %s119 = scalar_select %p116, %s117, %s118
      %p122 = pneg %p116
      %p123 = scmp.eq.s32.totalorder %s21, 1
      %p124 = por %p122, %p123
      %p125 = scmp.ne.s32.totalorder %s117, %s120
      %p126 = scmp.eq.s32.totalorder %s21, 0
      %p127 = por %p125, %p126
      %p128 = scmp.ne.s32.totalorder %s117, %s120
      %p129 = scmp.eq.s32.totalorder %s26, 1
      %p130 = por %p128, %p129
      %p131 = scmp.ne.s32.totalorder %s120, %s121
      %p132 = scmp.eq.s32.totalorder %s26, 0
      %p133 = por %p131, %p132
      %p134 = scmp.ne.s32.totalorder %s120, %s121
      %p135 = scmp.eq.s32.totalorder %s27, 1
      %p136 = por %p134, %p135
      %p138 = scmp.ne.s32.totalorder %s121, %s137
      %p139 = scmp.eq.s32.totalorder %s27, 0
      %p140 = por %p138, %p139
      %s142 = sadd.s32 %s141, 1
      %p145 = scmp.eq.s32.totalorder %s21, 1
      %p146 = scmp.ne.s32.totalorder %s141, %s143
      %p147 = scmp.eq.s32.totalorder %s21, 0
      %p148 = por %p146, %p147
      %p149 = scmp.ne.s32.totalorder %s141, %s143
      %p150 = scmp.eq.s32.totalorder %s26, 1
      %p151 = por %p149, %p150
      %p152 = scmp.ne.s32.totalorder %s143, %s144
      %p153 = scmp.eq.s32.totalorder %s26, 0
      %p154 = por %p152, %p153
      %p155 = scmp.ne.s32.totalorder %s143, %s144
      %p156 = scmp.eq.s32.totalorder %s27, 1
      %p157 = por %p155, %p156
      %p159 = scmp.ne.s32.totalorder %s144, %s158
      %p160 = scmp.eq.s32.totalorder %s27, 0
      %p161 = por %p159, %p160
      %s163 = sadd.s32 %s162, 1
      %p166 = scmp.eq.s32.totalorder %s21, 1
      %p167 = scmp.ne.s32.totalorder %s162, %s164
      %p168 = scmp.eq.s32.totalorder %s21, 0
      %p169 = por %p167, %p168
      %p170 = scmp.ne.s32.totalorder %s162, %s164
      %p171 = scmp.eq.s32.totalorder %s26, 1
      %p172 = por %p170, %p171
      %p173 = scmp.ne.s32.totalorder %s164, %s165
      %p174 = scmp.eq.s32.totalorder %s26, 0
      %p175 = por %p173, %p174
      %p176 = scmp.ne.s32.totalorder %s164, %s165
      %p177 = scmp.eq.s32.totalorder %s27, 1
      %p178 = por %p176, %p177
      %p180 = scmp.ne.s32.totalorder %s165, %s179
      %p181 = scmp.eq.s32.totalorder %s27, 0
      %p182 = por %p180, %p181
      %s183 = ssub.s32 %s28, %s40
      %s184 = ssub.s32 %s29, %s36
      %s185 = sor.u32 %s183, %s184
      %p186 = scmp.eq.s32.totalorder %s185, 0
      %s188 = sadd.s32 %s187, 1
      %s189 = scalar_select %p186, %s187, %s188
      %p192 = pneg %p186
      %p193 = scmp.eq.s32.totalorder %s21, 1
      %p194 = por %p192, %p193
      %p195 = scmp.ne.s32.totalorder %s187, %s190
      %p196 = scmp.eq.s32.totalorder %s21, 0
      %p197 = por %p195, %p196
      %p198 = scmp.ne.s32.totalorder %s187, %s190
      %p199 = scmp.eq.s32.totalorder %s26, 1
      %p200 = por %p198, %p199
      %p201 = scmp.ne.s32.totalorder %s190, %s191
      %p202 = scmp.eq.s32.totalorder %s26, 0
      %p203 = por %p201, %p202
      %p204 = scmp.ne.s32.totalorder %s190, %s191
      %p205 = scmp.eq.s32.totalorder %s27, 1
      %p206 = por %p204, %p205
      %p208 = scmp.ne.s32.totalorder %s191, %s207
      %p209 = scmp.eq.s32.totalorder %s27, 0
      %p210 = por %p208, %p209
      %p211 = scmp.le.s32.totalorder 1, %s21
      %p212 = scmp.lt.s32.totalorder %s21, 3
      %p213 = pnand %p211, %p212
      %p214 = pneg %p213
      // Predicated region
      $region9: #{tpu_custom_call.1} parent=5 // pred_check
        _
      $region10: #{tpu_custom_call.1} parent=5 // pred_check_branch
        %216 = sbr.rel (%p213) target = $region12
      $region11: #{tpu_custom_call.1} parent=5 // pred_region
        %s217 = ssub.s32 %s21, 1
        // Predicated region
        $region13: #{tpu_custom_call.1} parent=11 // pred_check
          %p218 = pneg %p154
        $region14: #{tpu_custom_call.1} parent=11 // pred_check_branch
          %220 = sbr.rel (%p218) target = $region16
        $region15: #{tpu_custom_call.1} parent=11 // pred_region
          %s222 = ssub.s32 9216, 9216
          %223 = vsyncadd [#allocation10], %s222
          %s224 = sshll.u32 [#allocation9], 4
          %s225 = int_to_ptr.vmem [resolvable:$true] %s224
          %230 = dma.hbm_to_vmem [thread:$0]  %s3, 9216, %s225, [#allocation10], 64, 64, 4
        $region16: #{tpu_custom_call.1} parent=11 // pred_fallthru
          _
        // Predicated region
        $region17: #{tpu_custom_call.1} parent=11 // pred_check
          %p231 = pneg %p175
        $region18: #{tpu_custom_call.1} parent=11 // pred_check_branch
          %233 = sbr.rel (%p231) target = $region20
        $region19: #{tpu_custom_call.1} parent=11 // pred_region
          _
        $region20: #{tpu_custom_call.1} parent=11 // pred_fallthru
          _
      $region12: #{tpu_custom_call.1} parent=5 // pred_fallthru
        _
      %p234 = scmp.lt.s32.totalorder %s21, 2
      // Predicated region
      $region21: #{tpu_custom_call.1} parent=5 // pred_check
        %p235 = pneg %p234
      $region22: #{tpu_custom_call.1} parent=5 // pred_check_branch
        %237 = sbr.rel (%p235) target = $region24
      $region23: #{tpu_custom_call.1} parent=5 // pred_region
        // Predicated region
        $region25: #{tpu_custom_call.1} parent=23 // pred_check
          %p238 = pneg %p55
        $region26: #{tpu_custom_call.1} parent=23 // pred_check_branch
          %240 = sbr.rel (%p238) target = $region28
        $region27: #{tpu_custom_call.1} parent=23 // pred_region
          %s241 = sand.u32 %s45, 1
          %s242 = scalar_lea.sflag [#allocation4], %s241
          %s243 = sand.u32 %s45, 1
          %s244 = smul.addr %s243, 128
          %s245 = scalar_lea.vmem [#allocation3], %s244
          %s246 = smul.u32 16, %s29
          %s248 = ssub.s32 2048, 2048
          %249 = vsyncadd %s242, %s248
          %s250 = smul.addr %s246, 2
          %s251 = smul.addr %s28, 32
          %s252 = sadd.s32 %s250, %s251
          %s253 = smul.addr %s252, 64
          %s254 = scalar_lea.hbm %s0, %s253
          %s255 = sshll.u32 %s245, 4
          %s256 = int_to_ptr.vmem [resolvable:$true] %s255
          %261 = dma.hbm_to_vmem [thread:$0]  %s254, 2048, %s256, %s242, 64, 64, 4
        $region28: #{tpu_custom_call.1} parent=23 // pred_fallthru
          _
        // Predicated region
        $region29: #{tpu_custom_call.1} parent=23 // pred_check
          %p262 = pneg %p91
        $region30: #{tpu_custom_call.1} parent=23 // pred_check_branch
          %264 = sbr.rel (%p262) target = $region32
        $region31: #{tpu_custom_call.1} parent=23 // pred_region
          %s265 = sand.u32 %s21, 1
          %s266 = scalar_lea.sflag [#allocation7], %s265
          %s267 = sand.u32 %s81, 1
          %s268 = smul.addr %s267, 8
          %s269 = scalar_lea.vmem [#allocation6], %s268
          %s270 = smul.u32 %s29, 16
          %s271 = ssub.s32 %s270, 1
          %p272 = scmp.gt.s32.totalorder %s271, 0
          %s273 = scalar_select %p272, %s271, 0
          %s275 = ssub.s32 128, 128
          %276 = vsyncadd %s266, %s275
          %s277 = smul.addr %s273, 2
          %s278 = smul.addr %s28, 32
          %s279 = sadd.s32 %s277, %s278
          %s280 = smul.addr %s279, 64
          %s281 = scalar_lea.hbm %s1, %s280
          %s282 = sshll.u32 %s269, 4
          %s283 = int_to_ptr.vmem [resolvable:$true] %s282
          %288 = dma.hbm_to_vmem [thread:$0]  %s281, 128, %s283, %s266, 64, 64, 4
        $region32: #{tpu_custom_call.1} parent=23 // pred_fallthru
          _
        // Predicated region
        $region33: #{tpu_custom_call.1} parent=23 // pred_check
          %p289 = pneg %p127
        $region34: #{tpu_custom_call.1} parent=23 // pred_check_branch
          %291 = sbr.rel (%p289) target = $region36
        $region35: #{tpu_custom_call.1} parent=23 // pred_region
          %s292 = sand.u32 %s21, 1
          %s293 = scalar_lea.sflag [#allocation7], %s292
          %s294 = sand.u32 %s117, 1
          %s295 = smul.addr %s294, 8
          %s296 = scalar_lea.vmem [#allocation8], %s295
          %s297 = smul.u32 %s29, 16
          %s298 = sadd.s32 %s297, 16
          %p299 = scmp.lt.s32.totalorder %s298, 15
          %s300 = scalar_select %p299, %s298, 15
          %s302 = ssub.s32 128, 128
          %303 = vsyncadd %s293, %s302
          %s304 = smul.addr %s300, 2
          %s305 = smul.addr %s28, 32
          %s306 = sadd.s32 %s304, %s305
          %s307 = smul.addr %s306, 64
          %s308 = scalar_lea.hbm %s2, %s307
          %s309 = sshll.u32 %s296, 4
          %s310 = int_to_ptr.vmem [resolvable:$true] %s309
          %315 = dma.hbm_to_vmem [thread:$0]  %s308, 128, %s310, %s293, 64, 64, 4
        $region36: #{tpu_custom_call.1} parent=23 // pred_fallthru
          _
      $region24: #{tpu_custom_call.1} parent=5 // pred_fallthru
        _
      %p316 = scmp.le.s32.totalorder 1, %s21
      %p317 = scmp.lt.s32.totalorder %s21, 3
      %p318 = pnand %p316, %p317
      %p319 = pneg %p318
      // Predicated region
      $region37: #{tpu_custom_call.1} parent=5 // pred_check
        _
      $region38: #{tpu_custom_call.1} parent=5 // pred_check_branch
        %321 = sbr.rel (%p318) target = $region40
      $region39: #{tpu_custom_call.1} parent=5 // pred_region
        %s322 = ssub.s32 %s21, 1
        %s323 = sand.u32 %s48, 1
        %s324 = scalar_lea.sflag [#allocation4], %s323
        %s325 = sand.u32 %s48, 1
        %s326 = smul.addr %s325, 128
        %s327 = scalar_lea.vmem [#allocation3], %s326
        // Predicated region
        $region41: #{tpu_custom_call.1} parent=39 // pred_check
          %p328 = pneg %p61
        $region42: #{tpu_custom_call.1} parent=39 // pred_check_branch
          %330 = sbr.rel (%p328) target = $region44
        $region43: #{tpu_custom_call.1} parent=39 // pred_region
          %331 = dma.done %s324, 2048
        $region44: #{tpu_custom_call.1} parent=39 // pred_fallthru
          _
        %s332 = sand.u32 %s26, 1
        %s333 = scalar_lea.sflag [#allocation7], %s332
        %s334 = sand.u32 %s84, 1
        %s335 = smul.addr %s334, 8
        %s336 = scalar_lea.vmem [#allocation6], %s335
        // Predicated region
        $region45: #{tpu_custom_call.1} parent=39 // pred_check
          %p337 = pneg %p97
        $region46: #{tpu_custom_call.1} parent=39 // pred_check_branch
          %339 = sbr.rel (%p337) target = $region48
        $region47: #{tpu_custom_call.1} parent=39 // pred_region
          %340 = dma.done %s333, 128
        $region48: #{tpu_custom_call.1} parent=39 // pred_fallthru
          _
        %s341 = sand.u32 %s26, 1
        %s342 = scalar_lea.sflag [#allocation7], %s341
        %s343 = sand.u32 %s120, 1
        %s344 = smul.addr %s343, 8
        %s345 = scalar_lea.vmem [#allocation8], %s344
        // Predicated region
        $region49: #{tpu_custom_call.1} parent=39 // pred_check
          %p346 = pneg %p133
        $region50: #{tpu_custom_call.1} parent=39 // pred_check_branch
          %348 = sbr.rel (%p346) target = $region52
        $region51: #{tpu_custom_call.1} parent=39 // pred_region
          %349 = dma.done %s342, 128
        $region52: #{tpu_custom_call.1} parent=39 // pred_fallthru
          _
        // Predicated region
        $region53: #{tpu_custom_call.1} parent=39 // pred_check
          %p350 = pneg %p154
        $region54: #{tpu_custom_call.1} parent=39 // pred_check_branch
          %352 = sbr.rel (%p350) target = $region56
        $region55: #{tpu_custom_call.1} parent=39 // pred_region
          %353 = dma.done [#allocation10], 9216
        $region56: #{tpu_custom_call.1} parent=39 // pred_fallthru
          _
        %s354 = sand.u32 %s48, 1
        %s355 = scalar_lea.sflag [#allocation4], %s354
        %s356 = sand.u32 %s48, 1
        %s357 = smul.addr %s356, 128
        %s358 = scalar_lea.vmem [#allocation3], %s357
        %p359 = pneg %p61
        %p360 = pneg %p58
        %s361 = sand.u32 %s26, 1
        %s362 = scalar_lea.sflag [#allocation7], %s361
        %s363 = sand.u32 %s84, 1
        %s364 = smul.addr %s363, 8
        %s365 = scalar_lea.vmem [#allocation6], %s364
        %p366 = pneg %p97
        %p367 = pneg %p94
        %s368 = sand.u32 %s26, 1
        %s369 = scalar_lea.sflag [#allocation7], %s368
        %s370 = sand.u32 %s120, 1
        %s371 = smul.addr %s370, 8
        %s372 = scalar_lea.vmem [#allocation8], %s371
        %p373 = pneg %p133
        %p374 = pneg %p130
        %p375 = pneg %p154
        %p376 = pneg %p151
        %p377 = pneg %p175
        %p378 = pneg %p172
        %p379 = pneg %p203
        %p380 = pneg %p200
        %s381 = sand.u32 %s190, 1
        %s382 = scalar_lea.sflag [#allocation5], %s381
        %s383 = sand.u32 %s190, 1
        %s384 = smul.addr %s383, 256
        %s385 = scalar_lea.vmem [#allocation11], %s384
        %s386 = smul.u32 16, %s31
        %s387 = smul.u32 %s31, 16
        %s388 = ssub.s32 %s387, 1
        %p389 = scmp.gt.s32.totalorder %s388, 0
        %s390 = scalar_select %p389, %s388, 0
        %s391 = smul.u32 %s31, 16
        %s392 = sadd.s32 %s391, 16
        %p393 = scmp.lt.s32.totalorder %s392, 15
        %s394 = scalar_select %p393, %s392, 15
        %s395 = smul.u32 16, %s31
        %v397 = vld [vmem:[%s336] sm:$0xf]
        %v398 = vld [vmem:[%s336 + $0x4] sm:$0xf]
        %p399 = scmp.gt.s32.totalorder %s31, 0
        %s400 = scalar_select %p399, 1, 0
        %s401 = scvt.s32.f32 %s400
        %p403 = scmp.ne.f32.partialorder %s401, %s401
        %s404 = sshrl.u32 %s401, 16
        %s405 = sand.u32 %s404, 1
        %s406 = sadd.s32 32767, %s405
        %s407 = sadd.s32 %s401, %s406
        %s408 = sand.u32 %s407, 4294901760
        %s409 = scalar_select %p403, 2143289344, %s408
        %s411 = sshrl.u32 %s409, 16
        %s412 = sshll.u32 %s411, 16
        %s413 = sor.u32 %s411, %s412
        %v414 = vstv %s413
        %v416 = vmul.bf16 %v397, %v414
        %v417 = vmul.bf16 %v398, %v414
        %v418 = vld [vmem:[%s345] sm:$0xf]
        %v419 = vld [vmem:[%s345 + $0x4] sm:$0xf]
        %p420 = scmp.lt.s32.totalorder %s31, 0
        %s421 = scalar_select %p420, 1, 0
        %s422 = scvt.s32.f32 %s421
        %p424 = scmp.ne.f32.partialorder %s422, %s422
        %s425 = sshrl.u32 %s422, 16
        %s426 = sand.u32 %s425, 1
        %s427 = sadd.s32 32767, %s426
        %s428 = sadd.s32 %s422, %s427
        %s429 = sand.u32 %s428, 4294901760
        %s430 = scalar_select %p424, 2143289344, %s429
        %s432 = sshrl.u32 %s430, 16
        %s433 = sshll.u32 %s432, 16
        %s434 = sor.u32 %s432, %s433
        %v435 = vstv %s434
        %v437 = vmul.bf16 %v418, %v435
        %v438 = vmul.bf16 %v419, %v435
        %v441 = vunpack.c.l.b16 %v416
        %v442 = vunpack.c.l.b16 %v417
        %v443 = vpack.c.b16 %v442, %v441
        %445 = vst [vmem:[#allocation2] sm:$0xff] %v443
        %v446 = vld [vmem:[%s327] sm:$0xf]
        %v447 = vld [vmem:[%s327 + $0x4] sm:$0xf]
        %v448 = vld [vmem:[%s327 + $0x8] sm:$0xf]
        %v449 = vld [vmem:[%s327 + $0xc] sm:$0xf]
        %v450 = vld [vmem:[%s327 + $0x10] sm:$0xf]
        %v451 = vld [vmem:[%s327 + $0x14] sm:$0xf]
        %v452 = vld [vmem:[%s327 + $0x18] sm:$0xf]
        %v453 = vld [vmem:[%s327 + $0x1c] sm:$0xf]
        %v454 = vld [vmem:[%s327 + $0x20] sm:$0xf]
        %v455 = vld [vmem:[%s327 + $0x24] sm:$0xf]
        %v456 = vld [vmem:[%s327 + $0x28] sm:$0xf]
        %v457 = vld [vmem:[%s327 + $0x2c] sm:$0xf]
        %v458 = vld [vmem:[%s327 + $0x30] sm:$0xf]
        %v459 = vld [vmem:[%s327 + $0x34] sm:$0xf]
        %v460 = vld [vmem:[%s327 + $0x38] sm:$0xf]
        %v461 = vld [vmem:[%s327 + $0x3c] sm:$0xf]
        %v462 = vld [vmem:[%s327 + $0x40] sm:$0xf]
        %v463 = vld [vmem:[%s327 + $0x44] sm:$0xf]
        %v464 = vld [vmem:[%s327 + $0x48] sm:$0xf]
        %v465 = vld [vmem:[%s327 + $0x4c] sm:$0xf]
        %v466 = vld [vmem:[%s327 + $0x50] sm:$0xf]
        %v467 = vld [vmem:[%s327 + $0x54] sm:$0xf]
        %v468 = vld [vmem:[%s327 + $0x58] sm:$0xf]
        %v469 = vld [vmem:[%s327 + $0x5c] sm:$0xf]
        %v470 = vld [vmem:[%s327 + $0x60] sm:$0xf]
        %v471 = vld [vmem:[%s327 + $0x64] sm:$0xf]
        %v472 = vld [vmem:[%s327 + $0x68] sm:$0xf]
        %v473 = vld [vmem:[%s327 + $0x6c] sm:$0xf]
        %v474 = vld [vmem:[%s327 + $0x70] sm:$0xf]
        %v475 = vld [vmem:[%s327 + $0x74] sm:$0xf]
        %v476 = vld [vmem:[%s327 + $0x78] sm:$0xf]
        %v477 = vld [vmem:[%s327 + $0x7c] sm:$0xf]
        %v510 = vunpack.c.l.b16 %v446
        %v511 = vunpack.c.l.b16 %v447
        %v512 = vunpack.c.l.b16 %v448
        %v513 = vunpack.c.l.b16 %v449
        %v514 = vunpack.c.l.b16 %v450
        %v515 = vunpack.c.l.b16 %v451
        %v516 = vunpack.c.l.b16 %v452
        %v517 = vunpack.c.l.b16 %v453
        %v518 = vunpack.c.l.b16 %v454
        %v519 = vunpack.c.l.b16 %v455
        %v520 = vunpack.c.l.b16 %v456
        %v521 = vunpack.c.l.b16 %v457
        %v522 = vunpack.c.l.b16 %v458
        %v523 = vunpack.c.l.b16 %v459
        %v524 = vunpack.c.l.b16 %v460
        %v525 = vunpack.c.l.b16 %v461
        %v526 = vunpack.c.l.b16 %v462
        %v527 = vunpack.c.l.b16 %v463
        %v528 = vunpack.c.l.b16 %v464
        %v529 = vunpack.c.l.b16 %v465
        %v530 = vunpack.c.l.b16 %v466
        %v531 = vunpack.c.l.b16 %v467
        %v532 = vunpack.c.l.b16 %v468
        %v533 = vunpack.c.l.b16 %v469
        %v534 = vunpack.c.l.b16 %v470
        %v535 = vunpack.c.l.b16 %v471
        %v536 = vunpack.c.l.b16 %v472
        %v537 = vunpack.c.l.b16 %v473
        %v538 = vunpack.c.l.b16 %v474
        %v539 = vunpack.c.l.b16 %v475
        %v540 = vunpack.c.l.b16 %v476
        %v541 = vunpack.c.l.b16 %v477
        %v542 = vpack.c.b16 %v511, %v510
        %v543 = vpack.c.b16 %v513, %v512
        %v544 = vpack.c.b16 %v515, %v514
        %v545 = vpack.c.b16 %v517, %v516
        %v546 = vpack.c.b16 %v519, %v518
        %v547 = vpack.c.b16 %v521, %v520
        %v548 = vpack.c.b16 %v523, %v522
        %v549 = vpack.c.b16 %v525, %v524
        %v550 = vpack.c.b16 %v527, %v526
        %v551 = vpack.c.b16 %v529, %v528
        %v552 = vpack.c.b16 %v531, %v530
        %v553 = vpack.c.b16 %v533, %v532
        %v554 = vpack.c.b16 %v535, %v534
        %v555 = vpack.c.b16 %v537, %v536
        %v556 = vpack.c.b16 %v539, %v538
        %v557 = vpack.c.b16 %v541, %v540
        %574 = vst [vmem:[#allocation2 + $0x8] sm:$0xff] %v542
        %575 = vst [vmem:[#allocation2 + $0x10] sm:$0xff] %v543
        %576 = vst [vmem:[#allocation2 + $0x18] sm:$0xff] %v544
        %577 = vst [vmem:[#allocation2 + $0x20] sm:$0xff] %v545
        %578 = vst [vmem:[#allocation2 + $0x28] sm:$0xff] %v546
        %579 = vst [vmem:[#allocation2 + $0x30] sm:$0xff] %v547
        %580 = vst [vmem:[#allocation2 + $0x38] sm:$0xff] %v548
        %581 = vst [vmem:[#allocation2 + $0x40] sm:$0xff] %v549
        %582 = vst [vmem:[#allocation2 + $0x48] sm:$0xff] %v550
        %583 = vst [vmem:[#allocation2 + $0x50] sm:$0xff] %v551
        %584 = vst [vmem:[#allocation2 + $0x58] sm:$0xff] %v552
        %585 = vst [vmem:[#allocation2 + $0x60] sm:$0xff] %v553
        %586 = vst [vmem:[#allocation2 + $0x68] sm:$0xff] %v554
        %587 = vst [vmem:[#allocation2 + $0x70] sm:$0xff] %v555
        %588 = vst [vmem:[#allocation2 + $0x78] sm:$0xff] %v556
        %589 = vst [vmem:[#allocation2 + $0x80] sm:$0xff] %v557
        %v592 = vunpack.c.l.b16 %v437
        %v593 = vunpack.c.l.b16 %v438
        %v594 = vpack.c.b16 %v593, %v592
        %596 = vst [vmem:[#allocation2 + $0x88] sm:$0xff] %v594
        %v597 = vld [vmem:[#allocation2] sm:$0xff]
        %v598 = vld [vmem:[#allocation2 + $0x8] sm:$0xff]
        %v599 = vld [vmem:[#allocation2 + $0x10] sm:$0xff]
        %v600 = vld [vmem:[#allocation2 + $0x18] sm:$0xff]
        %v601 = vld [vmem:[#allocation2 + $0x20] sm:$0xff]
        %v602 = vld [vmem:[#allocation2 + $0x28] sm:$0xff]
        %v603 = vld [vmem:[#allocation2 + $0x30] sm:$0xff]
        %v604 = vld [vmem:[#allocation2 + $0x38] sm:$0xff]
        %v605 = vld [vmem:[#allocation2 + $0x40] sm:$0xff]
        %v606 = vld [vmem:[#allocation2 + $0x48] sm:$0xff]
        %v607 = vld [vmem:[#allocation2 + $0x50] sm:$0xff]
        %v608 = vld [vmem:[#allocation2 + $0x58] sm:$0xff]
        %v609 = vld [vmem:[#allocation2 + $0x60] sm:$0xff]
        %v610 = vld [vmem:[#allocation2 + $0x68] sm:$0xff]
        %v611 = vld [vmem:[#allocation2 + $0x70] sm:$0xff]
        %v612 = vld [vmem:[#allocation2 + $0x78] sm:$0xff]
        %v613 = vld [vmem:[#allocation2 + $0x80] sm:$0xff]
        %v614 = vld [vmem:[#allocation2 + $0x10] sm:$0xff]
        %v615 = vld [vmem:[#allocation2 + $0x18] sm:$0xff]
        %v616 = vld [vmem:[#allocation2 + $0x20] sm:$0xff]
        %v617 = vld [vmem:[#allocation2 + $0x28] sm:$0xff]
        %v618 = vld [vmem:[#allocation2 + $0x30] sm:$0xff]
        %v619 = vld [vmem:[#allocation2 + $0x38] sm:$0xff]
        %v620 = vld [vmem:[#allocation2 + $0x40] sm:$0xff]
        %v621 = vld [vmem:[#allocation2 + $0x48] sm:$0xff]
        %v622 = vld [vmem:[#allocation2 + $0x50] sm:$0xff]
        %v623 = vld [vmem:[#allocation2 + $0x58] sm:$0xff]
        %v624 = vld [vmem:[#allocation2 + $0x60] sm:$0xff]
        %v625 = vld [vmem:[#allocation2 + $0x68] sm:$0xff]
        %v626 = vld [vmem:[#allocation2 + $0x70] sm:$0xff]
        %v627 = vld [vmem:[#allocation2 + $0x78] sm:$0xff]
        %v628 = vld [vmem:[#allocation2 + $0x80] sm:$0xff]
        %v629 = vld [vmem:[#allocation2 + $0x88] sm:$0xff]
        %v630 = vld [vmem:[%s4] sm:$0x1]
        %v632 = vlaneseq
        %v633 = vshrl.u32 %v632, 7
        %v634 = vsub.s32 0, %v633
        %v635 = vrot.slane %v630, %v634
        %v637 = vld [vmem:[#allocation9] sm:$0xf]
        %v638 = vld [vmem:[#allocation9 + $0x4] sm:$0xf]
        %v639 = vld [vmem:[#allocation9 + $0x8] sm:$0xf]
        %v640 = vld [vmem:[#allocation9 + $0xc] sm:$0xf]
        %v641 = vld [vmem:[#allocation9 + $0x10] sm:$0xf]
        %v642 = vld [vmem:[#allocation9 + $0x14] sm:$0xf]
        %v643 = vld [vmem:[#allocation9 + $0x18] sm:$0xf]
        %v644 = vld [vmem:[#allocation9 + $0x1c] sm:$0xf]
        %v645 = vld [vmem:[#allocation9 + $0x20] sm:$0xf]
        %v646 = vld [vmem:[#allocation9 + $0x24] sm:$0xf]
        %v647 = vld [vmem:[#allocation9 + $0x28] sm:$0xf]
        %v648 = vld [vmem:[#allocation9 + $0x2c] sm:$0xf]
        %v649 = vld [vmem:[#allocation9 + $0x30] sm:$0xf]
        %v650 = vld [vmem:[#allocation9 + $0x34] sm:$0xf]
        %v651 = vld [vmem:[#allocation9 + $0x38] sm:$0xf]
        %v652 = vld [vmem:[#allocation9 + $0x3c] sm:$0xf]
        %s653 = scalar_lea.vmem [#allocation9], 64
        %v654 = vld [vmem:[%s653] sm:$0xf]
        %v655 = vld [vmem:[%s653 + $0x4] sm:$0xf]
        %v656 = vld [vmem:[%s653 + $0x8] sm:$0xf]
        %v657 = vld [vmem:[%s653 + $0xc] sm:$0xf]
        %v658 = vld [vmem:[%s653 + $0x10] sm:$0xf]
        %v659 = vld [vmem:[%s653 + $0x14] sm:$0xf]
        %v660 = vld [vmem:[%s653 + $0x18] sm:$0xf]
        %v661 = vld [vmem:[%s653 + $0x1c] sm:$0xf]
        %v662 = vld [vmem:[%s653 + $0x20] sm:$0xf]
        %v663 = vld [vmem:[%s653 + $0x24] sm:$0xf]
        %v664 = vld [vmem:[%s653 + $0x28] sm:$0xf]
        %v665 = vld [vmem:[%s653 + $0x2c] sm:$0xf]
        %v666 = vld [vmem:[%s653 + $0x30] sm:$0xf]
        %v667 = vld [vmem:[%s653 + $0x34] sm:$0xf]
        %v668 = vld [vmem:[%s653 + $0x38] sm:$0xf]
        %v669 = vld [vmem:[%s653 + $0x3c] sm:$0xf]
        %v686 = vunpack.c.l.b16 %v654
        %v687 = vunpack.c.l.b16 %v655
        %v688 = vunpack.c.l.b16 %v656
        %v689 = vunpack.c.l.b16 %v657
        %v690 = vunpack.c.l.b16 %v658
        %v691 = vunpack.c.l.b16 %v659
        %v692 = vunpack.c.l.b16 %v660
        %v693 = vunpack.c.l.b16 %v661
        %v694 = vunpack.c.l.b16 %v662
        %v695 = vunpack.c.l.b16 %v663
        %v696 = vunpack.c.l.b16 %v664
        %v697 = vunpack.c.l.b16 %v665
        %v698 = vunpack.c.l.b16 %v666
        %v699 = vunpack.c.l.b16 %v667
        %v700 = vunpack.c.l.b16 %v668
        %v701 = vunpack.c.l.b16 %v669
        %v702 = vpack.c.b16 %v687, %v686
        %v703 = vpack.c.b16 %v689, %v688
        %v704 = vpack.c.b16 %v691, %v690
        %v705 = vpack.c.b16 %v693, %v692
        %v706 = vpack.c.b16 %v695, %v694
        %v707 = vpack.c.b16 %v697, %v696
        %v708 = vpack.c.b16 %v699, %v698
        %v709 = vpack.c.b16 %v701, %v700
        %718 = vmatprep.subr.bf16.mxu0 0
        %719 = vmatpush1.bf16.msra.mxu0 %v702
        %720 = vmatprep.subr.bf16.mxu0 0
        %721 = vmatpush1.bf16.msra.mxu0 %v703
        %722 = vmatprep.subr.bf16.mxu0 0
        %723 = vmatpush1.bf16.msra.mxu0 %v704
        %724 = vmatprep.subr.bf16.mxu0 0
        %725 = vmatpush1.bf16.msra.mxu0 %v705
        %726 = vmatprep.subr.bf16.mxu0 0
        %727 = vmatpush1.bf16.msra.mxu0 %v706
        %728 = vmatprep.subr.bf16.mxu0 0
        %729 = vmatpush1.bf16.msra.mxu0 %v707
        %730 = vmatprep.subr.bf16.mxu0 0
        %731 = vmatpush1.bf16.msra.mxu0 %v708
        %732 = vmatprep.subr.bf16.mxu0 0
        %733 = vmatpush1.bf16.msra.mxu0 %v709
        %734 = vmatprep.subr.bf16.mxu0 0
        %735 = vmatpush1.bf16.msra.mxu0 0
        %736 = vmatprep.subr.bf16.mxu0 0
        %737 = vmatpush1.bf16.msra.mxu0 0
        %738 = vmatprep.subr.bf16.mxu0 0
        %739 = vmatpush1.bf16.msra.mxu0 0
        %740 = vmatprep.subr.bf16.mxu0 0
        %741 = vmatpush1.bf16.msra.mxu0 0
        %742 = vmatprep.subr.bf16.mxu0 0
        %743 = vmatpush1.bf16.msra.mxu0 0
        %744 = vmatprep.subr.bf16.mxu0 0
        %745 = vmatpush1.bf16.msra.mxu0 0
        %746 = vmatprep.subr.bf16.mxu0 0
        %747 = vmatpush1.bf16.msra.mxu0 0
        %748 = vmatprep.subr.bf16.mxu0 0
        %749 = vmatpush1.bf16.msra.mxu0 0
        %750 = vmatprep.mubr.bf16.mxu0 0
        %751 = vmatmul.mubr.bf16.gmra.mrb[0].mxu0 %v597
        %v752 = vpop.f32.mrb[0].mxu0
        %v753 = vadd.f32 0.0, %v752
        %v754 = vpop.f32.mrb[0].mxu0
        %v755 = vpop.f32.mrb[0].mxu0
        %v756 = vadd.f32 0.0, %v755
        %v757 = vpop.f32.mrb[0].mxu0
        %758 = vmatprep.mubr.bf16.mxu0 0
        %759 = vmatmul.mubr.bf16.gmra.mrb[0].mxu0 %v598
        %v760 = vpop.f32.mrb[0].mxu0
        %v761 = vadd.f32 0.0, %v760
        %v762 = vpop.f32.mrb[0].mxu0
        %v763 = vpop.f32.mrb[0].mxu0
        %v764 = vadd.f32 0.0, %v763
        %v765 = vpop.f32.mrb[0].mxu0
        %766 = vmatprep.mubr.bf16.mxu0 0
        %767 = vmatmul.mubr.bf16.gmra.mrb[0].mxu0 %v599
        %v768 = vpop.f32.mrb[0].mxu0
        %v769 = vadd.f32 0.0, %v768
        %v770 = vpop.f32.mrb[0].mxu0
        %v771 = vpop.f32.mrb[0].mxu0
        %v772 = vadd.f32 0.0, %v771
        %v773 = vpop.f32.mrb[0].mxu0
        %774 = vmatprep.mubr.bf16.mxu0 0
        %775 = vmatmul.mubr.bf16.gmra.mrb[0].mxu0 %v600
        %v776 = vpop.f32.mrb[0].mxu0
        %v777 = vadd.f32 0.0, %v776
        %v778 = vpop.f32.mrb[0].mxu0
        %v779 = vpop.f32.mrb[0].mxu0
        %v780 = vadd.f32 0.0, %v779
        %v781 = vpop.f32.mrb[0].mxu0
        %782 = vmatprep.mubr.bf16.mxu0 0
        %783 = vmatmul.mubr.bf16.gmra.mrb[0].mxu0 %v601
        %v784 = vpop.f32.mrb[0].mxu0
        %v785 = vadd.f32 0.0, %v784
        %v786 = vpop.f32.mrb[0].mxu0
        %v787 = vpop.f32.mrb[0].mxu0
        %v788 = vadd.f32 0.0, %v787
        %v789 = vpop.f32.mrb[0].mxu0
        %790 = vmatprep.mubr.bf16.mxu0 0
        %791 = vmatmul.mubr.bf16.gmra.mrb[0].mxu0 %v602
        %v792 = vpop.f32.mrb[0].mxu0
        %v793 = vadd.f32 0.0, %v792
        %v794 = vpop.f32.mrb[0].mxu0
        %v795 = vpop.f32.mrb[0].mxu0
        %v796 = vadd.f32 0.0, %v795
        %v797 = vpop.f32.mrb[0].mxu0
        %798 = vmatprep.mubr.bf16.mxu0 0
        %799 = vmatmul.mubr.bf16.gmra.mrb[0].mxu0 %v603
        %v800 = vpop.f32.mrb[0].mxu0
        %v801 = vadd.f32 0.0, %v800
        %v802 = vpop.f32.mrb[0].mxu0
        %v803 = vpop.f32.mrb[0].mxu0
        %v804 = vadd.f32 0.0, %v803
        %v805 = vpop.f32.mrb[0].mxu0
        %806 = vmatprep.mubr.bf16.mxu0 0
        %807 = vmatmul.mubr.bf16.gmra.mrb[0].mxu0 %v604
        %v808 = vpop.f32.mrb[0].mxu0
        %v809 = vadd.f32 0.0, %v808
        %v810 = vpop.f32.mrb[0].mxu0
        %v811 = vpop.f32.mrb[0].mxu0
        %v812 = vadd.f32 0.0, %v811
        %v813 = vpop.f32.mrb[0].mxu0
        %814 = vmatprep.mubr.bf16.mxu0 0
        %815 = vmatmul.mubr.bf16.gmra.mrb[0].mxu0 %v605
        %v816 = vpop.f32.mrb[0].mxu0
        %v817 = vadd.f32 0.0, %v816
        %v818 = vpop.f32.mrb[0].mxu0
        %v819 = vpop.f32.mrb[0].mxu0
        %v820 = vadd.f32 0.0, %v819
        %v821 = vpop.f32.mrb[0].mxu0
        %822 = vmatprep.mubr.bf16.mxu0 0
        %823 = vmatmul.mubr.bf16.gmra.mrb[0].mxu0 %v606
        %v824 = vpop.f32.mrb[0].mxu0
        %v825 = vadd.f32 0.0, %v824
        %v826 = vpop.f32.mrb[0].mxu0
        %v827 = vpop.f32.mrb[0].mxu0
        %v828 = vadd.f32 0.0, %v827
        %v829 = vpop.f32.mrb[0].mxu0
        %830 = vmatprep.mubr.bf16.mxu0 0
        %831 = vmatmul.mubr.bf16.gmra.mrb[0].mxu0 %v607
        %v832 = vpop.f32.mrb[0].mxu0
        %v833 = vadd.f32 0.0, %v832
        %v834 = vpop.f32.mrb[0].mxu0
        %v835 = vpop.f32.mrb[0].mxu0
        %v836 = vadd.f32 0.0, %v835
        %v837 = vpop.f32.mrb[0].mxu0
        %838 = vmatprep.mubr.bf16.mxu0 0
        %839 = vmatmul.mubr.bf16.gmra.mrb[0].mxu0 %v608
        %v840 = vpop.f32.mrb[0].mxu0
        %v841 = vadd.f32 0.0, %v840
        %v842 = vpop.f32.mrb[0].mxu0
        %v843 = vpop.f32.mrb[0].mxu0
        %v844 = vadd.f32 0.0, %v843
        %v845 = vpop.f32.mrb[0].mxu0
        %846 = vmatprep.mubr.bf16.mxu0 0
        %847 = vmatmul.mubr.bf16.gmra.mrb[0].mxu0 %v609
        %v848 = vpop.f32.mrb[0].mxu0
        %v849 = vadd.f32 0.0, %v848
        %v850 = vpop.f32.mrb[0].mxu0
        %v851 = vpop.f32.mrb[0].mxu0
        %v852 = vadd.f32 0.0, %v851
        %v853 = vpop.f32.mrb[0].mxu0
        %854 = vmatprep.mubr.bf16.mxu0 0
        %855 = vmatmul.mubr.bf16.gmra.mrb[0].mxu0 %v610
        %v856 = vpop.f32.mrb[0].mxu0
        %v857 = vadd.f32 0.0, %v856
        %v858 = vpop.f32.mrb[0].mxu0
        %v859 = vpop.f32.mrb[0].mxu0
        %v860 = vadd.f32 0.0, %v859
        %v861 = vpop.f32.mrb[0].mxu0
        %862 = vmatprep.mubr.bf16.mxu0 0
        %863 = vmatmul.mubr.bf16.gmra.mrb[0].mxu0 %v611
        %v864 = vpop.f32.mrb[0].mxu0
        %v865 = vadd.f32 0.0, %v864
        %v866 = vpop.f32.mrb[0].mxu0
        %v867 = vpop.f32.mrb[0].mxu0
        %v868 = vadd.f32 0.0, %v867
        %v869 = vpop.f32.mrb[0].mxu0
        %870 = vmatprep.mubr.bf16.mxu0 0
        %871 = vmatmul.mubr.bf16.gmra.mrb[0].mxu0 %v612
        %v872 = vpop.f32.mrb[0].mxu0
        %v873 = vadd.f32 0.0, %v872
        %v874 = vpop.f32.mrb[0].mxu0
        %v875 = vpop.f32.mrb[0].mxu0
        %v876 = vadd.f32 0.0, %v875
        %v877 = vpop.f32.mrb[0].mxu0
        %878 = vdwg.mxu0
        %s879 = scalar_lea.vmem [#allocation9], 128
        %v880 = vld [vmem:[%s879] sm:$0xf]
        %v881 = vld [vmem:[%s879 + $0x4] sm:$0xf]
        %v882 = vld [vmem:[%s879 + $0x8] sm:$0xf]
        %v883 = vld [vmem:[%s879 + $0xc] sm:$0xf]
        %v884 = vld [vmem:[%s879 + $0x10] sm:$0xf]
        %v885 = vld [vmem:[%s879 + $0x14] sm:$0xf]
        %v886 = vld [vmem:[%s879 + $0x18] sm:$0xf]
        %v887 = vld [vmem:[%s879 + $0x1c] sm:$0xf]
        %v888 = vld [vmem:[%s879 + $0x20] sm:$0xf]
        %v889 = vld [vmem:[%s879 + $0x24] sm:$0xf]
        %v890 = vld [vmem:[%s879 + $0x28] sm:$0xf]
        %v891 = vld [vmem:[%s879 + $0x2c] sm:$0xf]
        %v892 = vld [vmem:[%s879 + $0x30] sm:$0xf]
        %v893 = vld [vmem:[%s879 + $0x34] sm:$0xf]
        %v894 = vld [vmem:[%s879 + $0x38] sm:$0xf]
        %v895 = vld [vmem:[%s879 + $0x3c] sm:$0xf]
        %v896 = vadd.f32 %v635, %v753
        %v897 = vadd.f32 %v635, %v756
        %v898 = vadd.f32 %v635, %v761
        %v899 = vadd.f32 %v635, %v764
        %v900 = vadd.f32 %v635, %v769
        %v901 = vadd.f32 %v635, %v772
        %v902 = vadd.f32 %v635, %v777
        %v903 = vadd.f32 %v635, %v780
        %v904 = vadd.f32 %v635, %v785
        %v905 = vadd.f32 %v635, %v788
        %v906 = vadd.f32 %v635, %v793
        %v907 = vadd.f32 %v635, %v796
        %v908 = vadd.f32 %v635, %v801
        %v909 = vadd.f32 %v635, %v804
        %v910 = vadd.f32 %v635, %v809
        %v911 = vadd.f32 %v635, %v812
        %v912 = vadd.f32 %v635, %v817
        %v913 = vadd.f32 %v635, %v820
        %v914 = vadd.f32 %v635, %v825
        %v915 = vadd.f32 %v635, %v828
        %v916 = vadd.f32 %v635, %v833
        %v917 = vadd.f32 %v635, %v836
        %v918 = vadd.f32 %v635, %v841
        %v919 = vadd.f32 %v635, %v844
        %v920 = vadd.f32 %v635, %v849
        %v921 = vadd.f32 %v635, %v852
        %v922 = vadd.f32 %v635, %v857
        %v923 = vadd.f32 %v635, %v860
        %v924 = vadd.f32 %v635, %v865
        %v925 = vadd.f32 %v635, %v868
        %v926 = vadd.f32 %v635, %v873
        %v927 = vadd.f32 %v635, %v876
        %s928 = scalar_lea.vmem [#allocation9], 192
        %v929 = vld [vmem:[%s928] sm:$0xf]
        %v930 = vld [vmem:[%s928 + $0x4] sm:$0xf]
        %v931 = vld [vmem:[%s928 + $0x8] sm:$0xf]
        %v932 = vld [vmem:[%s928 + $0xc] sm:$0xf]
        %v933 = vld [vmem:[%s928 + $0x10] sm:$0xf]
        %v934 = vld [vmem:[%s928 + $0x14] sm:$0xf]
        %v935 = vld [vmem:[%s928 + $0x18] sm:$0xf]
        %v936 = vld [vmem:[%s928 + $0x1c] sm:$0xf]
        %v937 = vld [vmem:[%s928 + $0x20] sm:$0xf]
        %v938 = vld [vmem:[%s928 + $0x24] sm:$0xf]
        %v939 = vld [vmem:[%s928 + $0x28] sm:$0xf]
        %v940 = vld [vmem:[%s928 + $0x2c] sm:$0xf]
        %v941 = vld [vmem:[%s928 + $0x30] sm:$0xf]
        %v942 = vld [vmem:[%s928 + $0x34] sm:$0xf]
        %v943 = vld [vmem:[%s928 + $0x38] sm:$0xf]
        %v944 = vld [vmem:[%s928 + $0x3c] sm:$0xf]
        %v961 = vunpack.c.l.b16 %v929
        %v962 = vunpack.c.l.b16 %v930
        %v963 = vunpack.c.l.b16 %v931
        %v964 = vunpack.c.l.b16 %v932
        %v965 = vunpack.c.l.b16 %v933
        %v966 = vunpack.c.l.b16 %v934
        %v967 = vunpack.c.l.b16 %v935
        %v968 = vunpack.c.l.b16 %v936
        %v969 = vunpack.c.l.b16 %v937
        %v970 = vunpack.c.l.b16 %v938
        %v971 = vunpack.c.l.b16 %v939
        %v972 = vunpack.c.l.b16 %v940
        %v973 = vunpack.c.l.b16 %v941
        %v974 = vunpack.c.l.b16 %v942
        %v975 = vunpack.c.l.b16 %v943
        %v976 = vunpack.c.l.b16 %v944
        %v977 = vpack.c.b16 %v962, %v961
        %v978 = vpack.c.b16 %v964, %v963
        %v979 = vpack.c.b16 %v966, %v965
        %v980 = vpack.c.b16 %v968, %v967
        %v981 = vpack.c.b16 %v970, %v969
        %v982 = vpack.c.b16 %v972, %v971
        %v983 = vpack.c.b16 %v974, %v973
        %v984 = vpack.c.b16 %v976, %v975
        %993 = vmatprep.subr.bf16.mxu0 0
        %994 = vmatpush1.bf16.msra.mxu0 %v977
        %995 = vmatprep.subr.bf16.mxu0 0
        %996 = vmatpush1.bf16.msra.mxu0 %v978
        %997 = vmatprep.subr.bf16.mxu0 0
        %998 = vmatpush1.bf16.msra.mxu0 %v979
        %999 = vmatprep.subr.bf16.mxu0 0
        %1000 = vmatpush1.bf16.msra.mxu0 %v980
        %1001 = vmatprep.subr.bf16.mxu0 0
        %1002 = vmatpush1.bf16.msra.mxu0 %v981
        %1003 = vmatprep.subr.bf16.mxu0 0
        %1004 = vmatpush1.bf16.msra.mxu0 %v982
        %1005 = vmatprep.subr.bf16.mxu0 0
        %1006 = vmatpush1.bf16.msra.mxu0 %v983
        %1007 = vmatprep.subr.bf16.mxu0 0
        %1008 = vmatpush1.bf16.msra.mxu0 %v984
        %1009 = vmatprep.subr.bf16.mxu0 0
        %1010 = vmatpush1.bf16.msra.mxu0 0
        %1011 = vmatprep.subr.bf16.mxu0 0
        %1012 = vmatpush1.bf16.msra.mxu0 0
        %1013 = vmatprep.subr.bf16.mxu0 0
        %1014 = vmatpush1.bf16.msra.mxu0 0
        %1015 = vmatprep.subr.bf16.mxu0 0
        %1016 = vmatpush1.bf16.msra.mxu0 0
        %1017 = vmatprep.subr.bf16.mxu0 0
        %1018 = vmatpush1.bf16.msra.mxu0 0
        %1019 = vmatprep.subr.bf16.mxu0 0
        %1020 = vmatpush1.bf16.msra.mxu0 0
        %1021 = vmatprep.subr.bf16.mxu0 0
        %1022 = vmatpush1.bf16.msra.mxu0 0
        %1023 = vmatprep.subr.bf16.mxu0 0
        %1024 = vmatpush1.bf16.msra.mxu0 0
        %1025 = vmatprep.mubr.bf16.mxu0 0
        %1026 = vmatmul.mubr.bf16.gmra.mrb[0].mxu0 %v598
        %v1027 = vpop.f32.mrb[0].mxu0
        %v1028 = vadd.f32 0.0, %v1027
        %v1029 = vpop.f32.mrb[0].mxu0
        %v1030 = vpop.f32.mrb[0].mxu0
        %v1031 = vadd.f32 0.0, %v1030
        %v1032 = vpop.f32.mrb[0].mxu0
        %1033 = vmatprep.mubr.bf16.mxu0 0
        %1034 = vmatmul.mubr.bf16.gmra.mrb[0].mxu0 %v599
        %v1035 = vpop.f32.mrb[0].mxu0
        %v1036 = vadd.f32 0.0, %v1035
        %v1037 = vpop.f32.mrb[0].mxu0
        %v1038 = vpop.f32.mrb[0].mxu0
        %v1039 = vadd.f32 0.0, %v1038
        %v1040 = vpop.f32.mrb[0].mxu0
        %1041 = vmatprep.mubr.bf16.mxu0 0
        %1042 = vmatmul.mubr.bf16.gmra.mrb[0].mxu0 %v600
        %v1043 = vpop.f32.mrb[0].mxu0
        %v1044 = vadd.f32 0.0, %v1043
        %v1045 = vpop.f32.mrb[0].mxu0
        %v1046 = vpop.f32.mrb[0].mxu0
        %v1047 = vadd.f32 0.0, %v1046
        %v1048 = vpop.f32.mrb[0].mxu0
        %1049 = vmatprep.mubr.bf16.mxu0 0
        %1050 = vmatmul.mubr.bf16.gmra.mrb[0].mxu0 %v601
        %v1051 = vpop.f32.mrb[0].mxu0
        %v1052 = vadd.f32 0.0, %v1051
        %v1053 = vpop.f32.mrb[0].mxu0
        %v1054 = vpop.f32.mrb[0].mxu0
        %v1055 = vadd.f32 0.0, %v1054
        %v1056 = vpop.f32.mrb[0].mxu0
        %1057 = vmatprep.mubr.bf16.mxu0 0
        %1058 = vmatmul.mubr.bf16.gmra.mrb[0].mxu0 %v602
        %v1059 = vpop.f32.mrb[0].mxu0
        %v1060 = vadd.f32 0.0, %v1059
        %v1061 = vpop.f32.mrb[0].mxu0
        %v1062 = vpop.f32.mrb[0].mxu0
        %v1063 = vadd.f32 0.0, %v1062
        %v1064 = vpop.f32.mrb[0].mxu0
        %1065 = vmatprep.mubr.bf16.mxu0 0
        %1066 = vmatmul.mubr.bf16.gmra.mrb[0].mxu0 %v603
        %v1067 = vpop.f32.mrb[0].mxu0
        %v1068 = vadd.f32 0.0, %v1067
        %v1069 = vpop.f32.mrb[0].mxu0
        %v1070 = vpop.f32.mrb[0].mxu0
        %v1071 = vadd.f32 0.0, %v1070
        %v1072 = vpop.f32.mrb[0].mxu0
        %1073 = vmatprep.mubr.bf16.mxu0 0
        %1074 = vmatmul.mubr.bf16.gmra.mrb[0].mxu0 %v604
        %v1075 = vpop.f32.mrb[0].mxu0
        %v1076 = vadd.f32 0.0, %v1075
        %v1077 = vpop.f32.mrb[0].mxu0
        %v1078 = vpop.f32.mrb[0].mxu0
        %v1079 = vadd.f32 0.0, %v1078
        %v1080 = vpop.f32.mrb[0].mxu0
        %1081 = vmatprep.mubr.bf16.mxu0 0
        %1082 = vmatmul.mubr.bf16.gmra.mrb[0].mxu0 %v605
        %v1083 = vpop.f32.mrb[0].mxu0
        %v1084 = vadd.f32 0.0, %v1083
        %v1085 = vpop.f32.mrb[0].mxu0
        %v1086 = vpop.f32.mrb[0].mxu0
        %v1087 = vadd.f32 0.0, %v1086
        %v1088 = vpop.f32.mrb[0].mxu0
        %1089 = vmatprep.mubr.bf16.mxu0 0
        %1090 = vmatmul.mubr.bf16.gmra.mrb[0].mxu0 %v606
        %v1091 = vpop.f32.mrb[0].mxu0
        %v1092 = vadd.f32 0.0, %v1091
        %v1093 = vpop.f32.mrb[0].mxu0
        %v1094 = vpop.f32.mrb[0].mxu0
        %v1095 = vadd.f32 0.0, %v1094
        %v1096 = vpop.f32.mrb[0].mxu0
        %1097 = vmatprep.mubr.bf16.mxu0 0
        %1098 = vmatmul.mubr.bf16.gmra.mrb[0].mxu0 %v607
        %v1099 = vpop.f32.mrb[0].mxu0
        %v1100 = vadd.f32 0.0, %v1099
        %v1101 = vpop.f32.mrb[0].mxu0
        %v1102 = vpop.f32.mrb[0].mxu0
        %v1103 = vadd.f32 0.0, %v1102
        %v1104 = vpop.f32.mrb[0].mxu0
        %1105 = vmatprep.mubr.bf16.mxu0 0
        %1106 = vmatmul.mubr.bf16.gmra.mrb[0].mxu0 %v608
        %v1107 = vpop.f32.mrb[0].mxu0
        %v1108 = vadd.f32 0.0, %v1107
        %v1109 = vpop.f32.mrb[0].mxu0
        %v1110 = vpop.f32.mrb[0].mxu0
        %v1111 = vadd.f32 0.0, %v1110
        %v1112 = vpop.f32.mrb[0].mxu0
        %1113 = vmatprep.mubr.bf16.mxu0 0
        %1114 = vmatmul.mubr.bf16.gmra.mrb[0].mxu0 %v609
        %v1115 = vpop.f32.mrb[0].mxu0
        %v1116 = vadd.f32 0.0, %v1115
        %v1117 = vpop.f32.mrb[0].mxu0
        %v1118 = vpop.f32.mrb[0].mxu0
        %v1119 = vadd.f32 0.0, %v1118
        %v1120 = vpop.f32.mrb[0].mxu0
        %1121 = vmatprep.mubr.bf16.mxu0 0
        %1122 = vmatmul.mubr.bf16.gmra.mrb[0].mxu0 %v610
        %v1123 = vpop.f32.mrb[0].mxu0
        %v1124 = vadd.f32 0.0, %v1123
        %v1125 = vpop.f32.mrb[0].mxu0
        %v1126 = vpop.f32.mrb[0].mxu0
        %v1127 = vadd.f32 0.0, %v1126
        %v1128 = vpop.f32.mrb[0].mxu0
        %1129 = vmatprep.mubr.bf16.mxu0 0
        %1130 = vmatmul.mubr.bf16.gmra.mrb[0].mxu0 %v611
        %v1131 = vpop.f32.mrb[0].mxu0
        %v1132 = vadd.f32 0.0, %v1131
        %v1133 = vpop.f32.mrb[0].mxu0
        %v1134 = vpop.f32.mrb[0].mxu0
        %v1135 = vadd.f32 0.0, %v1134
        %v1136 = vpop.f32.mrb[0].mxu0
        %1137 = vmatprep.mubr.bf16.mxu0 0
        %1138 = vmatmul.mubr.bf16.gmra.mrb[0].mxu0 %v612
        %v1139 = vpop.f32.mrb[0].mxu0
        %v1140 = vadd.f32 0.0, %v1139
        %v1141 = vpop.f32.mrb[0].mxu0
        %v1142 = vpop.f32.mrb[0].mxu0
        %v1143 = vadd.f32 0.0, %v1142
        %v1144 = vpop.f32.mrb[0].mxu0
        %1145 = vmatprep.mubr.bf16.mxu0 0
        %1146 = vmatmul.mubr.bf16.gmra.mrb[0].mxu0 %v613
        %v1147 = vpop.f32.mrb[0].mxu0
        %v1148 = vadd.f32 0.0, %v1147
        %v1149 = vpop.f32.mrb[0].mxu0
        %v1150 = vpop.f32.mrb[0].mxu0
        %v1151 = vadd.f32 0.0, %v1150
        %v1152 = vpop.f32.mrb[0].mxu0
        %1153 = vdwg.mxu0
        %s1154 = scalar_lea.vmem [#allocation9], 256
        %v1155 = vld [vmem:[%s1154] sm:$0xf]
        %v1156 = vld [vmem:[%s1154 + $0x4] sm:$0xf]
        %v1157 = vld [vmem:[%s1154 + $0x8] sm:$0xf]
        %v1158 = vld [vmem:[%s1154 + $0xc] sm:$0xf]
        %v1159 = vld [vmem:[%s1154 + $0x10] sm:$0xf]
        %v1160 = vld [vmem:[%s1154 + $0x14] sm:$0xf]
        %v1161 = vld [vmem:[%s1154 + $0x18] sm:$0xf]
        %v1162 = vld [vmem:[%s1154 + $0x1c] sm:$0xf]
        %v1163 = vld [vmem:[%s1154 + $0x20] sm:$0xf]
        %v1164 = vld [vmem:[%s1154 + $0x24] sm:$0xf]
        %v1165 = vld [vmem:[%s1154 + $0x28] sm:$0xf]
        %v1166 = vld [vmem:[%s1154 + $0x2c] sm:$0xf]
        %v1167 = vld [vmem:[%s1154 + $0x30] sm:$0xf]
        %v1168 = vld [vmem:[%s1154 + $0x34] sm:$0xf]
        %v1169 = vld [vmem:[%s1154 + $0x38] sm:$0xf]
        %v1170 = vld [vmem:[%s1154 + $0x3c] sm:$0xf]
        %v1187 = vunpack.c.l.b16 %v1155
        %v1188 = vunpack.c.l.b16 %v1156
        %v1189 = vunpack.c.l.b16 %v1157
        %v1190 = vunpack.c.l.b16 %v1158
        %v1191 = vunpack.c.l.b16 %v1159
        %v1192 = vunpack.c.l.b16 %v1160
        %v1193 = vunpack.c.l.b16 %v1161
        %v1194 = vunpack.c.l.b16 %v1162
        %v1195 = vunpack.c.l.b16 %v1163
        %v1196 = vunpack.c.l.b16 %v1164
        %v1197 = vunpack.c.l.b16 %v1165
        %v1198 = vunpack.c.l.b16 %v1166
        %v1199 = vunpack.c.l.b16 %v1167
        %v1200 = vunpack.c.l.b16 %v1168
        %v1201 = vunpack.c.l.b16 %v1169
        %v1202 = vunpack.c.l.b16 %v1170
        %v1203 = vpack.c.b16 %v1188, %v1187
        %v1204 = vpack.c.b16 %v1190, %v1189
        %v1205 = vpack.c.b16 %v1192, %v1191
        %v1206 = vpack.c.b16 %v1194, %v1193
        %v1207 = vpack.c.b16 %v1196, %v1195
        %v1208 = vpack.c.b16 %v1198, %v1197
        %v1209 = vpack.c.b16 %v1200, %v1199
        %v1210 = vpack.c.b16 %v1202, %v1201
        %1219 = vmatprep.subr.bf16.mxu0 0
        %1220 = vmatpush1.bf16.msra.mxu0 %v1203
        %1221 = vmatprep.subr.bf16.mxu0 0
        %1222 = vmatpush1.bf16.msra.mxu0 %v1204
        %1223 = vmatprep.subr.bf16.mxu0 0
        %1224 = vmatpush1.bf16.msra.mxu0 %v1205
        %1225 = vmatprep.subr.bf16.mxu0 0
        %1226 = vmatpush1.bf16.msra.mxu0 %v1206
        %1227 = vmatprep.subr.bf16.mxu0 0
        %1228 = vmatpush1.bf16.msra.mxu0 %v1207
        %1229 = vmatprep.subr.bf16.mxu0 0
        %1230 = vmatpush1.bf16.msra.mxu0 %v1208
        %1231 = vmatprep.subr.bf16.mxu0 0
        %1232 = vmatpush1.bf16.msra.mxu0 %v1209
        %1233 = vmatprep.subr.bf16.mxu0 0
        %1234 = vmatpush1.bf16.msra.mxu0 %v1210
        %1235 = vmatprep.subr.bf16.mxu0 0
        %1236 = vmatpush1.bf16.msra.mxu0 0
        %1237 = vmatprep.subr.bf16.mxu0 0
        %1238 = vmatpush1.bf16.msra.mxu0 0
        %1239 = vmatprep.subr.bf16.mxu0 0
        %1240 = vmatpush1.bf16.msra.mxu0 0
        %1241 = vmatprep.subr.bf16.mxu0 0
        %1242 = vmatpush1.bf16.msra.mxu0 0
        %1243 = vmatprep.subr.bf16.mxu0 0
        %1244 = vmatpush1.bf16.msra.mxu0 0
        %1245 = vmatprep.subr.bf16.mxu0 0
        %1246 = vmatpush1.bf16.msra.mxu0 0
        %1247 = vmatprep.subr.bf16.mxu0 0
        %1248 = vmatpush1.bf16.msra.mxu0 0
        %1249 = vmatprep.subr.bf16.mxu0 0
        %1250 = vmatpush1.bf16.msra.mxu0 0
        %1251 = vmatprep.mubr.bf16.mxu0 0
        %1252 = vmatmul.mubr.bf16.gmra.mrb[0].mxu0 %v598
        %v1253 = vpop.f32.mrb[0].mxu0
        %v1254 = vadd.f32 0.0, %v1253
        %v1255 = vpop.f32.mrb[0].mxu0
        %v1256 = vpop.f32.mrb[0].mxu0
        %v1257 = vadd.f32 0.0, %v1256
        %v1258 = vpop.f32.mrb[0].mxu0
        %1259 = vmatprep.mubr.bf16.mxu0 0
        %1260 = vmatmul.mubr.bf16.gmra.mrb[0].mxu0 %v599
        %v1261 = vpop.f32.mrb[0].mxu0
        %v1262 = vadd.f32 0.0, %v1261
        %v1263 = vpop.f32.mrb[0].mxu0
        %v1264 = vpop.f32.mrb[0].mxu0
        %v1265 = vadd.f32 0.0, %v1264
        %v1266 = vpop.f32.mrb[0].mxu0
        %1267 = vmatprep.mubr.bf16.mxu0 0
        %1268 = vmatmul.mubr.bf16.gmra.mrb[0].mxu0 %v600
        %v1269 = vpop.f32.mrb[0].mxu0
        %v1270 = vadd.f32 0.0, %v1269
        %v1271 = vpop.f32.mrb[0].mxu0
        %v1272 = vpop.f32.mrb[0].mxu0
        %v1273 = vadd.f32 0.0, %v1272
        %v1274 = vpop.f32.mrb[0].mxu0
        %1275 = vmatprep.mubr.bf16.mxu0 0
        %1276 = vmatmul.mubr.bf16.gmra.mrb[0].mxu0 %v601
        %v1277 = vpop.f32.mrb[0].mxu0
        %v1278 = vadd.f32 0.0, %v1277
        %v1279 = vpop.f32.mrb[0].mxu0
        %v1280 = vpop.f32.mrb[0].mxu0
        %v1281 = vadd.f32 0.0, %v1280
        %v1282 = vpop.f32.mrb[0].mxu0
        %1283 = vmatprep.mubr.bf16.mxu0 0
        %1284 = vmatmul.mubr.bf16.gmra.mrb[0].mxu0 %v602
        %v1285 = vpop.f32.mrb[0].mxu0
        %v1286 = vadd.f32 0.0, %v1285
        %v1287 = vpop.f32.mrb[0].mxu0
        %v1288 = vpop.f32.mrb[0].mxu0
        %v1289 = vadd.f32 0.0, %v1288
        %v1290 = vpop.f32.mrb[0].mxu0
        %1291 = vmatprep.mubr.bf16.mxu0 0
        %1292 = vmatmul.mubr.bf16.gmra.mrb[0].mxu0 %v603
        %v1293 = vpop.f32.mrb[0].mxu0
        %v1294 = vadd.f32 0.0, %v1293
        %v1295 = vpop.f32.mrb[0].mxu0
        %v1296 = vpop.f32.mrb[0].mxu0
        %v1297 = vadd.f32 0.0, %v1296
        %v1298 = vpop.f32.mrb[0].mxu0
        %1299 = vmatprep.mubr.bf16.mxu0 0
        %1300 = vmatmul.mubr.bf16.gmra.mrb[0].mxu0 %v604
        %v1301 = vpop.f32.mrb[0].mxu0
        %v1302 = vadd.f32 0.0, %v1301
        %v1303 = vpop.f32.mrb[0].mxu0
        %v1304 = vpop.f32.mrb[0].mxu0
        %v1305 = vadd.f32 0.0, %v1304
        %v1306 = vpop.f32.mrb[0].mxu0
        %1307 = vmatprep.mubr.bf16.mxu0 0
        %1308 = vmatmul.mubr.bf16.gmra.mrb[0].mxu0 %v605
        %v1309 = vpop.f32.mrb[0].mxu0
        %v1310 = vadd.f32 0.0, %v1309
        %v1311 = vpop.f32.mrb[0].mxu0
        %v1312 = vpop.f32.mrb[0].mxu0
        %v1313 = vadd.f32 0.0, %v1312
        %v1314 = vpop.f32.mrb[0].mxu0
        %1315 = vmatprep.mubr.bf16.mxu0 0
        %1316 = vmatmul.mubr.bf16.gmra.mrb[0].mxu0 %v606
        %v1317 = vpop.f32.mrb[0].mxu0
        %v1318 = vadd.f32 0.0, %v1317
        %v1319 = vpop.f32.mrb[0].mxu0
        %v1320 = vpop.f32.mrb[0].mxu0
        %v1321 = vadd.f32 0.0, %v1320
        %v1322 = vpop.f32.mrb[0].mxu0
        %1323 = vmatprep.mubr.bf16.mxu0 0
        %1324 = vmatmul.mubr.bf16.gmra.mrb[0].mxu0 %v607
        %v1325 = vpop.f32.mrb[0].mxu0
        %v1326 = vadd.f32 0.0, %v1325
        %v1327 = vpop.f32.mrb[0].mxu0
        %v1328 = vpop.f32.mrb[0].mxu0
        %v1329 = vadd.f32 0.0, %v1328
        %v1330 = vpop.f32.mrb[0].mxu0
        %1331 = vmatprep.mubr.bf16.mxu0 0
        %1332 = vmatmul.mubr.bf16.gmra.mrb[0].mxu0 %v608
        %v1333 = vpop.f32.mrb[0].mxu0
        %v1334 = vadd.f32 0.0, %v1333
        %v1335 = vpop.f32.mrb[0].mxu0
        %v1336 = vpop.f32.mrb[0].mxu0
        %v1337 = vadd.f32 0.0, %v1336
        %v1338 = vpop.f32.mrb[0].mxu0
        %1339 = vmatprep.mubr.bf16.mxu0 0
        %1340 = vmatmul.mubr.bf16.gmra.mrb[0].mxu0 %v609
        %v1341 = vpop.f32.mrb[0].mxu0
        %v1342 = vadd.f32 0.0, %v1341
        %v1343 = vpop.f32.mrb[0].mxu0
        %v1344 = vpop.f32.mrb[0].mxu0
        %v1345 = vadd.f32 0.0, %v1344
        %v1346 = vpop.f32.mrb[0].mxu0
        %1347 = vmatprep.mubr.bf16.mxu0 0
        %1348 = vmatmul.mubr.bf16.gmra.mrb[0].mxu0 %v610
        %v1349 = vpop.f32.mrb[0].mxu0
        %v1350 = vadd.f32 0.0, %v1349
        %v1351 = vpop.f32.mrb[0].mxu0
        %v1352 = vpop.f32.mrb[0].mxu0
        %v1353 = vadd.f32 0.0, %v1352
        %v1354 = vpop.f32.mrb[0].mxu0
        %1355 = vmatprep.mubr.bf16.mxu0 0
        %1356 = vmatmul.mubr.bf16.gmra.mrb[0].mxu0 %v611
        %v1357 = vpop.f32.mrb[0].mxu0
        %v1358 = vadd.f32 0.0, %v1357
        %v1359 = vpop.f32.mrb[0].mxu0
        %v1360 = vpop.f32.mrb[0].mxu0
        %v1361 = vadd.f32 0.0, %v1360
        %v1362 = vpop.f32.mrb[0].mxu0
        %1363 = vmatprep.mubr.bf16.mxu0 0
        %1364 = vmatmul.mubr.bf16.gmra.mrb[0].mxu0 %v612
        %v1365 = vpop.f32.mrb[0].mxu0
        %v1366 = vadd.f32 0.0, %v1365
        %v1367 = vpop.f32.mrb[0].mxu0
        %v1368 = vpop.f32.mrb[0].mxu0
        %v1369 = vadd.f32 0.0, %v1368
        %v1370 = vpop.f32.mrb[0].mxu0
        %1371 = vmatprep.mubr.bf16.mxu0 0
        %1372 = vmatmul.mubr.bf16.gmra.mrb[0].mxu0 %v613
        %v1373 = vpop.f32.mrb[0].mxu0
        %v1374 = vadd.f32 0.0, %v1373
        %v1375 = vpop.f32.mrb[0].mxu0
        %v1376 = vpop.f32.mrb[0].mxu0
        %v1377 = vadd.f32 0.0, %v1376
        %v1378 = vpop.f32.mrb[0].mxu0
        %1379 = vdwg.mxu0
        %s1380 = scalar_lea.vmem [#allocation9], 320
        %v1381 = vld [vmem:[%s1380] sm:$0xf]
        %v1382 = vld [vmem:[%s1380 + $0x4] sm:$0xf]
        %v1383 = vld [vmem:[%s1380 + $0x8] sm:$0xf]
        %v1384 = vld [vmem:[%s1380 + $0xc] sm:$0xf]
        %v1385 = vld [vmem:[%s1380 + $0x10] sm:$0xf]
        %v1386 = vld [vmem:[%s1380 + $0x14] sm:$0xf]
        %v1387 = vld [vmem:[%s1380 + $0x18] sm:$0xf]
        %v1388 = vld [vmem:[%s1380 + $0x1c] sm:$0xf]
        %v1389 = vld [vmem:[%s1380 + $0x20] sm:$0xf]
        %v1390 = vld [vmem:[%s1380 + $0x24] sm:$0xf]
        %v1391 = vld [vmem:[%s1380 + $0x28] sm:$0xf]
        %v1392 = vld [vmem:[%s1380 + $0x2c] sm:$0xf]
        %v1393 = vld [vmem:[%s1380 + $0x30] sm:$0xf]
        %v1394 = vld [vmem:[%s1380 + $0x34] sm:$0xf]
        %v1395 = vld [vmem:[%s1380 + $0x38] sm:$0xf]
        %v1396 = vld [vmem:[%s1380 + $0x3c] sm:$0xf]
        %v1413 = vunpack.c.l.b16 %v1381
        %v1414 = vunpack.c.l.b16 %v1382
        %v1415 = vunpack.c.l.b16 %v1383
        %v1416 = vunpack.c.l.b16 %v1384
        %v1417 = vunpack.c.l.b16 %v1385
        %v1418 = vunpack.c.l.b16 %v1386
        %v1419 = vunpack.c.l.b16 %v1387
        %v1420 = vunpack.c.l.b16 %v1388
        %v1421 = vunpack.c.l.b16 %v1389
        %v1422 = vunpack.c.l.b16 %v1390
        %v1423 = vunpack.c.l.b16 %v1391
        %v1424 = vunpack.c.l.b16 %v1392
        %v1425 = vunpack.c.l.b16 %v1393
        %v1426 = vunpack.c.l.b16 %v1394
        %v1427 = vunpack.c.l.b16 %v1395
        %v1428 = vunpack.c.l.b16 %v1396
        %v1429 = vpack.c.b16 %v1414, %v1413
        %v1430 = vpack.c.b16 %v1416, %v1415
        %v1431 = vpack.c.b16 %v1418, %v1417
        %v1432 = vpack.c.b16 %v1420, %v1419
        %v1433 = vpack.c.b16 %v1422, %v1421
        %v1434 = vpack.c.b16 %v1424, %v1423
        %v1435 = vpack.c.b16 %v1426, %v1425
        %v1436 = vpack.c.b16 %v1428, %v1427
        %1445 = vmatprep.subr.bf16.mxu0 0
        %1446 = vmatpush1.bf16.msra.mxu0 %v1429
        %1447 = vmatprep.subr.bf16.mxu0 0
        %1448 = vmatpush1.bf16.msra.mxu0 %v1430
        %1449 = vmatprep.subr.bf16.mxu0 0
        %1450 = vmatpush1.bf16.msra.mxu0 %v1431
        %1451 = vmatprep.subr.bf16.mxu0 0
        %1452 = vmatpush1.bf16.msra.mxu0 %v1432
        %1453 = vmatprep.subr.bf16.mxu0 0
        %1454 = vmatpush1.bf16.msra.mxu0 %v1433
        %1455 = vmatprep.subr.bf16.mxu0 0
        %1456 = vmatpush1.bf16.msra.mxu0 %v1434
        %1457 = vmatprep.subr.bf16.mxu0 0
        %1458 = vmatpush1.bf16.msra.mxu0 %v1435
        %1459 = vmatprep.subr.bf16.mxu0 0
        %1460 = vmatpush1.bf16.msra.mxu0 %v1436
        %1461 = vmatprep.subr.bf16.mxu0 0
        %1462 = vmatpush1.bf16.msra.mxu0 0
        %1463 = vmatprep.subr.bf16.mxu0 0
        %1464 = vmatpush1.bf16.msra.mxu0 0
        %1465 = vmatprep.subr.bf16.mxu0 0
        %1466 = vmatpush1.bf16.msra.mxu0 0
        %1467 = vmatprep.subr.bf16.mxu0 0
        %1468 = vmatpush1.bf16.msra.mxu0 0
        %1469 = vmatprep.subr.bf16.mxu0 0
        %1470 = vmatpush1.bf16.msra.mxu0 0
        %1471 = vmatprep.subr.bf16.mxu0 0
        %1472 = vmatpush1.bf16.msra.mxu0 0
        %1473 = vmatprep.subr.bf16.mxu0 0
        %1474 = vmatpush1.bf16.msra.mxu0 0
        %1475 = vmatprep.subr.bf16.mxu0 0
        %1476 = vmatpush1.bf16.msra.mxu0 0
        %1477 = vmatprep.mubr.bf16.mxu0 0
        %1478 = vmatmul.mubr.bf16.gmra.mrb[0].mxu0 %v598
        %v1479 = vpop.f32.mrb[0].mxu0
        %v1480 = vadd.f32 0.0, %v1479
        %v1481 = vpop.f32.mrb[0].mxu0
        %v1482 = vpop.f32.mrb[0].mxu0
        %v1483 = vadd.f32 0.0, %v1482
        %v1484 = vpop.f32.mrb[0].mxu0
        %1485 = vmatprep.mubr.bf16.mxu0 0
        %1486 = vmatmul.mubr.bf16.gmra.mrb[0].mxu0 %v599
        %v1487 = vpop.f32.mrb[0].mxu0
        %v1488 = vadd.f32 0.0, %v1487
        %v1489 = vpop.f32.mrb[0].mxu0
        %v1490 = vpop.f32.mrb[0].mxu0
        %v1491 = vadd.f32 0.0, %v1490
        %v1492 = vpop.f32.mrb[0].mxu0
        %1493 = vmatprep.mubr.bf16.mxu0 0
        %1494 = vmatmul.mubr.bf16.gmra.mrb[0].mxu0 %v600
        %v1495 = vpop.f32.mrb[0].mxu0
        %v1496 = vadd.f32 0.0, %v1495
        %v1497 = vpop.f32.mrb[0].mxu0
        %v1498 = vpop.f32.mrb[0].mxu0
        %v1499 = vadd.f32 0.0, %v1498
        %v1500 = vpop.f32.mrb[0].mxu0
        %1501 = vmatprep.mubr.bf16.mxu0 0
        %1502 = vmatmul.mubr.bf16.gmra.mrb[0].mxu0 %v601
        %v1503 = vpop.f32.mrb[0].mxu0
        %v1504 = vadd.f32 0.0, %v1503
        %v1505 = vpop.f32.mrb[0].mxu0
        %v1506 = vpop.f32.mrb[0].mxu0
        %v1507 = vadd.f32 0.0, %v1506
        %v1508 = vpop.f32.mrb[0].mxu0
        %1509 = vmatprep.mubr.bf16.mxu0 0
        %1510 = vmatmul.mubr.bf16.gmra.mrb[0].mxu0 %v602
        %v1511 = vpop.f32.mrb[0].mxu0
        %v1512 = vadd.f32 0.0, %v1511
        %v1513 = vpop.f32.mrb[0].mxu0
        %v1514 = vpop.f32.mrb[0].mxu0
        %v1515 = vadd.f32 0.0, %v1514
        %v1516 = vpop.f32.mrb[0].mxu0
        %1517 = vmatprep.mubr.bf16.mxu0 0
        %1518 = vmatmul.mubr.bf16.gmra.mrb[0].mxu0 %v603
        %v1519 = vpop.f32.mrb[0].mxu0
        %v1520 = vadd.f32 0.0, %v1519
        %v1521 = vpop.f32.mrb[0].mxu0
        %v1522 = vpop.f32.mrb[0].mxu0
        %v1523 = vadd.f32 0.0, %v1522
        %v1524 = vpop.f32.mrb[0].mxu0
        %1525 = vmatprep.mubr.bf16.mxu0 0
        %1526 = vmatmul.mubr.bf16.gmra.mrb[0].mxu0 %v604
        %v1527 = vpop.f32.mrb[0].mxu0
        %v1528 = vadd.f32 0.0, %v1527
        %v1529 = vpop.f32.mrb[0].mxu0
        %v1530 = vpop.f32.mrb[0].mxu0
        %v1531 = vadd.f32 0.0, %v1530
        %v1532 = vpop.f32.mrb[0].mxu0
        %1533 = vmatprep.mubr.bf16.mxu0 0
        %1534 = vmatmul.mubr.bf16.gmra.mrb[0].mxu0 %v605
        %v1535 = vpop.f32.mrb[0].mxu0
        %v1536 = vadd.f32 0.0, %v1535
        %v1537 = vpop.f32.mrb[0].mxu0
        %v1538 = vpop.f32.mrb[0].mxu0
        %v1539 = vadd.f32 0.0, %v1538
        %v1540 = vpop.f32.mrb[0].mxu0
        %1541 = vmatprep.mubr.bf16.mxu0 0
        %1542 = vmatmul.mubr.bf16.gmra.mrb[0].mxu0 %v606
        %v1543 = vpop.f32.mrb[0].mxu0
        %v1544 = vadd.f32 0.0, %v1543
        %v1545 = vpop.f32.mrb[0].mxu0
        %v1546 = vpop.f32.mrb[0].mxu0
        %v1547 = vadd.f32 0.0, %v1546
        %v1548 = vpop.f32.mrb[0].mxu0
        %1549 = vmatprep.mubr.bf16.mxu0 0
        %1550 = vmatmul.mubr.bf16.gmra.mrb[0].mxu0 %v607
        %v1551 = vpop.f32.mrb[0].mxu0
        %v1552 = vadd.f32 0.0, %v1551
        %v1553 = vpop.f32.mrb[0].mxu0
        %v1554 = vpop.f32.mrb[0].mxu0
        %v1555 = vadd.f32 0.0, %v1554
        %v1556 = vpop.f32.mrb[0].mxu0
        %1557 = vmatprep.mubr.bf16.mxu0 0
        %1558 = vmatmul.mubr.bf16.gmra.mrb[0].mxu0 %v608
        %v1559 = vpop.f32.mrb[0].mxu0
        %v1560 = vadd.f32 0.0, %v1559
        %v1561 = vpop.f32.mrb[0].mxu0
        %v1562 = vpop.f32.mrb[0].mxu0
        %v1563 = vadd.f32 0.0, %v1562
        %v1564 = vpop.f32.mrb[0].mxu0
        %1565 = vmatprep.mubr.bf16.mxu0 0
        %1566 = vmatmul.mubr.bf16.gmra.mrb[0].mxu0 %v609
        %v1567 = vpop.f32.mrb[0].mxu0
        %v1568 = vadd.f32 0.0, %v1567
        %v1569 = vpop.f32.mrb[0].mxu0
        %v1570 = vpop.f32.mrb[0].mxu0
        %v1571 = vadd.f32 0.0, %v1570
        %v1572 = vpop.f32.mrb[0].mxu0
        %1573 = vmatprep.mubr.bf16.mxu0 0
        %1574 = vmatmul.mubr.bf16.gmra.mrb[0].mxu0 %v610
        %v1575 = vpop.f32.mrb[0].mxu0
        %v1576 = vadd.f32 0.0, %v1575
        %v1577 = vpop.f32.mrb[0].mxu0
        %v1578 = vpop.f32.mrb[0].mxu0
        %v1579 = vadd.f32 0.0, %v1578
        %v1580 = vpop.f32.mrb[0].mxu0
        %1581 = vmatprep.mubr.bf16.mxu0 0
        %1582 = vmatmul.mubr.bf16.gmra.mrb[0].mxu0 %v611
        %v1583 = vpop.f32.mrb[0].mxu0
        %v1584 = vadd.f32 0.0, %v1583
        %v1585 = vpop.f32.mrb[0].mxu0
        %v1586 = vpop.f32.mrb[0].mxu0
        %v1587 = vadd.f32 0.0, %v1586
        %v1588 = vpop.f32.mrb[0].mxu0
        %1589 = vmatprep.mubr.bf16.mxu0 0
        %1590 = vmatmul.mubr.bf16.gmra.mrb[0].mxu0 %v612
        %v1591 = vpop.f32.mrb[0].mxu0
        %v1592 = vadd.f32 0.0, %v1591
        %v1593 = vpop.f32.mrb[0].mxu0
        %v1594 = vpop.f32.mrb[0].mxu0
        %v1595 = vadd.f32 0.0, %v1594
        %v1596 = vpop.f32.mrb[0].mxu0
        %1597 = vmatprep.mubr.bf16.mxu0 0
        %1598 = vmatmul.mubr.bf16.gmra.mrb[0].mxu0 %v613
        %v1599 = vpop.f32.mrb[0].mxu0
        %v1600 = vadd.f32 0.0, %v1599
        %v1601 = vpop.f32.mrb[0].mxu0
        %v1602 = vpop.f32.mrb[0].mxu0
        %v1603 = vadd.f32 0.0, %v1602
        %v1604 = vpop.f32.mrb[0].mxu0
        %1605 = vdwg.mxu0
        %v1622 = vunpack.c.l.b16 %v637
        %v1623 = vunpack.c.l.b16 %v638
        %v1624 = vunpack.c.l.b16 %v639
        %v1625 = vunpack.c.l.b16 %v640
        %v1626 = vunpack.c.l.b16 %v641
        %v1627 = vunpack.c.l.b16 %v642
        %v1628 = vunpack.c.l.b16 %v643
        %v1629 = vunpack.c.l.b16 %v644
        %v1630 = vunpack.c.l.b16 %v645
        %v1631 = vunpack.c.l.b16 %v646
        %v1632 = vunpack.c.l.b16 %v647
        %v1633 = vunpack.c.l.b16 %v648
        %v1634 = vunpack.c.l.b16 %v649
        %v1635 = vunpack.c.l.b16 %v650
        %v1636 = vunpack.c.l.b16 %v651
        %v1637 = vunpack.c.l.b16 %v652
        %v1638 = vpack.c.b16 %v1623, %v1622
        %v1639 = vpack.c.b16 %v1625, %v1624
        %v1640 = vpack.c.b16 %v1627, %v1626
        %v1641 = vpack.c.b16 %v1629, %v1628
        %v1642 = vpack.c.b16 %v1631, %v1630
        %v1643 = vpack.c.b16 %v1633, %v1632
        %v1644 = vpack.c.b16 %v1635, %v1634
        %v1645 = vpack.c.b16 %v1637, %v1636
        %1654 = vmatprep.subr.bf16.mxu0 0
        %1655 = vmatpush1.bf16.msra.mxu0 %v1638
        %1656 = vmatprep.subr.bf16.mxu0 0
        %1657 = vmatpush1.bf16.msra.mxu0 %v1639
        %1658 = vmatprep.subr.bf16.mxu0 0
        %1659 = vmatpush1.bf16.msra.mxu0 %v1640
        %1660 = vmatprep.subr.bf16.mxu0 0
        %1661 = vmatpush1.bf16.msra.mxu0 %v1641
        %1662 = vmatprep.subr.bf16.mxu0 0
        %1663 = vmatpush1.bf16.msra.mxu0 %v1642
        %1664 = vmatprep.subr.bf16.mxu0 0
        %1665 = vmatpush1.bf16.msra.mxu0 %v1643
        %1666 = vmatprep.subr.bf16.mxu0 0
        %1667 = vmatpush1.bf16.msra.mxu0 %v1644
        %1668 = vmatprep.subr.bf16.mxu0 0
        %1669 = vmatpush1.bf16.msra.mxu0 %v1645
        %1670 = vmatprep.subr.bf16.mxu0 0
        %1671 = vmatpush1.bf16.msra.mxu0 0
        %1672 = vmatprep.subr.bf16.mxu0 0
        %1673 = vmatpush1.bf16.msra.mxu0 0
        %1674 = vmatprep.subr.bf16.mxu0 0
        %1675 = vmatpush1.bf16.msra.mxu0 0
        %1676 = vmatprep.subr.bf16.mxu0 0
        %1677 = vmatpush1.bf16.msra.mxu0 0
        %1678 = vmatprep.subr.bf16.mxu0 0
        %1679 = vmatpush1.bf16.msra.mxu0 0
        %1680 = vmatprep.subr.bf16.mxu0 0
        %1681 = vmatpush1.bf16.msra.mxu0 0
        %1682 = vmatprep.subr.bf16.mxu0 0
        %1683 = vmatpush1.bf16.msra.mxu0 0
        %1684 = vmatprep.subr.bf16.mxu0 0
        %1685 = vmatpush1.bf16.msra.mxu0 0
        %1686 = vmatprep.mubr.bf16.mxu0 0
        %1687 = vmatmul.mubr.bf16.gmra.mrb[0].mxu0 %v597
        %v1688 = vpop.f32.mrb[0].mxu0
        %v1689 = vadd.f32 %v1028, %v1688
        %v1690 = vpop.f32.mrb[0].mxu0
        %v1691 = vpop.f32.mrb[0].mxu0
        %v1692 = vadd.f32 %v1031, %v1691
        %v1693 = vpop.f32.mrb[0].mxu0
        %1694 = vmatprep.mubr.bf16.mxu0 0
        %1695 = vmatmul.mubr.bf16.gmra.mrb[0].mxu0 %v598
        %v1696 = vpop.f32.mrb[0].mxu0
        %v1697 = vadd.f32 %v1036, %v1696
        %v1698 = vpop.f32.mrb[0].mxu0
        %v1699 = vpop.f32.mrb[0].mxu0
        %v1700 = vadd.f32 %v1039, %v1699
        %v1701 = vpop.f32.mrb[0].mxu0
        %1702 = vmatprep.mubr.bf16.mxu0 0
        %1703 = vmatmul.mubr.bf16.gmra.mrb[0].mxu0 %v599
        %v1704 = vpop.f32.mrb[0].mxu0
        %v1705 = vadd.f32 %v1044, %v1704
        %v1706 = vpop.f32.mrb[0].mxu0
        %v1707 = vpop.f32.mrb[0].mxu0
        %v1708 = vadd.f32 %v1047, %v1707
        %v1709 = vpop.f32.mrb[0].mxu0
        %1710 = vmatprep.mubr.bf16.mxu0 0
        %1711 = vmatmul.mubr.bf16.gmra.mrb[0].mxu0 %v600
        %v1712 = vpop.f32.mrb[0].mxu0
        %v1713 = vadd.f32 %v1052, %v1712
        %v1714 = vpop.f32.mrb[0].mxu0
        %v1715 = vpop.f32.mrb[0].mxu0
        %v1716 = vadd.f32 %v1055, %v1715
        %v1717 = vpop.f32.mrb[0].mxu0
        %1718 = vmatprep.mubr.bf16.mxu0 0
        %1719 = vmatmul.mubr.bf16.gmra.mrb[0].mxu0 %v601
        %v1720 = vpop.f32.mrb[0].mxu0
        %v1721 = vadd.f32 %v1060, %v1720
        %v1722 = vpop.f32.mrb[0].mxu0
        %v1723 = vpop.f32.mrb[0].mxu0
        %v1724 = vadd.f32 %v1063, %v1723
        %v1725 = vpop.f32.mrb[0].mxu0
        %1726 = vmatprep.mubr.bf16.mxu0 0
        %1727 = vmatmul.mubr.bf16.gmra.mrb[0].mxu0 %v602
        %v1728 = vpop.f32.mrb[0].mxu0
        %v1729 = vadd.f32 %v1068, %v1728
        %v1730 = vpop.f32.mrb[0].mxu0
        %v1731 = vpop.f32.mrb[0].mxu0
        %v1732 = vadd.f32 %v1071, %v1731
        %v1733 = vpop.f32.mrb[0].mxu0
        %1734 = vmatprep.mubr.bf16.mxu0 0
        %1735 = vmatmul.mubr.bf16.gmra.mrb[0].mxu0 %v603
        %v1736 = vpop.f32.mrb[0].mxu0
        %v1737 = vadd.f32 %v1076, %v1736
        %v1738 = vpop.f32.mrb[0].mxu0
        %v1739 = vpop.f32.mrb[0].mxu0
        %v1740 = vadd.f32 %v1079, %v1739
        %v1741 = vpop.f32.mrb[0].mxu0
        %1742 = vmatprep.mubr.bf16.mxu0 0
        %1743 = vmatmul.mubr.bf16.gmra.mrb[0].mxu0 %v604
        %v1744 = vpop.f32.mrb[0].mxu0
        %v1745 = vadd.f32 %v1084, %v1744
        %v1746 = vpop.f32.mrb[0].mxu0
        %v1747 = vpop.f32.mrb[0].mxu0
        %v1748 = vadd.f32 %v1087, %v1747
        %v1749 = vpop.f32.mrb[0].mxu0
        %1750 = vmatprep.mubr.bf16.mxu0 0
        %1751 = vmatmul.mubr.bf16.gmra.mrb[0].mxu0 %v605
        %v1752 = vpop.f32.mrb[0].mxu0
        %v1753 = vadd.f32 %v1092, %v1752
        %v1754 = vpop.f32.mrb[0].mxu0
        %v1755 = vpop.f32.mrb[0].mxu0
        %v1756 = vadd.f32 %v1095, %v1755
        %v1757 = vpop.f32.mrb[0].mxu0
        %1758 = vmatprep.mubr.bf16.mxu0 0
        %1759 = vmatmul.mubr.bf16.gmra.mrb[0].mxu0 %v606
        %v1760 = vpop.f32.mrb[0].mxu0
        %v1761 = vadd.f32 %v1100, %v1760
        %v1762 = vpop.f32.mrb[0].mxu0
        %v1763 = vpop.f32.mrb[0].mxu0
        %v1764 = vadd.f32 %v1103, %v1763
        %v1765 = vpop.f32.mrb[0].mxu0
        %1766 = vmatprep.mubr.bf16.mxu0 0
        %1767 = vmatmul.mubr.bf16.gmra.mrb[0].mxu0 %v607
        %v1768 = vpop.f32.mrb[0].mxu0
        %v1769 = vadd.f32 %v1108, %v1768
        %v1770 = vpop.f32.mrb[0].mxu0
        %v1771 = vpop.f32.mrb[0].mxu0
        %v1772 = vadd.f32 %v1111, %v1771
        %v1773 = vpop.f32.mrb[0].mxu0
        %1774 = vmatprep.mubr.bf16.mxu0 0
        %1775 = vmatmul.mubr.bf16.gmra.mrb[0].mxu0 %v608
        %v1776 = vpop.f32.mrb[0].mxu0
        %v1777 = vadd.f32 %v1116, %v1776
        %v1778 = vpop.f32.mrb[0].mxu0
        %v1779 = vpop.f32.mrb[0].mxu0
        %v1780 = vadd.f32 %v1119, %v1779
        %v1781 = vpop.f32.mrb[0].mxu0
        %1782 = vmatprep.mubr.bf16.mxu0 0
        %1783 = vmatmul.mubr.bf16.gmra.mrb[0].mxu0 %v609
        %v1784 = vpop.f32.mrb[0].mxu0
        %v1785 = vadd.f32 %v1124, %v1784
        %v1786 = vpop.f32.mrb[0].mxu0
        %v1787 = vpop.f32.mrb[0].mxu0
        %v1788 = vadd.f32 %v1127, %v1787
        %v1789 = vpop.f32.mrb[0].mxu0
        %1790 = vmatprep.mubr.bf16.mxu0 0
        %1791 = vmatmul.mubr.bf16.gmra.mrb[0].mxu0 %v610
        %v1792 = vpop.f32.mrb[0].mxu0
        %v1793 = vadd.f32 %v1132, %v1792
        %v1794 = vpop.f32.mrb[0].mxu0
        %v1795 = vpop.f32.mrb[0].mxu0
        %v1796 = vadd.f32 %v1135, %v1795
        %v1797 = vpop.f32.mrb[0].mxu0
        %1798 = vmatprep.mubr.bf16.mxu0 0
        %1799 = vmatmul.mubr.bf16.gmra.mrb[0].mxu0 %v611
        %v1800 = vpop.f32.mrb[0].mxu0
        %v1801 = vadd.f32 %v1140, %v1800
        %v1802 = vpop.f32.mrb[0].mxu0
        %v1803 = vpop.f32.mrb[0].mxu0
        %v1804 = vadd.f32 %v1143, %v1803
        %v1805 = vpop.f32.mrb[0].mxu0
        %1806 = vmatprep.mubr.bf16.mxu0 0
        %1807 = vmatmul.mubr.bf16.gmra.mrb[0].mxu0 %v612
        %v1808 = vpop.f32.mrb[0].mxu0
        %v1809 = vadd.f32 %v1148, %v1808
        %v1810 = vpop.f32.mrb[0].mxu0
        %v1811 = vpop.f32.mrb[0].mxu0
        %v1812 = vadd.f32 %v1151, %v1811
        %v1813 = vpop.f32.mrb[0].mxu0
        %1814 = vdwg.mxu0
        %v1815 = vadd.f32 %v896, %v1254
        %v1816 = vadd.f32 %v897, %v1257
        %v1817 = vadd.f32 %v898, %v1262
        %v1818 = vadd.f32 %v899, %v1265
        %v1819 = vadd.f32 %v900, %v1270
        %v1820 = vadd.f32 %v901, %v1273
        %v1821 = vadd.f32 %v902, %v1278
        %v1822 = vadd.f32 %v903, %v1281
        %v1823 = vadd.f32 %v904, %v1286
        %v1824 = vadd.f32 %v905, %v1289
        %v1825 = vadd.f32 %v906, %v1294
        %v1826 = vadd.f32 %v907, %v1297
        %v1827 = vadd.f32 %v908, %v1302
        %v1828 = vadd.f32 %v909, %v1305
        %v1829 = vadd.f32 %v910, %v1310
        %v1830 = vadd.f32 %v911, %v1313
        %v1831 = vadd.f32 %v912, %v1318
        %v1832 = vadd.f32 %v913, %v1321
        %v1833 = vadd.f32 %v914, %v1326
        %v1834 = vadd.f32 %v915, %v1329
        %v1835 = vadd.f32 %v916, %v1334
        %v1836 = vadd.f32 %v917, %v1337
        %v1837 = vadd.f32 %v918, %v1342
        %v1838 = vadd.f32 %v919, %v1345
        %v1839 = vadd.f32 %v920, %v1350
        %v1840 = vadd.f32 %v921, %v1353
        %v1841 = vadd.f32 %v922, %v1358
        %v1842 = vadd.f32 %v923, %v1361
        %v1843 = vadd.f32 %v924, %v1366
        %v1844 = vadd.f32 %v925, %v1369
        %v1845 = vadd.f32 %v926, %v1374
        %v1846 = vadd.f32 %v927, %v1377
        %v1863 = vunpack.c.l.b16 %v880
        %v1864 = vunpack.c.l.b16 %v881
        %v1865 = vunpack.c.l.b16 %v882
        %v1866 = vunpack.c.l.b16 %v883
        %v1867 = vunpack.c.l.b16 %v884
        %v1868 = vunpack.c.l.b16 %v885
        %v1869 = vunpack.c.l.b16 %v886
        %v1870 = vunpack.c.l.b16 %v887
        %v1871 = vunpack.c.l.b16 %v888
        %v1872 = vunpack.c.l.b16 %v889
        %v1873 = vunpack.c.l.b16 %v890
        %v1874 = vunpack.c.l.b16 %v891
        %v1875 = vunpack.c.l.b16 %v892
        %v1876 = vunpack.c.l.b16 %v893
        %v1877 = vunpack.c.l.b16 %v894
        %v1878 = vunpack.c.l.b16 %v895
        %v1879 = vpack.c.b16 %v1864, %v1863
        %v1880 = vpack.c.b16 %v1866, %v1865
        %v1881 = vpack.c.b16 %v1868, %v1867
        %v1882 = vpack.c.b16 %v1870, %v1869
        %v1883 = vpack.c.b16 %v1872, %v1871
        %v1884 = vpack.c.b16 %v1874, %v1873
        %v1885 = vpack.c.b16 %v1876, %v1875
        %v1886 = vpack.c.b16 %v1878, %v1877
        %1895 = vmatprep.subr.bf16.mxu0 0
        %1896 = vmatpush1.bf16.msra.mxu0 %v1879
        %1897 = vmatprep.subr.bf16.mxu0 0
        %1898 = vmatpush1.bf16.msra.mxu0 %v1880
        %1899 = vmatprep.subr.bf16.mxu0 0
        %1900 = vmatpush1.bf16.msra.mxu0 %v1881
        %1901 = vmatprep.subr.bf16.mxu0 0
        %1902 = vmatpush1.bf16.msra.mxu0 %v1882
        %1903 = vmatprep.subr.bf16.mxu0 0
        %1904 = vmatpush1.bf16.msra.mxu0 %v1883
        %1905 = vmatprep.subr.bf16.mxu0 0
        %1906 = vmatpush1.bf16.msra.mxu0 %v1884
        %1907 = vmatprep.subr.bf16.mxu0 0
        %1908 = vmatpush1.bf16.msra.mxu0 %v1885
        %1909 = vmatprep.subr.bf16.mxu0 0
        %1910 = vmatpush1.bf16.msra.mxu0 %v1886
        %1911 = vmatprep.subr.bf16.mxu0 0
        %1912 = vmatpush1.bf16.msra.mxu0 0
        %1913 = vmatprep.subr.bf16.mxu0 0
        %1914 = vmatpush1.bf16.msra.mxu0 0
        %1915 = vmatprep.subr.bf16.mxu0 0
        %1916 = vmatpush1.bf16.msra.mxu0 0
        %1917 = vmatprep.subr.bf16.mxu0 0
        %1918 = vmatpush1.bf16.msra.mxu0 0
        %1919 = vmatprep.subr.bf16.mxu0 0
        %1920 = vmatpush1.bf16.msra.mxu0 0
        %1921 = vmatprep.subr.bf16.mxu0 0
        %1922 = vmatpush1.bf16.msra.mxu0 0
        %1923 = vmatprep.subr.bf16.mxu0 0
        %1924 = vmatpush1.bf16.msra.mxu0 0
        %1925 = vmatprep.subr.bf16.mxu0 0
        %1926 = vmatpush1.bf16.msra.mxu0 0
        %1927 = vmatprep.mubr.bf16.mxu0 0
        %1928 = vmatmul.mubr.bf16.gmra.mrb[0].mxu0 %v597
        %v1929 = vpop.f32.mrb[0].mxu0
        %v1930 = vadd.f32 %v1480, %v1929
        %v1931 = vpop.f32.mrb[0].mxu0
        %v1932 = vpop.f32.mrb[0].mxu0
        %v1933 = vadd.f32 %v1483, %v1932
        %v1934 = vpop.f32.mrb[0].mxu0
        %1935 = vmatprep.mubr.bf16.mxu0 0
        %1936 = vmatmul.mubr.bf16.gmra.mrb[0].mxu0 %v598
        %v1937 = vpop.f32.mrb[0].mxu0
        %v1938 = vadd.f32 %v1488, %v1937
        %v1939 = vpop.f32.mrb[0].mxu0
        %v1940 = vpop.f32.mrb[0].mxu0
        %v1941 = vadd.f32 %v1491, %v1940
        %v1942 = vpop.f32.mrb[0].mxu0
        %1943 = vmatprep.mubr.bf16.mxu0 0
        %1944 = vmatmul.mubr.bf16.gmra.mrb[0].mxu0 %v599
        %v1945 = vpop.f32.mrb[0].mxu0
        %v1946 = vadd.f32 %v1496, %v1945
        %v1947 = vpop.f32.mrb[0].mxu0
        %v1948 = vpop.f32.mrb[0].mxu0
        %v1949 = vadd.f32 %v1499, %v1948
        %v1950 = vpop.f32.mrb[0].mxu0
        %1951 = vmatprep.mubr.bf16.mxu0 0
        %1952 = vmatmul.mubr.bf16.gmra.mrb[0].mxu0 %v600
        %v1953 = vpop.f32.mrb[0].mxu0
        %v1954 = vadd.f32 %v1504, %v1953
        %v1955 = vpop.f32.mrb[0].mxu0
        %v1956 = vpop.f32.mrb[0].mxu0
        %v1957 = vadd.f32 %v1507, %v1956
        %v1958 = vpop.f32.mrb[0].mxu0
        %1959 = vmatprep.mubr.bf16.mxu0 0
        %1960 = vmatmul.mubr.bf16.gmra.mrb[0].mxu0 %v601
        %v1961 = vpop.f32.mrb[0].mxu0
        %v1962 = vadd.f32 %v1512, %v1961
        %v1963 = vpop.f32.mrb[0].mxu0
        %v1964 = vpop.f32.mrb[0].mxu0
        %v1965 = vadd.f32 %v1515, %v1964
        %v1966 = vpop.f32.mrb[0].mxu0
        %1967 = vmatprep.mubr.bf16.mxu0 0
        %1968 = vmatmul.mubr.bf16.gmra.mrb[0].mxu0 %v602
        %v1969 = vpop.f32.mrb[0].mxu0
        %v1970 = vadd.f32 %v1520, %v1969
        %v1971 = vpop.f32.mrb[0].mxu0
        %v1972 = vpop.f32.mrb[0].mxu0
        %v1973 = vadd.f32 %v1523, %v1972
        %v1974 = vpop.f32.mrb[0].mxu0
        %1975 = vmatprep.mubr.bf16.mxu0 0
        %1976 = vmatmul.mubr.bf16.gmra.mrb[0].mxu0 %v603
        %v1977 = vpop.f32.mrb[0].mxu0
        %v1978 = vadd.f32 %v1528, %v1977
        %v1979 = vpop.f32.mrb[0].mxu0
        %v1980 = vpop.f32.mrb[0].mxu0
        %v1981 = vadd.f32 %v1531, %v1980
        %v1982 = vpop.f32.mrb[0].mxu0
        %1983 = vmatprep.mubr.bf16.mxu0 0
        %1984 = vmatmul.mubr.bf16.gmra.mrb[0].mxu0 %v604
        %v1985 = vpop.f32.mrb[0].mxu0
        %v1986 = vadd.f32 %v1536, %v1985
        %v1987 = vpop.f32.mrb[0].mxu0
        %v1988 = vpop.f32.mrb[0].mxu0
        %v1989 = vadd.f32 %v1539, %v1988
        %v1990 = vpop.f32.mrb[0].mxu0
        %1991 = vmatprep.mubr.bf16.mxu0 0
        %1992 = vmatmul.mubr.bf16.gmra.mrb[0].mxu0 %v605
        %v1993 = vpop.f32.mrb[0].mxu0
        %v1994 = vadd.f32 %v1544, %v1993
        %v1995 = vpop.f32.mrb[0].mxu0
        %v1996 = vpop.f32.mrb[0].mxu0
        %v1997 = vadd.f32 %v1547, %v1996
        %v1998 = vpop.f32.mrb[0].mxu0
        %1999 = vmatprep.mubr.bf16.mxu0 0
        %2000 = vmatmul.mubr.bf16.gmra.mrb[0].mxu0 %v606
        %v2001 = vpop.f32.mrb[0].mxu0
        %v2002 = vadd.f32 %v1552, %v2001
        %v2003 = vpop.f32.mrb[0].mxu0
        %v2004 = vpop.f32.mrb[0].mxu0
        %v2005 = vadd.f32 %v1555, %v2004
        %v2006 = vpop.f32.mrb[0].mxu0
        %2007 = vmatprep.mubr.bf16.mxu0 0
        %2008 = vmatmul.mubr.bf16.gmra.mrb[0].mxu0 %v607
        %v2009 = vpop.f32.mrb[0].mxu0
        %v2010 = vadd.f32 %v1560, %v2009
        %v2011 = vpop.f32.mrb[0].mxu0
        %v2012 = vpop.f32.mrb[0].mxu0
        %v2013 = vadd.f32 %v1563, %v2012
        %v2014 = vpop.f32.mrb[0].mxu0
        %2015 = vmatprep.mubr.bf16.mxu0 0
        %2016 = vmatmul.mubr.bf16.gmra.mrb[0].mxu0 %v608
        %v2017 = vpop.f32.mrb[0].mxu0
        %v2018 = vadd.f32 %v1568, %v2017
        %v2019 = vpop.f32.mrb[0].mxu0
        %v2020 = vpop.f32.mrb[0].mxu0
        %v2021 = vadd.f32 %v1571, %v2020
        %v2022 = vpop.f32.mrb[0].mxu0
        %2023 = vmatprep.mubr.bf16.mxu0 0
        %2024 = vmatmul.mubr.bf16.gmra.mrb[0].mxu0 %v609
        %v2025 = vpop.f32.mrb[0].mxu0
        %v2026 = vadd.f32 %v1576, %v2025
        %v2027 = vpop.f32.mrb[0].mxu0
        %v2028 = vpop.f32.mrb[0].mxu0
        %v2029 = vadd.f32 %v1579, %v2028
        %v2030 = vpop.f32.mrb[0].mxu0
        %2031 = vmatprep.mubr.bf16.mxu0 0
        %2032 = vmatmul.mubr.bf16.gmra.mrb[0].mxu0 %v610
        %v2033 = vpop.f32.mrb[0].mxu0
        %v2034 = vadd.f32 %v1584, %v2033
        %v2035 = vpop.f32.mrb[0].mxu0
        %v2036 = vpop.f32.mrb[0].mxu0
        %v2037 = vadd.f32 %v1587, %v2036
        %v2038 = vpop.f32.mrb[0].mxu0
        %2039 = vmatprep.mubr.bf16.mxu0 0
        %2040 = vmatmul.mubr.bf16.gmra.mrb[0].mxu0 %v611
        %v2041 = vpop.f32.mrb[0].mxu0
        %v2042 = vadd.f32 %v1592, %v2041
        %v2043 = vpop.f32.mrb[0].mxu0
        %v2044 = vpop.f32.mrb[0].mxu0
        %v2045 = vadd.f32 %v1595, %v2044
        %v2046 = vpop.f32.mrb[0].mxu0
        %2047 = vmatprep.mubr.bf16.mxu0 0
        %2048 = vmatmul.mubr.bf16.gmra.mrb[0].mxu0 %v612
        %v2049 = vpop.f32.mrb[0].mxu0
        %v2050 = vadd.f32 %v1600, %v2049
        %v2051 = vpop.f32.mrb[0].mxu0
        %v2052 = vpop.f32.mrb[0].mxu0
        %v2053 = vadd.f32 %v1603, %v2052
        %v2054 = vpop.f32.mrb[0].mxu0
        %2055 = vdwg.mxu0
        %s2056 = scalar_lea.vmem [#allocation9], 384
        %v2057 = vld [vmem:[%s2056] sm:$0xf]
        %v2058 = vld [vmem:[%s2056 + $0x4] sm:$0xf]
        %v2059 = vld [vmem:[%s2056 + $0x8] sm:$0xf]
        %v2060 = vld [vmem:[%s2056 + $0xc] sm:$0xf]
        %v2061 = vld [vmem:[%s2056 + $0x10] sm:$0xf]
        %v2062 = vld [vmem:[%s2056 + $0x14] sm:$0xf]
        %v2063 = vld [vmem:[%s2056 + $0x18] sm:$0xf]
        %v2064 = vld [vmem:[%s2056 + $0x1c] sm:$0xf]
        %v2065 = vld [vmem:[%s2056 + $0x20] sm:$0xf]
        %v2066 = vld [vmem:[%s2056 + $0x24] sm:$0xf]
        %v2067 = vld [vmem:[%s2056 + $0x28] sm:$0xf]
        %v2068 = vld [vmem:[%s2056 + $0x2c] sm:$0xf]
        %v2069 = vld [vmem:[%s2056 + $0x30] sm:$0xf]
        %v2070 = vld [vmem:[%s2056 + $0x34] sm:$0xf]
        %v2071 = vld [vmem:[%s2056 + $0x38] sm:$0xf]
        %v2072 = vld [vmem:[%s2056 + $0x3c] sm:$0xf]
        %v2089 = vunpack.c.l.b16 %v2057
        %v2090 = vunpack.c.l.b16 %v2058
        %v2091 = vunpack.c.l.b16 %v2059
        %v2092 = vunpack.c.l.b16 %v2060
        %v2093 = vunpack.c.l.b16 %v2061
        %v2094 = vunpack.c.l.b16 %v2062
        %v2095 = vunpack.c.l.b16 %v2063
        %v2096 = vunpack.c.l.b16 %v2064
        %v2097 = vunpack.c.l.b16 %v2065
        %v2098 = vunpack.c.l.b16 %v2066
        %v2099 = vunpack.c.l.b16 %v2067
        %v2100 = vunpack.c.l.b16 %v2068
        %v2101 = vunpack.c.l.b16 %v2069
        %v2102 = vunpack.c.l.b16 %v2070
        %v2103 = vunpack.c.l.b16 %v2071
        %v2104 = vunpack.c.l.b16 %v2072
        %v2105 = vpack.c.b16 %v2090, %v2089
        %v2106 = vpack.c.b16 %v2092, %v2091
        %v2107 = vpack.c.b16 %v2094, %v2093
        %v2108 = vpack.c.b16 %v2096, %v2095
        %v2109 = vpack.c.b16 %v2098, %v2097
        %v2110 = vpack.c.b16 %v2100, %v2099
        %v2111 = vpack.c.b16 %v2102, %v2101
        %v2112 = vpack.c.b16 %v2104, %v2103
        %2121 = vmatprep.subr.bf16.mxu0 0
        %2122 = vmatpush1.bf16.msra.mxu0 %v2105
        %2123 = vmatprep.subr.bf16.mxu0 0
        %2124 = vmatpush1.bf16.msra.mxu0 %v2106
        %2125 = vmatprep.subr.bf16.mxu0 0
        %2126 = vmatpush1.bf16.msra.mxu0 %v2107
        %2127 = vmatprep.subr.bf16.mxu0 0
        %2128 = vmatpush1.bf16.msra.mxu0 %v2108
        %2129 = vmatprep.subr.bf16.mxu0 0
        %2130 = vmatpush1.bf16.msra.mxu0 %v2109
        %2131 = vmatprep.subr.bf16.mxu0 0
        %2132 = vmatpush1.bf16.msra.mxu0 %v2110
        %2133 = vmatprep.subr.bf16.mxu0 0
        %2134 = vmatpush1.bf16.msra.mxu0 %v2111
        %2135 = vmatprep.subr.bf16.mxu0 0
        %2136 = vmatpush1.bf16.msra.mxu0 %v2112
        %2137 = vmatprep.subr.bf16.mxu0 0
        %2138 = vmatpush1.bf16.msra.mxu0 0
        %2139 = vmatprep.subr.bf16.mxu0 0
        %2140 = vmatpush1.bf16.msra.mxu0 0
        %2141 = vmatprep.subr.bf16.mxu0 0
        %2142 = vmatpush1.bf16.msra.mxu0 0
        %2143 = vmatprep.subr.bf16.mxu0 0
        %2144 = vmatpush1.bf16.msra.mxu0 0
        %2145 = vmatprep.subr.bf16.mxu0 0
        %2146 = vmatpush1.bf16.msra.mxu0 0
        %2147 = vmatprep.subr.bf16.mxu0 0
        %2148 = vmatpush1.bf16.msra.mxu0 0
        %2149 = vmatprep.subr.bf16.mxu0 0
        %2150 = vmatpush1.bf16.msra.mxu0 0
        %2151 = vmatprep.subr.bf16.mxu0 0
        %2152 = vmatpush1.bf16.msra.mxu0 0
        %2153 = vmatprep.mubr.bf16.mxu0 0
        %2154 = vmatmul.mubr.bf16.gmra.mrb[0].mxu0 %v614
        %v2155 = vpop.f32.mrb[0].mxu0
        %v2156 = vadd.f32 0.0, %v2155
        %v2157 = vpop.f32.mrb[0].mxu0
        %v2158 = vpop.f32.mrb[0].mxu0
        %v2159 = vadd.f32 0.0, %v2158
        %v2160 = vpop.f32.mrb[0].mxu0
        %2161 = vmatprep.mubr.bf16.mxu0 0
        %2162 = vmatmul.mubr.bf16.gmra.mrb[0].mxu0 %v615
        %v2163 = vpop.f32.mrb[0].mxu0
        %v2164 = vadd.f32 0.0, %v2163
        %v2165 = vpop.f32.mrb[0].mxu0
        %v2166 = vpop.f32.mrb[0].mxu0
        %v2167 = vadd.f32 0.0, %v2166
        %v2168 = vpop.f32.mrb[0].mxu0
        %2169 = vmatprep.mubr.bf16.mxu0 0
        %2170 = vmatmul.mubr.bf16.gmra.mrb[0].mxu0 %v616
        %v2171 = vpop.f32.mrb[0].mxu0
        %v2172 = vadd.f32 0.0, %v2171
        %v2173 = vpop.f32.mrb[0].mxu0
        %v2174 = vpop.f32.mrb[0].mxu0
        %v2175 = vadd.f32 0.0, %v2174
        %v2176 = vpop.f32.mrb[0].mxu0
        %2177 = vmatprep.mubr.bf16.mxu0 0
        %2178 = vmatmul.mubr.bf16.gmra.mrb[0].mxu0 %v617
        %v2179 = vpop.f32.mrb[0].mxu0
        %v2180 = vadd.f32 0.0, %v2179
        %v2181 = vpop.f32.mrb[0].mxu0
        %v2182 = vpop.f32.mrb[0].mxu0
        %v2183 = vadd.f32 0.0, %v2182
        %v2184 = vpop.f32.mrb[0].mxu0
        %2185 = vmatprep.mubr.bf16.mxu0 0
        %2186 = vmatmul.mubr.bf16.gmra.mrb[0].mxu0 %v618
        %v2187 = vpop.f32.mrb[0].mxu0
        %v2188 = vadd.f32 0.0, %v2187
        %v2189 = vpop.f32.mrb[0].mxu0
        %v2190 = vpop.f32.mrb[0].mxu0
        %v2191 = vadd.f32 0.0, %v2190
        %v2192 = vpop.f32.mrb[0].mxu0
        %2193 = vmatprep.mubr.bf16.mxu0 0
        %2194 = vmatmul.mubr.bf16.gmra.mrb[0].mxu0 %v619
        %v2195 = vpop.f32.mrb[0].mxu0
        %v2196 = vadd.f32 0.0, %v2195
        %v2197 = vpop.f32.mrb[0].mxu0
        %v2198 = vpop.f32.mrb[0].mxu0
        %v2199 = vadd.f32 0.0, %v2198
        %v2200 = vpop.f32.mrb[0].mxu0
        %2201 = vmatprep.mubr.bf16.mxu0 0
        %2202 = vmatmul.mubr.bf16.gmra.mrb[0].mxu0 %v620
        %v2203 = vpop.f32.mrb[0].mxu0
        %v2204 = vadd.f32 0.0, %v2203
        %v2205 = vpop.f32.mrb[0].mxu0
        %v2206 = vpop.f32.mrb[0].mxu0
        %v2207 = vadd.f32 0.0, %v2206
        %v2208 = vpop.f32.mrb[0].mxu0
        %2209 = vmatprep.mubr.bf16.mxu0 0
        %2210 = vmatmul.mubr.bf16.gmra.mrb[0].mxu0 %v621
        %v2211 = vpop.f32.mrb[0].mxu0
        %v2212 = vadd.f32 0.0, %v2211
        %v2213 = vpop.f32.mrb[0].mxu0
        %v2214 = vpop.f32.mrb[0].mxu0
        %v2215 = vadd.f32 0.0, %v2214
        %v2216 = vpop.f32.mrb[0].mxu0
        %2217 = vmatprep.mubr.bf16.mxu0 0
        %2218 = vmatmul.mubr.bf16.gmra.mrb[0].mxu0 %v622
        %v2219 = vpop.f32.mrb[0].mxu0
        %v2220 = vadd.f32 0.0, %v2219
        %v2221 = vpop.f32.mrb[0].mxu0
        %v2222 = vpop.f32.mrb[0].mxu0
        %v2223 = vadd.f32 0.0, %v2222
        %v2224 = vpop.f32.mrb[0].mxu0
        %2225 = vmatprep.mubr.bf16.mxu0 0
        %2226 = vmatmul.mubr.bf16.gmra.mrb[0].mxu0 %v623
        %v2227 = vpop.f32.mrb[0].mxu0
        %v2228 = vadd.f32 0.0, %v2227
        %v2229 = vpop.f32.mrb[0].mxu0
        %v2230 = vpop.f32.mrb[0].mxu0
        %v2231 = vadd.f32 0.0, %v2230
        %v2232 = vpop.f32.mrb[0].mxu0
        %2233 = vmatprep.mubr.bf16.mxu0 0
        %2234 = vmatmul.mubr.bf16.gmra.mrb[0].mxu0 %v624
        %v2235 = vpop.f32.mrb[0].mxu0
        %v2236 = vadd.f32 0.0, %v2235
        %v2237 = vpop.f32.mrb[0].mxu0
        %v2238 = vpop.f32.mrb[0].mxu0
        %v2239 = vadd.f32 0.0, %v2238
        %v2240 = vpop.f32.mrb[0].mxu0
        %2241 = vmatprep.mubr.bf16.mxu0 0
        %2242 = vmatmul.mubr.bf16.gmra.mrb[0].mxu0 %v625
        %v2243 = vpop.f32.mrb[0].mxu0
        %v2244 = vadd.f32 0.0, %v2243
        %v2245 = vpop.f32.mrb[0].mxu0
        %v2246 = vpop.f32.mrb[0].mxu0
        %v2247 = vadd.f32 0.0, %v2246
        %v2248 = vpop.f32.mrb[0].mxu0
        %2249 = vmatprep.mubr.bf16.mxu0 0
        %2250 = vmatmul.mubr.bf16.gmra.mrb[0].mxu0 %v626
        %v2251 = vpop.f32.mrb[0].mxu0
        %v2252 = vadd.f32 0.0, %v2251
        %v2253 = vpop.f32.mrb[0].mxu0
        %v2254 = vpop.f32.mrb[0].mxu0
        %v2255 = vadd.f32 0.0, %v2254
        %v2256 = vpop.f32.mrb[0].mxu0
        %2257 = vmatprep.mubr.bf16.mxu0 0
        %2258 = vmatmul.mubr.bf16.gmra.mrb[0].mxu0 %v627
        %v2259 = vpop.f32.mrb[0].mxu0
        %v2260 = vadd.f32 0.0, %v2259
        %v2261 = vpop.f32.mrb[0].mxu0
        %v2262 = vpop.f32.mrb[0].mxu0
        %v2263 = vadd.f32 0.0, %v2262
        %v2264 = vpop.f32.mrb[0].mxu0
        %2265 = vmatprep.mubr.bf16.mxu0 0
        %2266 = vmatmul.mubr.bf16.gmra.mrb[0].mxu0 %v628
        %v2267 = vpop.f32.mrb[0].mxu0
        %v2268 = vadd.f32 0.0, %v2267
        %v2269 = vpop.f32.mrb[0].mxu0
        %v2270 = vpop.f32.mrb[0].mxu0
        %v2271 = vadd.f32 0.0, %v2270
        %v2272 = vpop.f32.mrb[0].mxu0
        %2273 = vmatprep.mubr.bf16.mxu0 0
        %2274 = vmatmul.mubr.bf16.gmra.mrb[0].mxu0 %v629
        %v2275 = vpop.f32.mrb[0].mxu0
        %v2276 = vadd.f32 0.0, %v2275
        %v2277 = vpop.f32.mrb[0].mxu0
        %v2278 = vpop.f32.mrb[0].mxu0
        %v2279 = vadd.f32 0.0, %v2278
        %v2280 = vpop.f32.mrb[0].mxu0
        %2281 = vdwg.mxu0
        %s2282 = scalar_lea.vmem [#allocation9], 448
        %v2283 = vld [vmem:[%s2282] sm:$0xf]
        %v2284 = vld [vmem:[%s2282 + $0x4] sm:$0xf]
        %v2285 = vld [vmem:[%s2282 + $0x8] sm:$0xf]
        %v2286 = vld [vmem:[%s2282 + $0xc] sm:$0xf]
        %v2287 = vld [vmem:[%s2282 + $0x10] sm:$0xf]
        %v2288 = vld [vmem:[%s2282 + $0x14] sm:$0xf]
        %v2289 = vld [vmem:[%s2282 + $0x18] sm:$0xf]
        %v2290 = vld [vmem:[%s2282 + $0x1c] sm:$0xf]
        %v2291 = vld [vmem:[%s2282 + $0x20] sm:$0xf]
        %v2292 = vld [vmem:[%s2282 + $0x24] sm:$0xf]
        %v2293 = vld [vmem:[%s2282 + $0x28] sm:$0xf]
        %v2294 = vld [vmem:[%s2282 + $0x2c] sm:$0xf]
        %v2295 = vld [vmem:[%s2282 + $0x30] sm:$0xf]
        %v2296 = vld [vmem:[%s2282 + $0x34] sm:$0xf]
        %v2297 = vld [vmem:[%s2282 + $0x38] sm:$0xf]
        %v2298 = vld [vmem:[%s2282 + $0x3c] sm:$0xf]
        %v2315 = vunpack.c.l.b16 %v2283
        %v2316 = vunpack.c.l.b16 %v2284
        %v2317 = vunpack.c.l.b16 %v2285
        %v2318 = vunpack.c.l.b16 %v2286
        %v2319 = vunpack.c.l.b16 %v2287
        %v2320 = vunpack.c.l.b16 %v2288
        %v2321 = vunpack.c.l.b16 %v2289
        %v2322 = vunpack.c.l.b16 %v2290
        %v2323 = vunpack.c.l.b16 %v2291
        %v2324 = vunpack.c.l.b16 %v2292
        %v2325 = vunpack.c.l.b16 %v2293
        %v2326 = vunpack.c.l.b16 %v2294
        %v2327 = vunpack.c.l.b16 %v2295
        %v2328 = vunpack.c.l.b16 %v2296
        %v2329 = vunpack.c.l.b16 %v2297
        %v2330 = vunpack.c.l.b16 %v2298
        %v2331 = vpack.c.b16 %v2316, %v2315
        %v2332 = vpack.c.b16 %v2318, %v2317
        %v2333 = vpack.c.b16 %v2320, %v2319
        %v2334 = vpack.c.b16 %v2322, %v2321
        %v2335 = vpack.c.b16 %v2324, %v2323
        %v2336 = vpack.c.b16 %v2326, %v2325
        %v2337 = vpack.c.b16 %v2328, %v2327
        %v2338 = vpack.c.b16 %v2330, %v2329
        %2347 = vmatprep.subr.bf16.mxu0 0
        %2348 = vmatpush1.bf16.msra.mxu0 %v2331
        %2349 = vmatprep.subr.bf16.mxu0 0
        %2350 = vmatpush1.bf16.msra.mxu0 %v2332
        %2351 = vmatprep.subr.bf16.mxu0 0
        %2352 = vmatpush1.bf16.msra.mxu0 %v2333
        %2353 = vmatprep.subr.bf16.mxu0 0
        %2354 = vmatpush1.bf16.msra.mxu0 %v2334
        %2355 = vmatprep.subr.bf16.mxu0 0
        %2356 = vmatpush1.bf16.msra.mxu0 %v2335
        %2357 = vmatprep.subr.bf16.mxu0 0
        %2358 = vmatpush1.bf16.msra.mxu0 %v2336
        %2359 = vmatprep.subr.bf16.mxu0 0
        %2360 = vmatpush1.bf16.msra.mxu0 %v2337
        %2361 = vmatprep.subr.bf16.mxu0 0
        %2362 = vmatpush1.bf16.msra.mxu0 %v2338
        %2363 = vmatprep.subr.bf16.mxu0 0
        %2364 = vmatpush1.bf16.msra.mxu0 0
        %2365 = vmatprep.subr.bf16.mxu0 0
        %2366 = vmatpush1.bf16.msra.mxu0 0
        %2367 = vmatprep.subr.bf16.mxu0 0
        %2368 = vmatpush1.bf16.msra.mxu0 0
        %2369 = vmatprep.subr.bf16.mxu0 0
        %2370 = vmatpush1.bf16.msra.mxu0 0
        %2371 = vmatprep.subr.bf16.mxu0 0
        %2372 = vmatpush1.bf16.msra.mxu0 0
        %2373 = vmatprep.subr.bf16.mxu0 0
        %2374 = vmatpush1.bf16.msra.mxu0 0
        %2375 = vmatprep.subr.bf16.mxu0 0
        %2376 = vmatpush1.bf16.msra.mxu0 0
        %2377 = vmatprep.subr.bf16.mxu0 0
        %2378 = vmatpush1.bf16.msra.mxu0 0
        %2379 = vmatprep.mubr.bf16.mxu0 0
        %2380 = vmatmul.mubr.bf16.gmra.mrb[0].mxu0 %v614
        %v2381 = vpop.f32.mrb[0].mxu0
        %v2382 = vadd.f32 0.0, %v2381
        %v2383 = vpop.f32.mrb[0].mxu0
        %v2384 = vpop.f32.mrb[0].mxu0
        %v2385 = vadd.f32 0.0, %v2384
        %v2386 = vpop.f32.mrb[0].mxu0
        %2387 = vmatprep.mubr.bf16.mxu0 0
        %2388 = vmatmul.mubr.bf16.gmra.mrb[0].mxu0 %v615
        %v2389 = vpop.f32.mrb[0].mxu0
        %v2390 = vadd.f32 0.0, %v2389
        %v2391 = vpop.f32.mrb[0].mxu0
        %v2392 = vpop.f32.mrb[0].mxu0
        %v2393 = vadd.f32 0.0, %v2392
        %v2394 = vpop.f32.mrb[0].mxu0
        %2395 = vmatprep.mubr.bf16.mxu0 0
        %2396 = vmatmul.mubr.bf16.gmra.mrb[0].mxu0 %v616
        %v2397 = vpop.f32.mrb[0].mxu0
        %v2398 = vadd.f32 0.0, %v2397
        %v2399 = vpop.f32.mrb[0].mxu0
        %v2400 = vpop.f32.mrb[0].mxu0
        %v2401 = vadd.f32 0.0, %v2400
        %v2402 = vpop.f32.mrb[0].mxu0
        %2403 = vmatprep.mubr.bf16.mxu0 0
        %2404 = vmatmul.mubr.bf16.gmra.mrb[0].mxu0 %v617
        %v2405 = vpop.f32.mrb[0].mxu0
        %v2406 = vadd.f32 0.0, %v2405
        %v2407 = vpop.f32.mrb[0].mxu0
        %v2408 = vpop.f32.mrb[0].mxu0
        %v2409 = vadd.f32 0.0, %v2408
        %v2410 = vpop.f32.mrb[0].mxu0
        %2411 = vmatprep.mubr.bf16.mxu0 0
        %2412 = vmatmul.mubr.bf16.gmra.mrb[0].mxu0 %v618
        %v2413 = vpop.f32.mrb[0].mxu0
        %v2414 = vadd.f32 0.0, %v2413
        %v2415 = vpop.f32.mrb[0].mxu0
        %v2416 = vpop.f32.mrb[0].mxu0
        %v2417 = vadd.f32 0.0, %v2416
        %v2418 = vpop.f32.mrb[0].mxu0
        %2419 = vmatprep.mubr.bf16.mxu0 0
        %2420 = vmatmul.mubr.bf16.gmra.mrb[0].mxu0 %v619
        %v2421 = vpop.f32.mrb[0].mxu0
        %v2422 = vadd.f32 0.0, %v2421
        %v2423 = vpop.f32.mrb[0].mxu0
        %v2424 = vpop.f32.mrb[0].mxu0
        %v2425 = vadd.f32 0.0, %v2424
        %v2426 = vpop.f32.mrb[0].mxu0
        %2427 = vmatprep.mubr.bf16.mxu0 0
        %2428 = vmatmul.mubr.bf16.gmra.mrb[0].mxu0 %v620
        %v2429 = vpop.f32.mrb[0].mxu0
        %v2430 = vadd.f32 0.0, %v2429
        %v2431 = vpop.f32.mrb[0].mxu0
        %v2432 = vpop.f32.mrb[0].mxu0
        %v2433 = vadd.f32 0.0, %v2432
        %v2434 = vpop.f32.mrb[0].mxu0
        %2435 = vmatprep.mubr.bf16.mxu0 0
        %2436 = vmatmul.mubr.bf16.gmra.mrb[0].mxu0 %v621
        %v2437 = vpop.f32.mrb[0].mxu0
        %v2438 = vadd.f32 0.0, %v2437
        %v2439 = vpop.f32.mrb[0].mxu0
        %v2440 = vpop.f32.mrb[0].mxu0
        %v2441 = vadd.f32 0.0, %v2440
        %v2442 = vpop.f32.mrb[0].mxu0
        %2443 = vmatprep.mubr.bf16.mxu0 0
        %2444 = vmatmul.mubr.bf16.gmra.mrb[0].mxu0 %v622
        %v2445 = vpop.f32.mrb[0].mxu0
        %v2446 = vadd.f32 0.0, %v2445
        %v2447 = vpop.f32.mrb[0].mxu0
        %v2448 = vpop.f32.mrb[0].mxu0
        %v2449 = vadd.f32 0.0, %v2448
        %v2450 = vpop.f32.mrb[0].mxu0
        %2451 = vmatprep.mubr.bf16.mxu0 0
        %2452 = vmatmul.mubr.bf16.gmra.mrb[0].mxu0 %v623
        %v2453 = vpop.f32.mrb[0].mxu0
        %v2454 = vadd.f32 0.0, %v2453
        %v2455 = vpop.f32.mrb[0].mxu0
        %v2456 = vpop.f32.mrb[0].mxu0
        %v2457 = vadd.f32 0.0, %v2456
        %v2458 = vpop.f32.mrb[0].mxu0
        %2459 = vmatprep.mubr.bf16.mxu0 0
        %2460 = vmatmul.mubr.bf16.gmra.mrb[0].mxu0 %v624
        %v2461 = vpop.f32.mrb[0].mxu0
        %v2462 = vadd.f32 0.0, %v2461
        %v2463 = vpop.f32.mrb[0].mxu0
        %v2464 = vpop.f32.mrb[0].mxu0
        %v2465 = vadd.f32 0.0, %v2464
        %v2466 = vpop.f32.mrb[0].mxu0
        %2467 = vmatprep.mubr.bf16.mxu0 0
        %2468 = vmatmul.mubr.bf16.gmra.mrb[0].mxu0 %v625
        %v2469 = vpop.f32.mrb[0].mxu0
        %v2470 = vadd.f32 0.0, %v2469
        %v2471 = vpop.f32.mrb[0].mxu0
        %v2472 = vpop.f32.mrb[0].mxu0
        %v2473 = vadd.f32 0.0, %v2472
        %v2474 = vpop.f32.mrb[0].mxu0
        %2475 = vmatprep.mubr.bf16.mxu0 0
        %2476 = vmatmul.mubr.bf16.gmra.mrb[0].mxu0 %v626
        %v2477 = vpop.f32.mrb[0].mxu0
        %v2478 = vadd.f32 0.0, %v2477
        %v2479 = vpop.f32.mrb[0].mxu0
        %v2480 = vpop.f32.mrb[0].mxu0
        %v2481 = vadd.f32 0.0, %v2480
        %v2482 = vpop.f32.mrb[0].mxu0
        %2483 = vmatprep.mubr.bf16.mxu0 0
        %2484 = vmatmul.mubr.bf16.gmra.mrb[0].mxu0 %v627
        %v2485 = vpop.f32.mrb[0].mxu0
        %v2486 = vadd.f32 0.0, %v2485
        %v2487 = vpop.f32.mrb[0].mxu0
        %v2488 = vpop.f32.mrb[0].mxu0
        %v2489 = vadd.f32 0.0, %v2488
        %v2490 = vpop.f32.mrb[0].mxu0
        %2491 = vmatprep.mubr.bf16.mxu0 0
        %2492 = vmatmul.mubr.bf16.gmra.mrb[0].mxu0 %v628
        %v2493 = vpop.f32.mrb[0].mxu0
        %v2494 = vadd.f32 0.0, %v2493
        %v2495 = vpop.f32.mrb[0].mxu0
        %v2496 = vpop.f32.mrb[0].mxu0
        %v2497 = vadd.f32 0.0, %v2496
        %v2498 = vpop.f32.mrb[0].mxu0
        %2499 = vmatprep.mubr.bf16.mxu0 0
        %2500 = vmatmul.mubr.bf16.gmra.mrb[0].mxu0 %v629
        %v2501 = vpop.f32.mrb[0].mxu0
        %v2502 = vadd.f32 0.0, %v2501
        %v2503 = vpop.f32.mrb[0].mxu0
        %v2504 = vpop.f32.mrb[0].mxu0
        %v2505 = vadd.f32 0.0, %v2504
        %v2506 = vpop.f32.mrb[0].mxu0
        %2507 = vdwg.mxu0
        %s2508 = scalar_lea.vmem [#allocation9], 512
        %v2509 = vld [vmem:[%s2508] sm:$0xf]
        %v2510 = vld [vmem:[%s2508 + $0x4] sm:$0xf]
        %v2511 = vld [vmem:[%s2508 + $0x8] sm:$0xf]
        %v2512 = vld [vmem:[%s2508 + $0xc] sm:$0xf]
        %v2513 = vld [vmem:[%s2508 + $0x10] sm:$0xf]
        %v2514 = vld [vmem:[%s2508 + $0x14] sm:$0xf]
        %v2515 = vld [vmem:[%s2508 + $0x18] sm:$0xf]
        %v2516 = vld [vmem:[%s2508 + $0x1c] sm:$0xf]
        %v2517 = vld [vmem:[%s2508 + $0x20] sm:$0xf]
        %v2518 = vld [vmem:[%s2508 + $0x24] sm:$0xf]
        %v2519 = vld [vmem:[%s2508 + $0x28] sm:$0xf]
        %v2520 = vld [vmem:[%s2508 + $0x2c] sm:$0xf]
        %v2521 = vld [vmem:[%s2508 + $0x30] sm:$0xf]
        %v2522 = vld [vmem:[%s2508 + $0x34] sm:$0xf]
        %v2523 = vld [vmem:[%s2508 + $0x38] sm:$0xf]
        %v2524 = vld [vmem:[%s2508 + $0x3c] sm:$0xf]
        %v2541 = vunpack.c.l.b16 %v2509
        %v2542 = vunpack.c.l.b16 %v2510
        %v2543 = vunpack.c.l.b16 %v2511
        %v2544 = vunpack.c.l.b16 %v2512
        %v2545 = vunpack.c.l.b16 %v2513
        %v2546 = vunpack.c.l.b16 %v2514
        %v2547 = vunpack.c.l.b16 %v2515
        %v2548 = vunpack.c.l.b16 %v2516
        %v2549 = vunpack.c.l.b16 %v2517
        %v2550 = vunpack.c.l.b16 %v2518
        %v2551 = vunpack.c.l.b16 %v2519
        %v2552 = vunpack.c.l.b16 %v2520
        %v2553 = vunpack.c.l.b16 %v2521
        %v2554 = vunpack.c.l.b16 %v2522
        %v2555 = vunpack.c.l.b16 %v2523
        %v2556 = vunpack.c.l.b16 %v2524
        %v2557 = vpack.c.b16 %v2542, %v2541
        %v2558 = vpack.c.b16 %v2544, %v2543
        %v2559 = vpack.c.b16 %v2546, %v2545
        %v2560 = vpack.c.b16 %v2548, %v2547
        %v2561 = vpack.c.b16 %v2550, %v2549
        %v2562 = vpack.c.b16 %v2552, %v2551
        %v2563 = vpack.c.b16 %v2554, %v2553
        %v2564 = vpack.c.b16 %v2556, %v2555
        %2573 = vmatprep.subr.bf16.mxu0 0
        %2574 = vmatpush1.bf16.msra.mxu0 %v2557
        %2575 = vmatprep.subr.bf16.mxu0 0
        %2576 = vmatpush1.bf16.msra.mxu0 %v2558
        %2577 = vmatprep.subr.bf16.mxu0 0
        %2578 = vmatpush1.bf16.msra.mxu0 %v2559
        %2579 = vmatprep.subr.bf16.mxu0 0
        %2580 = vmatpush1.bf16.msra.mxu0 %v2560
        %2581 = vmatprep.subr.bf16.mxu0 0
        %2582 = vmatpush1.bf16.msra.mxu0 %v2561
        %2583 = vmatprep.subr.bf16.mxu0 0
        %2584 = vmatpush1.bf16.msra.mxu0 %v2562
        %2585 = vmatprep.subr.bf16.mxu0 0
        %2586 = vmatpush1.bf16.msra.mxu0 %v2563
        %2587 = vmatprep.subr.bf16.mxu0 0
        %2588 = vmatpush1.bf16.msra.mxu0 %v2564
        %2589 = vmatprep.subr.bf16.mxu0 0
        %2590 = vmatpush1.bf16.msra.mxu0 0
        %2591 = vmatprep.subr.bf16.mxu0 0
        %2592 = vmatpush1.bf16.msra.mxu0 0
        %2593 = vmatprep.subr.bf16.mxu0 0
        %2594 = vmatpush1.bf16.msra.mxu0 0
        %2595 = vmatprep.subr.bf16.mxu0 0
        %2596 = vmatpush1.bf16.msra.mxu0 0
        %2597 = vmatprep.subr.bf16.mxu0 0
        %2598 = vmatpush1.bf16.msra.mxu0 0
        %2599 = vmatprep.subr.bf16.mxu0 0
        %2600 = vmatpush1.bf16.msra.mxu0 0
        %2601 = vmatprep.subr.bf16.mxu0 0
        %2602 = vmatpush1.bf16.msra.mxu0 0
        %2603 = vmatprep.subr.bf16.mxu0 0
        %2604 = vmatpush1.bf16.msra.mxu0 0
        %2605 = vmatprep.mubr.bf16.mxu0 0
        %2606 = vmatmul.mubr.bf16.gmra.mrb[0].mxu0 %v614
        %v2607 = vpop.f32.mrb[0].mxu0
        %v2608 = vadd.f32 0.0, %v2607
        %v2609 = vpop.f32.mrb[0].mxu0
        %v2610 = vpop.f32.mrb[0].mxu0
        %v2611 = vadd.f32 0.0, %v2610
        %v2612 = vpop.f32.mrb[0].mxu0
        %2613 = vmatprep.mubr.bf16.mxu0 0
        %2614 = vmatmul.mubr.bf16.gmra.mrb[0].mxu0 %v615
        %v2615 = vpop.f32.mrb[0].mxu0
        %v2616 = vadd.f32 0.0, %v2615
        %v2617 = vpop.f32.mrb[0].mxu0
        %v2618 = vpop.f32.mrb[0].mxu0
        %v2619 = vadd.f32 0.0, %v2618
        %v2620 = vpop.f32.mrb[0].mxu0
        %2621 = vmatprep.mubr.bf16.mxu0 0
        %2622 = vmatmul.mubr.bf16.gmra.mrb[0].mxu0 %v616
        %v2623 = vpop.f32.mrb[0].mxu0
        %v2624 = vadd.f32 0.0, %v2623
        %v2625 = vpop.f32.mrb[0].mxu0
        %v2626 = vpop.f32.mrb[0].mxu0
        %v2627 = vadd.f32 0.0, %v2626
        %v2628 = vpop.f32.mrb[0].mxu0
        %2629 = vmatprep.mubr.bf16.mxu0 0
        %2630 = vmatmul.mubr.bf16.gmra.mrb[0].mxu0 %v617
        %v2631 = vpop.f32.mrb[0].mxu0
        %v2632 = vadd.f32 0.0, %v2631
        %v2633 = vpop.f32.mrb[0].mxu0
        %v2634 = vpop.f32.mrb[0].mxu0
        %v2635 = vadd.f32 0.0, %v2634
        %v2636 = vpop.f32.mrb[0].mxu0
        %2637 = vmatprep.mubr.bf16.mxu0 0
        %2638 = vmatmul.mubr.bf16.gmra.mrb[0].mxu0 %v618
        %v2639 = vpop.f32.mrb[0].mxu0
        %v2640 = vadd.f32 0.0, %v2639
        %v2641 = vpop.f32.mrb[0].mxu0
        %v2642 = vpop.f32.mrb[0].mxu0
        %v2643 = vadd.f32 0.0, %v2642
        %v2644 = vpop.f32.mrb[0].mxu0
        %2645 = vmatprep.mubr.bf16.mxu0 0
        %2646 = vmatmul.mubr.bf16.gmra.mrb[0].mxu0 %v619
        %v2647 = vpop.f32.mrb[0].mxu0
        %v2648 = vadd.f32 0.0, %v2647
        %v2649 = vpop.f32.mrb[0].mxu0
        %v2650 = vpop.f32.mrb[0].mxu0
        %v2651 = vadd.f32 0.0, %v2650
        %v2652 = vpop.f32.mrb[0].mxu0
        %2653 = vmatprep.mubr.bf16.mxu0 0
        %2654 = vmatmul.mubr.bf16.gmra.mrb[0].mxu0 %v620
        %v2655 = vpop.f32.mrb[0].mxu0
        %v2656 = vadd.f32 0.0, %v2655
        %v2657 = vpop.f32.mrb[0].mxu0
        %v2658 = vpop.f32.mrb[0].mxu0
        %v2659 = vadd.f32 0.0, %v2658
        %v2660 = vpop.f32.mrb[0].mxu0
        %2661 = vmatprep.mubr.bf16.mxu0 0
        %2662 = vmatmul.mubr.bf16.gmra.mrb[0].mxu0 %v621
        %v2663 = vpop.f32.mrb[0].mxu0
        %v2664 = vadd.f32 0.0, %v2663
        %v2665 = vpop.f32.mrb[0].mxu0
        %v2666 = vpop.f32.mrb[0].mxu0
        %v2667 = vadd.f32 0.0, %v2666
        %v2668 = vpop.f32.mrb[0].mxu0
        %2669 = vmatprep.mubr.bf16.mxu0 0
        %2670 = vmatmul.mubr.bf16.gmra.mrb[0].mxu0 %v622
        %v2671 = vpop.f32.mrb[0].mxu0
        %v2672 = vadd.f32 0.0, %v2671
        %v2673 = vpop.f32.mrb[0].mxu0
        %v2674 = vpop.f32.mrb[0].mxu0
        %v2675 = vadd.f32 0.0, %v2674
        %v2676 = vpop.f32.mrb[0].mxu0
        %2677 = vmatprep.mubr.bf16.mxu0 0
        %2678 = vmatmul.mubr.bf16.gmra.mrb[0].mxu0 %v623
        %v2679 = vpop.f32.mrb[0].mxu0
        %v2680 = vadd.f32 0.0, %v2679
        %v2681 = vpop.f32.mrb[0].mxu0
        %v2682 = vpop.f32.mrb[0].mxu0
        %v2683 = vadd.f32 0.0, %v2682
        %v2684 = vpop.f32.mrb[0].mxu0
        %2685 = vmatprep.mubr.bf16.mxu0 0
        %2686 = vmatmul.mubr.bf16.gmra.mrb[0].mxu0 %v624
        %v2687 = vpop.f32.mrb[0].mxu0
        %v2688 = vadd.f32 0.0, %v2687
        %v2689 = vpop.f32.mrb[0].mxu0
        %v2690 = vpop.f32.mrb[0].mxu0
        %v2691 = vadd.f32 0.0, %v2690
        %v2692 = vpop.f32.mrb[0].mxu0
        %2693 = vmatprep.mubr.bf16.mxu0 0
        %2694 = vmatmul.mubr.bf16.gmra.mrb[0].mxu0 %v625
        %v2695 = vpop.f32.mrb[0].mxu0
        %v2696 = vadd.f32 0.0, %v2695
        %v2697 = vpop.f32.mrb[0].mxu0
        %v2698 = vpop.f32.mrb[0].mxu0
        %v2699 = vadd.f32 0.0, %v2698
        %v2700 = vpop.f32.mrb[0].mxu0
        %2701 = vmatprep.mubr.bf16.mxu0 0
        %2702 = vmatmul.mubr.bf16.gmra.mrb[0].mxu0 %v626
        %v2703 = vpop.f32.mrb[0].mxu0
        %v2704 = vadd.f32 0.0, %v2703
        %v2705 = vpop.f32.mrb[0].mxu0
        %v2706 = vpop.f32.mrb[0].mxu0
        %v2707 = vadd.f32 0.0, %v2706
        %v2708 = vpop.f32.mrb[0].mxu0
        %2709 = vmatprep.mubr.bf16.mxu0 0
        %2710 = vmatmul.mubr.bf16.gmra.mrb[0].mxu0 %v627
        %v2711 = vpop.f32.mrb[0].mxu0
        %v2712 = vadd.f32 0.0, %v2711
        %v2713 = vpop.f32.mrb[0].mxu0
        %v2714 = vpop.f32.mrb[0].mxu0
        %v2715 = vadd.f32 0.0, %v2714
        %v2716 = vpop.f32.mrb[0].mxu0
        %2717 = vmatprep.mubr.bf16.mxu0 0
        %2718 = vmatmul.mubr.bf16.gmra.mrb[0].mxu0 %v628
        %v2719 = vpop.f32.mrb[0].mxu0
        %v2720 = vadd.f32 0.0, %v2719
        %v2721 = vpop.f32.mrb[0].mxu0
        %v2722 = vpop.f32.mrb[0].mxu0
        %v2723 = vadd.f32 0.0, %v2722
        %v2724 = vpop.f32.mrb[0].mxu0
        %2725 = vmatprep.mubr.bf16.mxu0 0
        %2726 = vmatmul.mubr.bf16.gmra.mrb[0].mxu0 %v629
        %v2727 = vpop.f32.mrb[0].mxu0
        %v2728 = vadd.f32 0.0, %v2727
        %v2729 = vpop.f32.mrb[0].mxu0
        %v2730 = vpop.f32.mrb[0].mxu0
        %v2731 = vadd.f32 0.0, %v2730
        %v2732 = vpop.f32.mrb[0].mxu0
        %2733 = vdwg.mxu0
        %v2734 = vadd.f32 %v1689, %v2156
        %v2735 = vadd.f32 %v1692, %v2159
        %v2736 = vadd.f32 %v1697, %v2164
        %v2737 = vadd.f32 %v1700, %v2167
        %v2738 = vadd.f32 %v1705, %v2172
        %v2739 = vadd.f32 %v1708, %v2175
        %v2740 = vadd.f32 %v1713, %v2180
        %v2741 = vadd.f32 %v1716, %v2183
        %v2742 = vadd.f32 %v1721, %v2188
        %v2743 = vadd.f32 %v1724, %v2191
        %v2744 = vadd.f32 %v1729, %v2196
        %v2745 = vadd.f32 %v1732, %v2199
        %v2746 = vadd.f32 %v1737, %v2204
        %v2747 = vadd.f32 %v1740, %v2207
        %v2748 = vadd.f32 %v1745, %v2212
        %v2749 = vadd.f32 %v1748, %v2215
        %v2750 = vadd.f32 %v1753, %v2220
        %v2751 = vadd.f32 %v1756, %v2223
        %v2752 = vadd.f32 %v1761, %v2228
        %v2753 = vadd.f32 %v1764, %v2231
        %v2754 = vadd.f32 %v1769, %v2236
        %v2755 = vadd.f32 %v1772, %v2239
        %v2756 = vadd.f32 %v1777, %v2244
        %v2757 = vadd.f32 %v1780, %v2247
        %v2758 = vadd.f32 %v1785, %v2252
        %v2759 = vadd.f32 %v1788, %v2255
        %v2760 = vadd.f32 %v1793, %v2260
        %v2761 = vadd.f32 %v1796, %v2263
        %v2762 = vadd.f32 %v1801, %v2268
        %v2763 = vadd.f32 %v1804, %v2271
        %v2764 = vadd.f32 %v1809, %v2276
        %v2765 = vadd.f32 %v1812, %v2279
        %v2766 = vadd.f32 %v1815, %v2382
        %v2767 = vadd.f32 %v1816, %v2385
        %v2768 = vadd.f32 %v1817, %v2390
        %v2769 = vadd.f32 %v1818, %v2393
        %v2770 = vadd.f32 %v1819, %v2398
        %v2771 = vadd.f32 %v1820, %v2401
        %v2772 = vadd.f32 %v1821, %v2406
        %v2773 = vadd.f32 %v1822, %v2409
        %v2774 = vadd.f32 %v1823, %v2414
        %v2775 = vadd.f32 %v1824, %v2417
        %v2776 = vadd.f32 %v1825, %v2422
        %v2777 = vadd.f32 %v1826, %v2425
        %v2778 = vadd.f32 %v1827, %v2430
        %v2779 = vadd.f32 %v1828, %v2433
        %v2780 = vadd.f32 %v1829, %v2438
        %v2781 = vadd.f32 %v1830, %v2441
        %v2782 = vadd.f32 %v1831, %v2446
        %v2783 = vadd.f32 %v1832, %v2449
        %v2784 = vadd.f32 %v1833, %v2454
        %v2785 = vadd.f32 %v1834, %v2457
        %v2786 = vadd.f32 %v1835, %v2462
        %v2787 = vadd.f32 %v1836, %v2465
        %v2788 = vadd.f32 %v1837, %v2470
        %v2789 = vadd.f32 %v1838, %v2473
        %v2790 = vadd.f32 %v1839, %v2478
        %v2791 = vadd.f32 %v1840, %v2481
        %v2792 = vadd.f32 %v1841, %v2486
        %v2793 = vadd.f32 %v1842, %v2489
        %v2794 = vadd.f32 %v1843, %v2494
        %v2795 = vadd.f32 %v1844, %v2497
        %v2796 = vadd.f32 %v1845, %v2502
        %v2797 = vadd.f32 %v1846, %v2505
        %v2798 = vadd.f32 %v1930, %v2608
        %v2799 = vadd.f32 %v1933, %v2611
        %v2800 = vadd.f32 %v1938, %v2616
        %v2801 = vadd.f32 %v1941, %v2619
        %v2802 = vadd.f32 %v1946, %v2624
        %v2803 = vadd.f32 %v1949, %v2627
        %v2804 = vadd.f32 %v1954, %v2632
        %v2805 = vadd.f32 %v1957, %v2635
        %v2806 = vadd.f32 %v1962, %v2640
        %v2807 = vadd.f32 %v1965, %v2643
        %v2808 = vadd.f32 %v1970, %v2648
        %v2809 = vadd.f32 %v1973, %v2651
        %v2810 = vadd.f32 %v1978, %v2656
        %v2811 = vadd.f32 %v1981, %v2659
        %v2812 = vadd.f32 %v1986, %v2664
        %v2813 = vadd.f32 %v1989, %v2667
        %v2814 = vadd.f32 %v1994, %v2672
        %v2815 = vadd.f32 %v1997, %v2675
        %v2816 = vadd.f32 %v2002, %v2680
        %v2817 = vadd.f32 %v2005, %v2683
        %v2818 = vadd.f32 %v2010, %v2688
        %v2819 = vadd.f32 %v2013, %v2691
        %v2820 = vadd.f32 %v2018, %v2696
        %v2821 = vadd.f32 %v2021, %v2699
        %v2822 = vadd.f32 %v2026, %v2704
        %v2823 = vadd.f32 %v2029, %v2707
        %v2824 = vadd.f32 %v2034, %v2712
        %v2825 = vadd.f32 %v2037, %v2715
        %v2826 = vadd.f32 %v2042, %v2720
        %v2827 = vadd.f32 %v2045, %v2723
        %v2828 = vadd.f32 %v2050, %v2728
        %v2829 = vadd.f32 %v2053, %v2731
        %v2830 = vlaneseq
        %v2831 = vshrl.u32 %v2830, 7
        %v2832 = vadd.s32 %v2831, 8
        %vm2833 = vcmp.eq.s32.totalorder %v2831, 0
        %vm2834 = vcmp.eq.s32.totalorder %v2832, 0
        %v2835 = vrot.slane %v2734, 7
        %v2836 = vrot.slane %v2735, 7
        %v2837 = vrot.slane %v2736, 7
        %v2838 = vrot.slane %v2737, 7
        %v2839 = vrot.slane %v2738, 7
        %v2840 = vrot.slane %v2739, 7
        %v2841 = vrot.slane %v2740, 7
        %v2842 = vrot.slane %v2741, 7
        %v2843 = vrot.slane %v2742, 7
        %v2844 = vrot.slane %v2743, 7
        %v2845 = vrot.slane %v2744, 7
        %v2846 = vrot.slane %v2745, 7
        %v2847 = vrot.slane %v2746, 7
        %v2848 = vrot.slane %v2747, 7
        %v2849 = vrot.slane %v2748, 7
        %v2850 = vrot.slane %v2749, 7
        %v2851 = vrot.slane %v2750, 7
        %v2852 = vrot.slane %v2751, 7
        %v2853 = vrot.slane %v2752, 7
        %v2854 = vrot.slane %v2753, 7
        %v2855 = vrot.slane %v2754, 7
        %v2856 = vrot.slane %v2755, 7
        %v2857 = vrot.slane %v2756, 7
        %v2858 = vrot.slane %v2757, 7
        %v2859 = vrot.slane %v2758, 7
        %v2860 = vrot.slane %v2759, 7
        %v2861 = vrot.slane %v2760, 7
        %v2862 = vrot.slane %v2761, 7
        %v2863 = vrot.slane %v2762, 7
        %v2864 = vrot.slane %v2763, 7
        %v2865 = vrot.slane %v2764, 7
        %v2866 = vrot.slane %v2765, 7
        %vm2867 = vcmp.lt.s32.totalorder %v2831, 1
        %v2868 = vsel %vm2867, %v2865, %v2866
        %v2869 = vsel %vm2867, %v2864, %v2865
        %v2870 = vsel %vm2867, %v2863, %v2864
        %v2871 = vsel %vm2867, %v2862, %v2863
        %v2872 = vsel %vm2867, %v2861, %v2862
        %v2873 = vsel %vm2867, %v2860, %v2861
        %v2874 = vsel %vm2867, %v2859, %v2860
        %v2875 = vsel %vm2867, %v2858, %v2859
        %v2876 = vsel %vm2867, %v2857, %v2858
        %v2877 = vsel %vm2867, %v2856, %v2857
        %v2878 = vsel %vm2867, %v2855, %v2856
        %v2879 = vsel %vm2867, %v2854, %v2855
        %v2880 = vsel %vm2867, %v2853, %v2854
        %v2881 = vsel %vm2867, %v2852, %v2853
        %v2882 = vsel %vm2867, %v2851, %v2852
        %v2883 = vsel %vm2867, %v2850, %v2851
        %v2884 = vsel %vm2867, %v2849, %v2850
        %v2885 = vsel %vm2867, %v2848, %v2849
        %v2886 = vsel %vm2867, %v2847, %v2848
        %v2887 = vsel %vm2867, %v2846, %v2847
        %v2888 = vsel %vm2867, %v2845, %v2846
        %v2889 = vsel %vm2867, %v2844, %v2845
        %v2890 = vsel %vm2867, %v2843, %v2844
        %v2891 = vsel %vm2867, %v2842, %v2843
        %v2892 = vsel %vm2867, %v2841, %v2842
        %v2893 = vsel %vm2867, %v2840, %v2841
        %v2894 = vsel %vm2867, %v2839, %v2840
        %v2895 = vsel %vm2867, %v2838, %v2839
        %v2896 = vsel %vm2867, %v2837, %v2838
        %v2897 = vsel %vm2867, %v2836, %v2837
        %v2898 = vsel %vm2867, %v2835, %v2836
        %v2899 = vsel %vm2867, %v2866, %v2835
        %v2900 = vsel %vm2833, 0.0, %v2899
        %v2901 = vsel %vm2834, 0.0, %v2898
        %v2902 = vsel %vm2833, 0.0, %v2897
        %v2903 = vsel %vm2834, 0.0, %v2896
        %v2904 = vsel %vm2833, 0.0, %v2895
        %v2905 = vsel %vm2834, 0.0, %v2894
        %v2906 = vsel %vm2833, 0.0, %v2893
        %v2907 = vsel %vm2834, 0.0, %v2892
        %v2908 = vsel %vm2833, 0.0, %v2891
        %v2909 = vsel %vm2834, 0.0, %v2890
        %v2910 = vsel %vm2833, 0.0, %v2889
        %v2911 = vsel %vm2834, 0.0, %v2888
        %v2912 = vsel %vm2833, 0.0, %v2887
        %v2913 = vsel %vm2834, 0.0, %v2886
        %v2914 = vsel %vm2833, 0.0, %v2885
        %v2915 = vsel %vm2834, 0.0, %v2884
        %v2916 = vsel %vm2833, 0.0, %v2883
        %v2917 = vsel %vm2834, 0.0, %v2882
        %v2918 = vsel %vm2833, 0.0, %v2881
        %v2919 = vsel %vm2834, 0.0, %v2880
        %v2920 = vsel %vm2833, 0.0, %v2879
        %v2921 = vsel %vm2834, 0.0, %v2878
        %v2922 = vsel %vm2833, 0.0, %v2877
        %v2923 = vsel %vm2834, 0.0, %v2876
        %v2924 = vsel %vm2833, 0.0, %v2875
        %v2925 = vsel %vm2834, 0.0, %v2874
        %v2926 = vsel %vm2833, 0.0, %v2873
        %v2927 = vsel %vm2834, 0.0, %v2872
        %v2928 = vsel %vm2833, 0.0, %v2871
        %v2929 = vsel %vm2834, 0.0, %v2870
        %v2930 = vsel %vm2833, 0.0, %v2869
        %v2931 = vsel %vm2834, 0.0, %v2868
        %vm2932 = vcmp.eq.s32.totalorder %v2831, 15
        %vm2933 = vcmp.eq.s32.totalorder %v2832, 15
        %v2934 = vrot.slane %v2798, 1
        %v2935 = vrot.slane %v2799, 1
        %v2936 = vrot.slane %v2800, 1
        %v2937 = vrot.slane %v2801, 1
        %v2938 = vrot.slane %v2802, 1
        %v2939 = vrot.slane %v2803, 1
        %v2940 = vrot.slane %v2804, 1
        %v2941 = vrot.slane %v2805, 1
        %v2942 = vrot.slane %v2806, 1
        %v2943 = vrot.slane %v2807, 1
        %v2944 = vrot.slane %v2808, 1
        %v2945 = vrot.slane %v2809, 1
        %v2946 = vrot.slane %v2810, 1
        %v2947 = vrot.slane %v2811, 1
        %v2948 = vrot.slane %v2812, 1
        %v2949 = vrot.slane %v2813, 1
        %v2950 = vrot.slane %v2814, 1
        %v2951 = vrot.slane %v2815, 1
        %v2952 = vrot.slane %v2816, 1
        %v2953 = vrot.slane %v2817, 1
        %v2954 = vrot.slane %v2818, 1
        %v2955 = vrot.slane %v2819, 1
        %v2956 = vrot.slane %v2820, 1
        %v2957 = vrot.slane %v2821, 1
        %v2958 = vrot.slane %v2822, 1
        %v2959 = vrot.slane %v2823, 1
        %v2960 = vrot.slane %v2824, 1
        %v2961 = vrot.slane %v2825, 1
        %v2962 = vrot.slane %v2826, 1
        %v2963 = vrot.slane %v2827, 1
        %v2964 = vrot.slane %v2828, 1
        %v2965 = vrot.slane %v2829, 1
        %vm2966 = vcmp.lt.s32.totalorder %v2831, 7
        %v2967 = vsel %vm2966, %v2964, %v2965
        %v2968 = vsel %vm2966, %v2963, %v2964
        %v2969 = vsel %vm2966, %v2962, %v2963
        %v2970 = vsel %vm2966, %v2961, %v2962
        %v2971 = vsel %vm2966, %v2960, %v2961
        %v2972 = vsel %vm2966, %v2959, %v2960
        %v2973 = vsel %vm2966, %v2958, %v2959
        %v2974 = vsel %vm2966, %v2957, %v2958
        %v2975 = vsel %vm2966, %v2956, %v2957
        %v2976 = vsel %vm2966, %v2955, %v2956
        %v2977 = vsel %vm2966, %v2954, %v2955
        %v2978 = vsel %vm2966, %v2953, %v2954
        %v2979 = vsel %vm2966, %v2952, %v2953
        %v2980 = vsel %vm2966, %v2951, %v2952
        %v2981 = vsel %vm2966, %v2950, %v2951
        %v2982 = vsel %vm2966, %v2949, %v2950
        %v2983 = vsel %vm2966, %v2948, %v2949
        %v2984 = vsel %vm2966, %v2947, %v2948
        %v2985 = vsel %vm2966, %v2946, %v2947
        %v2986 = vsel %vm2966, %v2945, %v2946
        %v2987 = vsel %vm2966, %v2944, %v2945
        %v2988 = vsel %vm2966, %v2943, %v2944
        %v2989 = vsel %vm2966, %v2942, %v2943
        %v2990 = vsel %vm2966, %v2941, %v2942
        %v2991 = vsel %vm2966, %v2940, %v2941
        %v2992 = vsel %vm2966, %v2939, %v2940
        %v2993 = vsel %vm2966, %v2938, %v2939
        %v2994 = vsel %vm2966, %v2937, %v2938
        %v2995 = vsel %vm2966, %v2936, %v2937
        %v2996 = vsel %vm2966, %v2935, %v2936
        %v2997 = vsel %vm2966, %v2934, %v2935
        %v2998 = vsel %vm2966, %v2965, %v2934
        %v2999 = vsel %vm2932, 0.0, %v2997
        %v3000 = vsel %vm2933, 0.0, %v2996
        %v3001 = vsel %vm2932, 0.0, %v2995
        %v3002 = vsel %vm2933, 0.0, %v2994
        %v3003 = vsel %vm2932, 0.0, %v2993
        %v3004 = vsel %vm2933, 0.0, %v2992
        %v3005 = vsel %vm2932, 0.0, %v2991
        %v3006 = vsel %vm2933, 0.0, %v2990
        %v3007 = vsel %vm2932, 0.0, %v2989
        %v3008 = vsel %vm2933, 0.0, %v2988
        %v3009 = vsel %vm2932, 0.0, %v2987
        %v3010 = vsel %vm2933, 0.0, %v2986
        %v3011 = vsel %vm2932, 0.0, %v2985
        %v3012 = vsel %vm2933, 0.0, %v2984
        %v3013 = vsel %vm2932, 0.0, %v2983
        %v3014 = vsel %vm2933, 0.0, %v2982
        %v3015 = vsel %vm2932, 0.0, %v2981
        %v3016 = vsel %vm2933, 0.0, %v2980
        %v3017 = vsel %vm2932, 0.0, %v2979
        %v3018 = vsel %vm2933, 0.0, %v2978
        %v3019 = vsel %vm2932, 0.0, %v2977
        %v3020 = vsel %vm2933, 0.0, %v2976
        %v3021 = vsel %vm2932, 0.0, %v2975
        %v3022 = vsel %vm2933, 0.0, %v2974
        %v3023 = vsel %vm2932, 0.0, %v2973
        %v3024 = vsel %vm2933, 0.0, %v2972
        %v3025 = vsel %vm2932, 0.0, %v2971
        %v3026 = vsel %vm2933, 0.0, %v2970
        %v3027 = vsel %vm2932, 0.0, %v2969
        %v3028 = vsel %vm2933, 0.0, %v2968
        %v3029 = vsel %vm2932, 0.0, %v2967
        %v3030 = vsel %vm2933, 0.0, %v2998
        %v3031 = vadd.f32 %v2766, %v2900
        %v3032 = vadd.f32 %v2767, %v2901
        %v3033 = vadd.f32 %v2768, %v2902
        %v3034 = vadd.f32 %v2769, %v2903
        %v3035 = vadd.f32 %v2770, %v2904
        %v3036 = vadd.f32 %v2771, %v2905
        %v3037 = vadd.f32 %v2772, %v2906
        %v3038 = vadd.f32 %v2773, %v2907
        %v3039 = vadd.f32 %v2774, %v2908
        %v3040 = vadd.f32 %v2775, %v2909
        %v3041 = vadd.f32 %v2776, %v2910
        %v3042 = vadd.f32 %v2777, %v2911
        %v3043 = vadd.f32 %v2778, %v2912
        %v3044 = vadd.f32 %v2779, %v2913
        %v3045 = vadd.f32 %v2780, %v2914
        %v3046 = vadd.f32 %v2781, %v2915
        %v3047 = vadd.f32 %v2782, %v2916
        %v3048 = vadd.f32 %v2783, %v2917
        %v3049 = vadd.f32 %v2784, %v2918
        %v3050 = vadd.f32 %v2785, %v2919
        %v3051 = vadd.f32 %v2786, %v2920
        %v3052 = vadd.f32 %v2787, %v2921
        %v3053 = vadd.f32 %v2788, %v2922
        %v3054 = vadd.f32 %v2789, %v2923
        %v3055 = vadd.f32 %v2790, %v2924
        %v3056 = vadd.f32 %v2791, %v2925
        %v3057 = vadd.f32 %v2792, %v2926
        %v3058 = vadd.f32 %v2793, %v2927
        %v3059 = vadd.f32 %v2794, %v2928
        %v3060 = vadd.f32 %v2795, %v2929
        %v3061 = vadd.f32 %v2796, %v2930
        %v3062 = vadd.f32 %v2797, %v2931
        %v3063 = vadd.f32 %v3031, %v2999
        %v3064 = vadd.f32 %v3032, %v3000
        %v3065 = vadd.f32 %v3033, %v3001
        %v3066 = vadd.f32 %v3034, %v3002
        %v3067 = vadd.f32 %v3035, %v3003
        %v3068 = vadd.f32 %v3036, %v3004
        %v3069 = vadd.f32 %v3037, %v3005
        %v3070 = vadd.f32 %v3038, %v3006
        %v3071 = vadd.f32 %v3039, %v3007
        %v3072 = vadd.f32 %v3040, %v3008
        %v3073 = vadd.f32 %v3041, %v3009
        %v3074 = vadd.f32 %v3042, %v3010
        %v3075 = vadd.f32 %v3043, %v3011
        %v3076 = vadd.f32 %v3044, %v3012
        %v3077 = vadd.f32 %v3045, %v3013
        %v3078 = vadd.f32 %v3046, %v3014
        %v3079 = vadd.f32 %v3047, %v3015
        %v3080 = vadd.f32 %v3048, %v3016
        %v3081 = vadd.f32 %v3049, %v3017
        %v3082 = vadd.f32 %v3050, %v3018
        %v3083 = vadd.f32 %v3051, %v3019
        %v3084 = vadd.f32 %v3052, %v3020
        %v3085 = vadd.f32 %v3053, %v3021
        %v3086 = vadd.f32 %v3054, %v3022
        %v3087 = vadd.f32 %v3055, %v3023
        %v3088 = vadd.f32 %v3056, %v3024
        %v3089 = vadd.f32 %v3057, %v3025
        %v3090 = vadd.f32 %v3058, %v3026
        %v3091 = vadd.f32 %v3059, %v3027
        %v3092 = vadd.f32 %v3060, %v3028
        %v3093 = vadd.f32 %v3061, %v3029
        %v3094 = vadd.f32 %v3062, %v3030
        %v3095 = vmax.f32 %v3063, 0.0
        %v3096 = vmax.f32 %v3064, 0.0
        %v3097 = vmax.f32 %v3065, 0.0
        %v3098 = vmax.f32 %v3066, 0.0
        %v3099 = vmax.f32 %v3067, 0.0
        %v3100 = vmax.f32 %v3068, 0.0
        %v3101 = vmax.f32 %v3069, 0.0
        %v3102 = vmax.f32 %v3070, 0.0
        %v3103 = vmax.f32 %v3071, 0.0
        %v3104 = vmax.f32 %v3072, 0.0
        %v3105 = vmax.f32 %v3073, 0.0
        %v3106 = vmax.f32 %v3074, 0.0
        %v3107 = vmax.f32 %v3075, 0.0
        %v3108 = vmax.f32 %v3076, 0.0
        %v3109 = vmax.f32 %v3077, 0.0
        %v3110 = vmax.f32 %v3078, 0.0
        %v3111 = vmax.f32 %v3079, 0.0
        %v3112 = vmax.f32 %v3080, 0.0
        %v3113 = vmax.f32 %v3081, 0.0
        %v3114 = vmax.f32 %v3082, 0.0
        %v3115 = vmax.f32 %v3083, 0.0
        %v3116 = vmax.f32 %v3084, 0.0
        %v3117 = vmax.f32 %v3085, 0.0
        %v3118 = vmax.f32 %v3086, 0.0
        %v3119 = vmax.f32 %v3087, 0.0
        %v3120 = vmax.f32 %v3088, 0.0
        %v3121 = vmax.f32 %v3089, 0.0
        %v3122 = vmax.f32 %v3090, 0.0
        %v3123 = vmax.f32 %v3091, 0.0
        %v3124 = vmax.f32 %v3092, 0.0
        %v3125 = vmax.f32 %v3093, 0.0
        %v3126 = vmax.f32 %v3094, 0.0
        %v3127 = vunpack.c.l.bf16 %v598
        %v3128 = vunpack.c.h.bf16 %v598
        %v3129 = vunpack.c.l.bf16 %v599
        %v3130 = vunpack.c.h.bf16 %v599
        %v3131 = vunpack.c.l.bf16 %v600
        %v3132 = vunpack.c.h.bf16 %v600
        %v3133 = vunpack.c.l.bf16 %v601
        %v3134 = vunpack.c.h.bf16 %v601
        %v3135 = vunpack.c.l.bf16 %v602
        %v3136 = vunpack.c.h.bf16 %v602
        %v3137 = vunpack.c.l.bf16 %v603
        %v3138 = vunpack.c.h.bf16 %v603
        %v3139 = vunpack.c.l.bf16 %v604
        %v3140 = vunpack.c.h.bf16 %v604
        %v3141 = vunpack.c.l.bf16 %v605
        %v3142 = vunpack.c.h.bf16 %v605
        %v3143 = vunpack.c.l.bf16 %v606
        %v3144 = vunpack.c.h.bf16 %v606
        %v3145 = vunpack.c.l.bf16 %v607
        %v3146 = vunpack.c.h.bf16 %v607
        %v3147 = vunpack.c.l.bf16 %v608
        %v3148 = vunpack.c.h.bf16 %v608
        %v3149 = vunpack.c.l.bf16 %v609
        %v3150 = vunpack.c.h.bf16 %v609
        %v3151 = vunpack.c.l.bf16 %v610
        %v3152 = vunpack.c.h.bf16 %v610
        %v3153 = vunpack.c.l.bf16 %v611
        %v3154 = vunpack.c.h.bf16 %v611
        %v3155 = vunpack.c.l.bf16 %v612
        %v3156 = vunpack.c.h.bf16 %v612
        %v3157 = vunpack.c.l.bf16 %v613
        %v3158 = vunpack.c.h.bf16 %v613
        %v3159 = vadd.f32 %v3127, %v3095
        %v3160 = vadd.f32 %v3128, %v3096
        %v3161 = vadd.f32 %v3129, %v3097
        %v3162 = vadd.f32 %v3130, %v3098
        %v3163 = vadd.f32 %v3131, %v3099
        %v3164 = vadd.f32 %v3132, %v3100
        %v3165 = vadd.f32 %v3133, %v3101
        %v3166 = vadd.f32 %v3134, %v3102
        %v3167 = vadd.f32 %v3135, %v3103
        %v3168 = vadd.f32 %v3136, %v3104
        %v3169 = vadd.f32 %v3137, %v3105
        %v3170 = vadd.f32 %v3138, %v3106
        %v3171 = vadd.f32 %v3139, %v3107
        %v3172 = vadd.f32 %v3140, %v3108
        %v3173 = vadd.f32 %v3141, %v3109
        %v3174 = vadd.f32 %v3142, %v3110
        %v3175 = vadd.f32 %v3143, %v3111
        %v3176 = vadd.f32 %v3144, %v3112
        %v3177 = vadd.f32 %v3145, %v3113
        %v3178 = vadd.f32 %v3146, %v3114
        %v3179 = vadd.f32 %v3147, %v3115
        %v3180 = vadd.f32 %v3148, %v3116
        %v3181 = vadd.f32 %v3149, %v3117
        %v3182 = vadd.f32 %v3150, %v3118
        %v3183 = vadd.f32 %v3151, %v3119
        %v3184 = vadd.f32 %v3152, %v3120
        %v3185 = vadd.f32 %v3153, %v3121
        %v3186 = vadd.f32 %v3154, %v3122
        %v3187 = vadd.f32 %v3155, %v3123
        %v3188 = vadd.f32 %v3156, %v3124
        %v3189 = vadd.f32 %v3157, %v3125
        %v3190 = vadd.f32 %v3158, %v3126
        %3191 = vst [vmem:[%s385] sm:$0xff] %v3159
        %3192 = vst [vmem:[%s385 + $0x8] sm:$0xff] %v3160
        %3193 = vst [vmem:[%s385 + $0x10] sm:$0xff] %v3161
        %3194 = vst [vmem:[%s385 + $0x18] sm:$0xff] %v3162
        %3195 = vst [vmem:[%s385 + $0x20] sm:$0xff] %v3163
        %3196 = vst [vmem:[%s385 + $0x28] sm:$0xff] %v3164
        %3197 = vst [vmem:[%s385 + $0x30] sm:$0xff] %v3165
        %3198 = vst [vmem:[%s385 + $0x38] sm:$0xff] %v3166
        %3199 = vst [vmem:[%s385 + $0x40] sm:$0xff] %v3167
        %3200 = vst [vmem:[%s385 + $0x48] sm:$0xff] %v3168
        %3201 = vst [vmem:[%s385 + $0x50] sm:$0xff] %v3169
        %3202 = vst [vmem:[%s385 + $0x58] sm:$0xff] %v3170
        %3203 = vst [vmem:[%s385 + $0x60] sm:$0xff] %v3171
        %3204 = vst [vmem:[%s385 + $0x68] sm:$0xff] %v3172
        %3205 = vst [vmem:[%s385 + $0x70] sm:$0xff] %v3173
        %3206 = vst [vmem:[%s385 + $0x78] sm:$0xff] %v3174
        %3207 = vst [vmem:[%s385 + $0x80] sm:$0xff] %v3175
        %3208 = vst [vmem:[%s385 + $0x88] sm:$0xff] %v3176
        %3209 = vst [vmem:[%s385 + $0x90] sm:$0xff] %v3177
        %3210 = vst [vmem:[%s385 + $0x98] sm:$0xff] %v3178
        %3211 = vst [vmem:[%s385 + $0xa0] sm:$0xff] %v3179
        %3212 = vst [vmem:[%s385 + $0xa8] sm:$0xff] %v3180
        %3213 = vst [vmem:[%s385 + $0xb0] sm:$0xff] %v3181
        %3214 = vst [vmem:[%s385 + $0xb8] sm:$0xff] %v3182
        %3215 = vst [vmem:[%s385 + $0xc0] sm:$0xff] %v3183
        %3216 = vst [vmem:[%s385 + $0xc8] sm:$0xff] %v3184
        %3217 = vst [vmem:[%s385 + $0xd0] sm:$0xff] %v3185
        %3218 = vst [vmem:[%s385 + $0xd8] sm:$0xff] %v3186
        %3219 = vst [vmem:[%s385 + $0xe0] sm:$0xff] %v3187
        %3220 = vst [vmem:[%s385 + $0xe8] sm:$0xff] %v3188
        %3221 = vst [vmem:[%s385 + $0xf0] sm:$0xff] %v3189
        %3222 = vst [vmem:[%s385 + $0xf8] sm:$0xff] %v3190
        %s3223 = sand.u32 %s190, 1
        %s3224 = scalar_lea.sflag [#allocation5], %s3223
        %s3225 = sand.u32 %s190, 1
        %s3226 = smul.addr %s3225, 256
        %s3227 = scalar_lea.vmem [#allocation11], %s3226
        // Predicated region
        $region57: #{tpu_custom_call.1} parent=39 // pred_check
          %p3228 = pneg %p200
        $region58: #{tpu_custom_call.1} parent=39 // pred_check_branch
          %3230 = sbr.rel (%p3228) target = $region60
        $region59: #{tpu_custom_call.1} parent=39 // pred_region
          %s3231 = smul.u32 16, %s31
          %s3233 = ssub.s32 4096, 4096
          %3234 = vsyncadd %s3224, %s3233
          %s3235 = smul.addr %s3231, 2
          %s3236 = smul.addr %s30, 32
          %s3237 = sadd.s32 %s3235, %s3236
          %s3238 = smul.addr %s3237, 128
          %s3239 = scalar_lea.hbm %s5, %s3238
          %s3240 = sshll.u32 %s3227, 4
          %s3241 = int_to_ptr.vmem [resolvable:$true] %s3240
          %3246 = dma.vmem_to_hbm [thread:$0]  %s3241, 4096, %s3239, %s3224, 128, 128, 8
        $region60: #{tpu_custom_call.1} parent=39 // pred_fallthru
          _
      $region40: #{tpu_custom_call.1} parent=5 // pred_fallthru
        _
      %p3247 = scmp.le.s32.totalorder 2, %s21
      // Predicated region
      $region61: #{tpu_custom_call.1} parent=5 // pred_check
        %p3248 = pneg %p3247
      $region62: #{tpu_custom_call.1} parent=5 // pred_check_branch
        %3250 = sbr.rel (%p3248) target = $region64
      $region63: #{tpu_custom_call.1} parent=5 // pred_region
        %s3251 = ssub.s32 %s21, 2
        // Predicated region
        $region65: #{tpu_custom_call.1} parent=63 // pred_check
          %p3252 = pneg %p206
        $region66: #{tpu_custom_call.1} parent=63 // pred_check_branch
          %3254 = sbr.rel (%p3252) target = $region68
        $region67: #{tpu_custom_call.1} parent=63 // pred_region
          %s3255 = sand.u32 %s191, 1
          %s3256 = scalar_lea.sflag [#allocation5], %s3255
          %s3257 = sand.u32 %s191, 1
          %s3258 = smul.addr %s3257, 256
          %s3259 = scalar_lea.vmem [#allocation11], %s3258
          %3260 = dma.done %s3256, 4096
        $region68: #{tpu_custom_call.1} parent=63 // pred_fallthru
          _
      $region64: #{tpu_custom_call.1} parent=5 // pred_fallthru
        _
    $region6: #{tpu_custom_call.1} parent=1 // loop_footer
      %s25 = sadd.s32 1, %s21
    $region7: #{tpu_custom_call.1} parent=1 // loop_footer_branch
      %20 = sbr.rel target = $region3
    $region8: #{tpu_custom_call.1} parent=1 // loop_exit
      _
    %3261 = vsyncpa [#allocation4], 1
    %s3262 = scalar_lea.sflag [#allocation4], 1
    %3263 = vsyncpa %s3262, 1
    %3264 = vsyncpa [#allocation7], 1
    %s3265 = scalar_lea.sflag [#allocation7], 1
    %3266 = vsyncpa %s3265, 1
    %3267 = vsyncpa [#allocation10], 1
    %3268 = vsyncpa [#allocation5], 1
    %s3269 = scalar_lea.sflag [#allocation5], 1
    %3270 = vsyncpa %s3269, 1

</llo_original>
